<compile_context>
chip_gen: v7x
topology: tpu7x:2x2x1
jax: 0.10.0
libtpu: 0.0.40
codegen_flags: <defaults>
</compile_context>

<pallas_src>
import jax
import jax.numpy as jnp
import numpy as np
from jax import lax
from jax.experimental import pallas as pl
from jax.experimental.pallas import tpu as pltpu

NUM_WEATHER = 8
NUM_TERRAIN = 8
NUM_CLASSES = NUM_WEATHER + NUM_TERRAIN   # 16, consistent with hard-coded .view(-1, 16)
IN_CHANNEL = 32                           # small stand-in for in_channel=300
HID = 1024                                # hard-coded in GCNResnet.__init__
FEAT = 2048                               # hard-coded in GCNResnet.forward (view(2048, -1))
COL_TILE = 512                            # tile over the 2048 GCN output columns (grid of 4)


# ------------- Pallas kernel 1: fused GCN head (gen_adj + gc1 + gc2) ---------
def gcn_head_kernel(inp_ref, a_ref, ww1_ref, wt1_ref, ww2_ref, wt2_ref,
                    wx_ref, tx_ref, adj_sc, h1w_sc, h1t_sc):
    # Step 0 prologue: gen_adj(A), gc1 for both branches, LeakyReLU(0.2).
    # adj / h1 live in VMEM scratch and persist across the column-tile steps.
    @pl.when(pl.program_id(0) == 0)
    def _():
        # gen_adj(A): D = diag(A.sum(1) ** -0.5); adj = (A @ D).T @ D
        # TODO(synk): gen_A/gen_adj were not provided; standard ML-GCN definitions used.
        A = a_ref[...]
        d = lax.rsqrt(jnp.maximum(jnp.sum(A, axis=1, keepdims=True), 1e-12))  # (C, 1)
        adj = d * jnp.transpose(A) * jnp.transpose(d)     # adj[i,j] = d_i * A[j,i] * d_j
        adj_sc[...] = adj

        x = inp_ref[...]                                  # (C, IN_CHANNEL)
        h1w = jnp.dot(adj, jnp.dot(x, ww1_ref[...], preferred_element_type=jnp.float32),
                      preferred_element_type=jnp.float32)
        h1t = jnp.dot(adj, jnp.dot(x, wt1_ref[...], preferred_element_type=jnp.float32),
                      preferred_element_type=jnp.float32)
        h1w = jnp.where(h1w > 0, h1w, 0.2 * h1w)          # LeakyReLU(0.2)
        h1t = jnp.where(h1t > 0, h1t, 0.2 * h1t)
        # Round h1 to bf16 once so the column steps run the MXU's native
        # bf16 x bf16 path (f32 accumulate) with no per-step upcast temps.
        h1w_sc[...] = h1w.astype(jnp.bfloat16)
        h1t_sc[...] = h1t.astype(jnp.bfloat16)

    # Per column tile (HBM-bound bf16 weight stream): h1 @ w2_tile, then adj @ s2,
    # written directly into the per-branch outputs (no concat / slice copies).
    s2w = jnp.dot(h1w_sc[...], ww2_ref[...], preferred_element_type=jnp.float32)  # (C, COL_TILE)
    s2t = jnp.dot(h1t_sc[...], wt2_ref[...], preferred_element_type=jnp.float32)  # (C, COL_TILE)
    wx_ref[...] = jnp.dot(adj_sc[...], s2w, preferred_element_type=jnp.float32)
    tx_ref[...] = jnp.dot(adj_sc[...], s2t, preferred_element_type=jnp.float32)


def run_gcn_head(inp0, A, ww1, wt1, ww2_tiled, wt2_tiled):
    C = NUM_CLASSES
    const = lambda shape: pl.BlockSpec(shape, lambda j: (0,) * len(shape))
    # Pre-tiled bf16 weights: one contiguous (HID, COL_TILE) block per grid step.
    w2_spec = pl.BlockSpec((None, HID, COL_TILE), lambda j: (j, 0, 0))
    return pl.pallas_call(
        gcn_head_kernel,
        out_shape=(jax.ShapeDtypeStruct((C, FEAT), jnp.float32),
                   jax.ShapeDtypeStruct((C, FEAT), jnp.float32)),
        grid=(FEAT // COL_TILE,),
        in_specs=[const((C, IN_CHANNEL)), const((C, C)),
                  const((IN_CHANNEL, HID)), const((IN_CHANNEL, HID)),
                  w2_spec, w2_spec],
        out_specs=(pl.BlockSpec((C, COL_TILE), lambda j: (0, j)),
                   pl.BlockSpec((C, COL_TILE), lambda j: (0, j))),
        scratch_shapes=[pltpu.VMEM((C, C), jnp.float32),
                        pltpu.VMEM((C, HID), jnp.bfloat16),
                        pltpu.VMEM((C, HID), jnp.bfloat16)],
        # Scratch (adj/h1) is initialized at step 0 and reused -> sequential axis.
        compiler_params=pltpu.CompilerParams(dimension_semantics=("arbitrary",)),
    )(inp0, A, ww1, wt1, ww2_tiled, wt2_tiled)


# --------- Pallas kernel 2: MaxPool2d(4,4) + flatten + merged matmul ---------
def pool_matmul_kernel(feat_ref, wm_ref, out_ref):
    # feat_ref: (B, H*W=16, 2048); max over the 4x4 spatial window == MaxPool2d(4,4)
    pooled = jnp.max(feat_ref[...], axis=1)                           # (B, 2048)
    out_ref[...] = jnp.dot(pooled, wm_ref[...],
                           preferred_element_type=jnp.float32)        # (B, 32) merged heads


def run_pool_matmul(feat_bpc, wt_mat):
    B = feat_bpc.shape[0]
    N = wt_mat.shape[1]
    full = lambda shape: pl.BlockSpec(shape, lambda i: (0,) * len(shape))
    return pl.pallas_call(
        pool_matmul_kernel,
        out_shape=jax.ShapeDtypeStruct((B, N), jnp.float32),
        grid=(1,),
        in_specs=[full(feat_bpc.shape), full(wt_mat.shape)],
        out_specs=full((B, N)),
    )(feat_bpc, wt_mat)


# ------------------------- plain-JAX glue: backbone (NHWC) -------------------
def backbone(x_nchw, params):
    # conv1 7x7/2 pad3 -> bn1 -> relu -> maxpool 3x3/2 pad1, all NHWC
    x = jnp.transpose(x_nchw, (0, 2, 3, 1))                      # NCHW -> NHWC once
    y = lax.conv_general_dilated(x, params["conv1_w"], (2, 2), [(3, 3), (3, 3)],
                                 dimension_numbers=("NHWC", "HWIO", "NHWC"))
    gamma, beta, mean, var = params["bn1"]
    y = (y - mean) * gamma * lax.rsqrt(var + 1e-5) + beta
    y = jnp.maximum(y, 0.0)
    y = lax.reduce_window(y, -jnp.inf, lax.max, (1, 3, 3, 1), (1, 2, 2, 1),
                          [(0, 0), (1, 1), (1, 1), (0, 0)])
    # TODO(synk): resnet layer1..layer4 are externally injected via `model`; stand-in
    #             is a single 1x1 stride-4 conv to 2048 channels + relu.
    y = lax.conv_general_dilated(y, params["layers_w"], (4, 4), "VALID",
                                 dimension_numbers=("NHWC", "HWIO", "NHWC"))
    return jnp.maximum(y, 0.0)                                   # (B, 4, 4, 2048)


def gcn_resnet_forward(params, feature, inp):
    feat = backbone(feature, params)                             # (B, 4, 4, 2048) NHWC
    B = feat.shape[0]
    feat_bpc = feat.reshape(B, -1, FEAT)                         # free reshape, lanes = channels

    inp0 = inp[0]                                                # inp = inp[0]
    weather_x, terrain_x = run_gcn_head(inp0, params["A"],
                                        params["weather_w1"], params["terrain_w1"],
                                        params["weather_w2"], params["terrain_w2"])
    # torch: weather_x.view(2048, -1) is a row-major reshape, NOT a transpose.
    wt_mat = jnp.concatenate([weather_x.reshape(FEAT, -1),
                              terrain_x.reshape(FEAT, -1)], axis=1)   # (2048, 32)

    out = run_pool_matmul(feat_bpc, wt_mat)                      # (B, 32) merged
    w_out = out[:, :NUM_CLASSES].reshape(-1, 16)
    t_out = out[:, NUM_CLASSES:].reshape(-1, 16)
    return w_out, t_out


# ------------------------------ reference (pure JAX) -------------------------
def reference_forward(params, feature, inp):
    feat = backbone(feature, params)                             # (B, 4, 4, 2048)
    B = feat.shape[0]
    pooled = jnp.max(feat.reshape(B, -1, FEAT), axis=1)          # MaxPool2d(4,4) + view
    inp0 = inp[0]
    A = params["A"]
    d = 1.0 / jnp.sqrt(jnp.maximum(jnp.sum(A, axis=1), 1e-12))
    adj = (A * d[None, :]).T * d[None, :]

    def branch(w1, w2_tiled):
        # undo the pre-tiling: (nt, HID, COL_TILE) -> (HID, FEAT), bf16 values
        w2 = jnp.transpose(w2_tiled, (1, 0, 2)).reshape(HID, FEAT)
        h = adj @ (inp0 @ w1)
        h = jnp.where(h > 0, h, 0.2 * h)
        s2 = jnp.dot(h.astype(jnp.bfloat16), w2, preferred_element_type=jnp.float32)
        return (adj @ s2).reshape(FEAT, -1)

    wx = branch(params["weather_w1"], params["weather_w2"])
    tx = branch(params["terrain_w1"], params["terrain_w2"])
    return (pooled @ wx).reshape(-1, 16), (pooled @ tx).reshape(-1, 16)


# ------------------------------ parameter init -------------------------------
def init_params(key):
    ks = jax.random.split(key, 8)
    stdv1 = 1.0 / np.sqrt(HID)       # GraphConvolution(in_channel, 1024)
    stdv2 = 1.0 / np.sqrt(FEAT)      # GraphConvolution(1024, 2048)

    def make_w2(k):
        # gc2 weights stored bf16 (halves the dominant HBM stream), pre-tiled to
        # (FEAT//COL_TILE, HID, COL_TILE) so each grid step is one contiguous DMA.
        w2 = jax.random.uniform(k, (HID, FEAT), jnp.float32,
                                -stdv2, stdv2).astype(jnp.bfloat16)
        return jnp.transpose(w2.reshape(HID, FEAT // COL_TILE, COL_TILE), (1, 0, 2))

    params = {
        "conv1_w": 0.02 * jax.random.normal(ks[0], (7, 7, 3, 64), jnp.float32),     # HWIO
        "bn1": (jnp.ones((64,), jnp.float32), jnp.zeros((64,), jnp.float32),
                jnp.zeros((64,), jnp.float32), jnp.ones((64,), jnp.float32)),
        "layers_w": 0.01 * jax.random.normal(ks[1], (1, 1, 64, FEAT), jnp.float32),  # HWIO
        "weather_w1": jax.random.uniform(ks[2], (IN_CHANNEL, HID), jnp.float32, -stdv1, stdv1),
        "weather_w2": make_w2(ks[3]),
        "terrain_w1": jax.random.uniform(ks[4], (IN_CHANNEL, HID), jnp.float32, -stdv1, stdv1),
        "terrain_w2": make_w2(ks[5]),
        # adjacency parameter (gen_A stand-in): positive correlations + identity
        "A": 0.25 * jax.random.uniform(ks[6], (NUM_CLASSES, NUM_CLASSES), jnp.float32)
             + jnp.eye(NUM_CLASSES, dtype=jnp.float32),
    }
    return params, ks[7]


if __name__ == "__main__":
    key = jax.random.PRNGKey(0)
    params, key = init_params(key)

    k_img, k_inp = jax.random.split(key)
    feature = jax.random.normal(k_img, (2, 3, 64, 64), jnp.float32)        # NCHW image
    inp = jax.random.uniform(k_inp, (1, NUM_CLASSES, IN_CHANNEL), jnp.float32, -1.0, 1.0)

    w_out, t_out = jax.block_until_ready(gcn_resnet_forward(params, feature, inp))
    w_ref, t_ref = jax.block_until_ready(reference_forward(params, feature, inp))

    np.testing.assert_allclose(np.asarray(w_out), np.asarray(w_ref), rtol=2e-3, atol=2e-3)
    np.testing.assert_allclose(np.asarray(t_out), np.asarray(t_ref), rtol=2e-3, atol=2e-3)
    assert w_out.shape == (2, 16) and t_out.shape == (2, 16)

    print("KERNEL_OK")
</pallas_src>

<mosaic_0001>
module attributes {stable_mosaic.version = 11 : i64} {
  func.func @gcn_head_kernel(%arg0: i32, %arg1: memref<16x32xf32, #tpu.memory_space<vmem>>, %arg2: memref<16x16xf32, #tpu.memory_space<vmem>>, %arg3: memref<32x1024xf32, #tpu.memory_space<vmem>>, %arg4: memref<32x1024xf32, #tpu.memory_space<vmem>>, %arg5: memref<1x1024x512xbf16, #tpu.memory_space<vmem>>, %arg6: memref<1x1024x512xbf16, #tpu.memory_space<vmem>>, %arg7: memref<16x512xf32, #tpu.memory_space<vmem>>, %arg8: memref<16x512xf32, #tpu.memory_space<vmem>>, %arg9: memref<16x16xf32, #tpu.memory_space<vmem>>, %arg10: memref<16x1024xbf16, #tpu.memory_space<vmem>>, %arg11: memref<16x1024xbf16, #tpu.memory_space<vmem>>) attributes {dimension_semantics = [#tpu.dimension_semantics<arbitrary>], iteration_bounds = array<i64: 4>, scalar_prefetch = 0 : i64, scratch_operands = 3 : i64, tpu.core_type = #tpu.core_type<tc>, window_params = [{pipeline_mode = #tpu.pipeline_mode<synchronous>, transform_indices = @transform_0, window_bounds = array<i64: 16, 32>}, {pipeline_mode = #tpu.pipeline_mode<synchronous>, transform_indices = @transform_1, window_bounds = array<i64: 16, 16>}, {pipeline_mode = #tpu.pipeline_mode<synchronous>, transform_indices = @transform_2, window_bounds = array<i64: 32, 1024>}, {pipeline_mode = #tpu.pipeline_mode<synchronous>, transform_indices = @transform_3, window_bounds = array<i64: 32, 1024>}, {transform_indices = @transform_4, window_bounds = array<i64: 1, 1024, 512>}, {transform_indices = @transform_5, window_bounds = array<i64: 1, 1024, 512>}, {transform_indices = @transform_6, window_bounds = array<i64: 16, 512>}, {transform_indices = @transform_7, window_bounds = array<i64: 16, 512>}]} {
    %c0_i32 = arith.constant 0 : i32
    %0 = arith.cmpi eq, %arg0, %c0_i32 : i32
    %1 = arith.extui %0 : i1 to i32
    %c0_i32_0 = arith.constant 0 : i32
    %2 = arith.cmpi ne, %1, %c0_i32_0 : i32
    scf.if %2 {
      %c0_21 = arith.constant 0 : index
      %c0_22 = arith.constant 0 : index
      %17 = vector.load %arg2[%c0_21, %c0_22] : memref<16x16xf32, #tpu.memory_space<vmem>>, vector<16x16xf32>
      %cst_23 = arith.constant dense<0.000000e+00> : vector<16xf32>
      %18 = vector.multi_reduction <add>, %17, %cst_23 [1] : vector<16x16xf32> to vector<16xf32>
      %19 = vector.shape_cast %18 : vector<16xf32> to vector<16x1xf32>
      %cst_24 = arith.constant 9.99999996E-13 : f32
      %20 = vector.broadcast %cst_24 : f32 to vector<16x1xf32>
      %21 = arith.maximumf %19, %20 : vector<16x1xf32>
      %22 = math.rsqrt %21 : vector<16x1xf32>
      %23 = tpu.transpose %17, [1, 0] : vector<16x16xf32> -> vector<16x16xf32>
      %24 = vector.broadcast %22 : vector<16x1xf32> to vector<16x16xf32>
      %25 = arith.mulf %24, %23 : vector<16x16xf32>
      %26 = tpu.transpose %22, [1, 0] : vector<16x1xf32> -> vector<1x16xf32>
      %27 = vector.broadcast %26 : vector<1x16xf32> to vector<16x16xf32>
      %28 = arith.mulf %25, %27 : vector<16x16xf32>
      %c0_25 = arith.constant 0 : index
      %c0_26 = arith.constant 0 : index
      %29 = vector.load %arg9[%c0_25, %c0_26] : memref<16x16xf32, #tpu.memory_space<vmem>>, vector<16x16xf32>
      tpu.vector_store %arg9[%c0_25, %c0_26], %28 {strides = array<i32>} : memref<16x16xf32, #tpu.memory_space<vmem>>, vector<16x16xf32>,
      %c0_27 = arith.constant 0 : index
      %c0_28 = arith.constant 0 : index
      %30 = vector.load %arg1[%c0_27, %c0_28] : memref<16x32xf32, #tpu.memory_space<vmem>>, vector<16x32xf32>
      %c0_29 = arith.constant 0 : index
      %c0_30 = arith.constant 0 : index
      %31 = vector.load %arg3[%c0_29, %c0_30] : memref<32x1024xf32, #tpu.memory_space<vmem>>, vector<32x1024xf32>
      %cst_31 = arith.constant dense<0.000000e+00> : vector<16x1024xf32>
      %32 = tpu.matmul %30, %31, %cst_31 {dimension_numbers = #tpu.dot_dimension_numbers<[1], [0], [0], [1], [0, 0, 1, 1], [], []>} : vector<16x32xf32>, vector<32x1024xf32>, vector<16x1024xf32> -> vector<16x1024xf32>
      %cst_32 = arith.constant dense<0.000000e+00> : vector<16x1024xf32>
      %33 = tpu.matmul %28, %32, %cst_32 {dimension_numbers = #tpu.dot_dimension_numbers<[1], [0], [0], [1], [0, 0, 1, 1], [], []>} : vector<16x16xf32>, vector<16x1024xf32>, vector<16x1024xf32> -> vector<16x1024xf32>
      %c0_33 = arith.constant 0 : index
      %c0_34 = arith.constant 0 : index
      %34 = vector.load %arg4[%c0_33, %c0_34] : memref<32x1024xf32, #tpu.memory_space<vmem>>, vector<32x1024xf32>
      %cst_35 = arith.constant dense<0.000000e+00> : vector<16x1024xf32>
      %35 = tpu.matmul %30, %34, %cst_35 {dimension_numbers = #tpu.dot_dimension_numbers<[1], [0], [0], [1], [0, 0, 1, 1], [], []>} : vector<16x32xf32>, vector<32x1024xf32>, vector<16x1024xf32> -> vector<16x1024xf32>
      %cst_36 = arith.constant dense<0.000000e+00> : vector<16x1024xf32>
      %36 = tpu.matmul %28, %35, %cst_36 {dimension_numbers = #tpu.dot_dimension_numbers<[1], [0], [0], [1], [0, 0, 1, 1], [], []>} : vector<16x16xf32>, vector<16x1024xf32>, vector<16x1024xf32> -> vector<16x1024xf32>
      %cst_37 = arith.constant 0.000000e+00 : f32
      %37 = vector.broadcast %cst_37 : f32 to vector<16x1024xf32>
      %38 = arith.cmpf ogt, %33, %37 : vector<16x1024xf32>
      %cst_38 = arith.constant 2.000000e-01 : f32
      %39 = vector.broadcast %cst_38 : f32 to vector<16x1024xf32>
      %40 = arith.mulf %39, %33 : vector<16x1024xf32>
      %41 = arith.select %38, %33, %40 : vector<16x1024xi1>, vector<16x1024xf32>
      %cst_39 = arith.constant 0.000000e+00 : f32
      %42 = vector.broadcast %cst_39 : f32 to vector<16x1024xf32>
      %43 = arith.cmpf ogt, %36, %42 : vector<16x1024xf32>
      %cst_40 = arith.constant 2.000000e-01 : f32
      %44 = vector.broadcast %cst_40 : f32 to vector<16x1024xf32>
      %45 = arith.mulf %44, %36 : vector<16x1024xf32>
      %46 = arith.select %43, %36, %45 : vector<16x1024xi1>, vector<16x1024xf32>
      %47 = arith.truncf %41 : vector<16x1024xf32> to vector<16x1024xbf16>
      %c0_41 = arith.constant 0 : index
      %c0_42 = arith.constant 0 : index
      %48 = vector.load %arg10[%c0_41, %c0_42] : memref<16x1024xbf16, #tpu.memory_space<vmem>>, vector<16x1024xbf16>
      tpu.vector_store %arg10[%c0_41, %c0_42], %47 {strides = array<i32>} : memref<16x1024xbf16, #tpu.memory_space<vmem>>, vector<16x1024xbf16>,
      %49 = arith.truncf %46 : vector<16x1024xf32> to vector<16x1024xbf16>
      %c0_43 = arith.constant 0 : index
      %c0_44 = arith.constant 0 : index
      %50 = vector.load %arg11[%c0_43, %c0_44] : memref<16x1024xbf16, #tpu.memory_space<vmem>>, vector<16x1024xbf16>
      tpu.vector_store %arg11[%c0_43, %c0_44], %49 {strides = array<i32>} : memref<16x1024xbf16, #tpu.memory_space<vmem>>, vector<16x1024xbf16>,
    } else {
    }
    %c0 = arith.constant 0 : index
    %c0_1 = arith.constant 0 : index
    %3 = vector.load %arg10[%c0, %c0_1] : memref<16x1024xbf16, #tpu.memory_space<vmem>>, vector<16x1024xbf16>
    %c0_2 = arith.constant 0 : index
    %c0_3 = arith.constant 0 : index
    %c0_4 = arith.constant 0 : index
    %4 = vector.load %arg5[%c0_2, %c0_3, %c0_4] : memref<1x1024x512xbf16, #tpu.memory_space<vmem>>, vector<1x1024x512xbf16>
    %5 = vector.shape_cast %4 : vector<1x1024x512xbf16> to vector<1024x512xbf16>
    %cst = arith.constant dense<0.000000e+00> : vector<16x512xf32>
    %6 = tpu.matmul %3, %5, %cst {dimension_numbers = #tpu.dot_dimension_numbers<[1], [0], [0], [1], [0, 0, 1, 1], [], []>} : vector<16x1024xbf16>, vector<1024x512xbf16>, vector<16x512xf32> -> vector<16x512xf32>
    %c0_5 = arith.constant 0 : index
    %c0_6 = arith.constant 0 : index
    %7 = vector.load %arg11[%c0_5, %c0_6] : memref<16x1024xbf16, #tpu.memory_space<vmem>>, vector<16x1024xbf16>
    %c0_7 = arith.constant 0 : index
    %c0_8 = arith.constant 0 : index
    %c0_9 = arith.constant 0 : index
    %8 = vector.load %arg6[%c0_7, %c0_8, %c0_9] : memref<1x1024x512xbf16, #tpu.memory_space<vmem>>, vector<1x1024x512xbf16>
    %9 = vector.shape_cast %8 : vector<1x1024x512xbf16> to vector<1024x512xbf16>
    %cst_10 = arith.constant dense<0.000000e+00> : vector<16x512xf32>
    %10 = tpu.matmul %7, %9, %cst_10 {dimension_numbers = #tpu.dot_dimension_numbers<[1], [0], [0], [1], [0, 0, 1, 1], [], []>} : vector<16x1024xbf16>, vector<1024x512xbf16>, vector<16x512xf32> -> vector<16x512xf32>
    %c0_11 = arith.constant 0 : index
    %c0_12 = arith.constant 0 : index
    %11 = vector.load %arg9[%c0_11, %c0_12] : memref<16x16xf32, #tpu.memory_space<vmem>>, vector<16x16xf32>
    %cst_13 = arith.constant dense<0.000000e+00> : vector<16x512xf32>
    %12 = tpu.matmul %11, %6, %cst_13 {dimension_numbers = #tpu.dot_dimension_numbers<[1], [0], [0], [1], [0, 0, 1, 1], [], []>} : vector<16x16xf32>, vector<16x512xf32>, vector<16x512xf32> -> vector<16x512xf32>
    %c0_14 = arith.constant 0 : index
    %c0_15 = arith.constant 0 : index
    %13 = vector.load %arg7[%c0_14, %c0_15] : memref<16x512xf32, #tpu.memory_space<vmem>>, vector<16x512xf32>
    tpu.vector_store %arg7[%c0_14, %c0_15], %12 {strides = array<i32>} : memref<16x512xf32, #tpu.memory_space<vmem>>, vector<16x512xf32>,
    %c0_16 = arith.constant 0 : index
    %c0_17 = arith.constant 0 : index
    %14 = vector.load %arg9[%c0_16, %c0_17] : memref<16x16xf32, #tpu.memory_space<vmem>>, vector<16x16xf32>
    %cst_18 = arith.constant dense<0.000000e+00> : vector<16x512xf32>
    %15 = tpu.matmul %14, %10, %cst_18 {dimension_numbers = #tpu.dot_dimension_numbers<[1], [0], [0], [1], [0, 0, 1, 1], [], []>} : vector<16x16xf32>, vector<16x512xf32>, vector<16x512xf32> -> vector<16x512xf32>
    %c0_19 = arith.constant 0 : index
    %c0_20 = arith.constant 0 : index
    %16 = vector.load %arg8[%c0_19, %c0_20] : memref<16x512xf32, #tpu.memory_space<vmem>>, vector<16x512xf32>
    tpu.vector_store %arg8[%c0_19, %c0_20], %15 {strides = array<i32>} : memref<16x512xf32, #tpu.memory_space<vmem>>, vector<16x512xf32>,
    return
  }
  func.func @transform_0(%arg0: i32) -> (i32, i32) {
    %c0_i32 = arith.constant 0 : i32
    %c0_i32_0 = arith.constant 0 : i32
    %c0_i32_1 = arith.constant 0 : i32
    return %c0_i32, %c0_i32_0 : i32, i32
  }
  func.func @transform_1(%arg0: i32) -> (i32, i32) {
    %c0_i32 = arith.constant 0 : i32
    %c0_i32_0 = arith.constant 0 : i32
    %c0_i32_1 = arith.constant 0 : i32
    return %c0_i32, %c0_i32_0 : i32, i32
  }
  func.func @transform_2(%arg0: i32) -> (i32, i32) {
    %c0_i32 = arith.constant 0 : i32
    %c0_i32_0 = arith.constant 0 : i32
    %c0_i32_1 = arith.constant 0 : i32
    return %c0_i32, %c0_i32_0 : i32, i32
  }
  func.func @transform_3(%arg0: i32) -> (i32, i32) {
    %c0_i32 = arith.constant 0 : i32
    %c0_i32_0 = arith.constant 0 : i32
    %c0_i32_1 = arith.constant 0 : i32
    return %c0_i32, %c0_i32_0 : i32, i32
  }
  func.func @transform_4(%arg0: i32) -> (i32, i32, i32) {
    %c0_i32 = arith.constant 0 : i32
    %c0_i32_0 = arith.constant 0 : i32
    %c0_i32_1 = arith.constant 0 : i32
    return %arg0, %c0_i32, %c0_i32_0 : i32, i32, i32
  }
  func.func @transform_5(%arg0: i32) -> (i32, i32, i32) {
    %c0_i32 = arith.constant 0 : i32
    %c0_i32_0 = arith.constant 0 : i32
    %c0_i32_1 = arith.constant 0 : i32
    return %arg0, %c0_i32, %c0_i32_0 : i32, i32, i32
  }
  func.func @transform_6(%arg0: i32) -> (i32, i32) {
    %c0_i32 = arith.constant 0 : i32
    %c0_i32_0 = arith.constant 0 : i32
    return %c0_i32, %arg0 : i32, i32
  }
  func.func @transform_7(%arg0: i32) -> (i32, i32) {
    %c0_i32 = arith.constant 0 : i32
    %c0_i32_0 = arith.constant 0 : i32
    return %c0_i32, %arg0 : i32, i32
  }
}

</mosaic_0001>

<llo_original>
// kernel: tpu_custom_call.1
$region0: #{tpu_custom_call.1}
  #allocation0 [shape = 'u32[]', space=smem, size = 0x4, offset = 0x4, fixed_abs, tag = 'smem constant byte address 0x4 - core index']
  #allocation1 [shape = 'u32[144,128]{1,0:T(1,128)}', space=vmem, size = 0x12000, scoped, tag = 'internal scratch']
  #allocation2 [shape = 'f32[16,16]{1,0:T(8,128)}', space=vmem, size = 0x2000, scoped, tag = 'scratch operand']
  #allocation3 [shape = 'bf16[16,1024]{1,0:T(16,128)(2,1)}', space=vmem, size = 0x8000, scoped, tag = 'scratch operand']
  #allocation4 [shape = 'bf16[16,1024]{1,0:T(16,128)(2,1)}', space=vmem, size = 0x8000, scoped, tag = 'scratch operand']
  %s0 = inlined_call_operand.hbm [shape: f32[16,32], index: 0, kind: input, shape index: {}]
  %s1 = inlined_call_operand.hbm [shape: f32[16,16], index: 1, kind: input, shape index: {}]
  %s2 = inlined_call_operand.hbm [shape: f32[32,1024], index: 2, kind: input, shape index: {}]
  %s3 = inlined_call_operand.hbm [shape: f32[32,1024], index: 3, kind: input, shape index: {}]
  %s4 = inlined_call_operand.hbm [shape: bf16[4,1024,512], index: 4, kind: input, shape index: {}]
  %s5 = inlined_call_operand.hbm [shape: bf16[4,1024,512], index: 5, kind: input, shape index: {}]
  %s6 = inlined_call_operand.hbm [shape: f32[16,2048], index: 6, kind: output, shape index: {0}]
  %s7 = inlined_call_operand.hbm [shape: f32[16,2048], index: 7, kind: output, shape index: {1}]
  %8 = xla_tuple %s6, %s7
  %s9 = sld [smem:[#allocation0]]
  $region93: #{tpu_custom_call.1} parent=0
    _
  %s11 = ssub.s32 1, %s9
  %s12 = scalar_select 0, %s11, %s9
  $region1: #{tpu_custom_call.1} parent=0
    #allocation5 [shape = 'u8[8192]{0}', space=vmem, size = 0x2000, scoped, tag = 'input window, operand 0, single buffered']
    #allocation6 [shape = 's32[2]{0}', space=sflag, size = 0x8, scoped, tag = 'scoped memory for tpu_custom_call.1']
    #allocation7 [shape = 's32[2]{0}', space=sflag, size = 0x8, scoped, tag = 'scoped memory for tpu_custom_call.1']
    #allocation8 [shape = 'u8[8192]{0}', space=vmem, size = 0x2000, scoped, tag = 'input window, operand 1, single buffered']
    #allocation9 [shape = 's32[1]{0}', space=sflag, size = 0x4, scoped, tag = 'scoped memory for tpu_custom_call.1']
    #allocation10 [shape = 'u8[131072]{0}', space=vmem, size = 0x20000, scoped, tag = 'input window, operand 2, single buffered']
    #allocation11 [shape = 'u8[131072]{0}', space=vmem, size = 0x20000, scoped, tag = 'input window, operand 3, single buffered']
    #allocation12 [shape = 's32[1]{0}', space=sflag, size = 0x4, scoped, tag = 'scoped memory for tpu_custom_call.1']
    #allocation13 [shape = 'u8[2097152]{0}', space=vmem, size = 0x200000, scoped, tag = 'input window, operand 4']
    #allocation14 [shape = 'u8[2097152]{0}', space=vmem, size = 0x200000, scoped, tag = 'input window, operand 5']
    #allocation15 [shape = 'u8[65536]{0}', space=vmem, size = 0x10000, scoped, tag = 'output window, operand 0']
    #allocation16 [shape = 'u8[65536]{0}', space=vmem, size = 0x10000, scoped, tag = 'output window, operand 1']
    #allocation17 [shape = 's32[2]{0}', space=sflag, size = 0x8, scoped, tag = 'scoped memory for tpu_custom_call.1']
    %13 = vsyncpa [#allocation6], 0
    %14 = vsyncpa [#allocation9], 0
    %15 = vsyncpa [#allocation12], 0
    %16 = vsyncpa [#allocation7], 0
    %s17 = scalar_lea.sflag [#allocation7], 1
    %18 = vsyncpa %s17, 0
    %19 = vsyncpa [#allocation17], 0
    %s20 = scalar_lea.sflag [#allocation17], 1
    %21 = vsyncpa %s20, 0
    loop: start=0, step=1, limit=6
    $region2: #{tpu_custom_call.1} parent=1 // loop_pre_header
      _
    $region3: #{tpu_custom_call.1} parent=1 // loop_header
      %s23 = sphi 0, %s27
      %p24 = scmp.ge.s32.totalorder %s23, 6
      %s31 = sphi 0, %s31
      %s33 = sphi 0, %s31
      %s34 = sphi 0, %s33
      %s48 = sphi 0, %s34
      %s52 = sphi 0, %s52
      %s54 = sphi 0, %s52
      %s55 = sphi 0, %s54
      %s69 = sphi 0, %s55
      %s73 = sphi 0, %s73
      %s75 = sphi 0, %s73
      %s76 = sphi 0, %s75
      %s90 = sphi 0, %s76
      %s94 = sphi 0, %s94
      %s96 = sphi 0, %s94
      %s97 = sphi 0, %s96
      %s111 = sphi 0, %s97
      %s117 = sphi 0, %s119
      %s120 = sphi 0, %s117
      %s121 = sphi 0, %s120
      %s137 = sphi 0, %s121
      %s143 = sphi 0, %s145
      %s146 = sphi 0, %s143
      %s147 = sphi 0, %s146
      %s163 = sphi 0, %s147
      %s169 = sphi 0, %s171
      %s172 = sphi 0, %s169
      %s173 = sphi 0, %s172
      %s189 = sphi 0, %s173
      %s195 = sphi 0, %s197
      %s198 = sphi 0, %s195
      %s199 = sphi 0, %s198
      %s215 = sphi 0, %s199
    $region4: #{tpu_custom_call.1} parent=1 // loop_header_branch
      %26 = sbr.rel (%p24) target = $region8
    $region5: #{tpu_custom_call.1} parent=1 // loop_body
      %s28 = ssub.s32 %s23, 1
      %s29 = ssub.s32 %s23, 2
      %s30 = sadd.s32 %s23, 1
      %s32 = sadd.s32 %s31, 1
      %p35 = scmp.eq.s32.totalorder %s23, 3
      %p36 = scmp.ne.s32.totalorder %s31, %s33
      %p37 = scmp.eq.s32.totalorder %s23, 0
      %p38 = por %p36, %p37
      %p39 = scmp.ne.s32.totalorder %s31, %s33
      %p40 = scmp.eq.s32.totalorder %s28, 3
      %p41 = por %p39, %p40
      %p42 = scmp.ne.s32.totalorder %s33, %s34
      %p43 = scmp.eq.s32.totalorder %s28, 0
      %p44 = por %p42, %p43
      %p45 = scmp.ne.s32.totalorder %s33, %s34
      %p46 = scmp.eq.s32.totalorder %s29, 3
      %p47 = por %p45, %p46
      %p49 = scmp.ne.s32.totalorder %s34, %s48
      %p50 = scmp.eq.s32.totalorder %s29, 0
      %p51 = por %p49, %p50
      %s53 = sadd.s32 %s52, 1
      %p56 = scmp.eq.s32.totalorder %s23, 3
      %p57 = scmp.ne.s32.totalorder %s52, %s54
      %p58 = scmp.eq.s32.totalorder %s23, 0
      %p59 = por %p57, %p58
      %p60 = scmp.ne.s32.totalorder %s52, %s54
      %p61 = scmp.eq.s32.totalorder %s28, 3
      %p62 = por %p60, %p61
      %p63 = scmp.ne.s32.totalorder %s54, %s55
      %p64 = scmp.eq.s32.totalorder %s28, 0
      %p65 = por %p63, %p64
      %p66 = scmp.ne.s32.totalorder %s54, %s55
      %p67 = scmp.eq.s32.totalorder %s29, 3
      %p68 = por %p66, %p67
      %p70 = scmp.ne.s32.totalorder %s55, %s69
      %p71 = scmp.eq.s32.totalorder %s29, 0
      %p72 = por %p70, %p71
      %s74 = sadd.s32 %s73, 1
      %p77 = scmp.eq.s32.totalorder %s23, 3
      %p78 = scmp.ne.s32.totalorder %s73, %s75
      %p79 = scmp.eq.s32.totalorder %s23, 0
      %p80 = por %p78, %p79
      %p81 = scmp.ne.s32.totalorder %s73, %s75
      %p82 = scmp.eq.s32.totalorder %s28, 3
      %p83 = por %p81, %p82
      %p84 = scmp.ne.s32.totalorder %s75, %s76
      %p85 = scmp.eq.s32.totalorder %s28, 0
      %p86 = por %p84, %p85
      %p87 = scmp.ne.s32.totalorder %s75, %s76
      %p88 = scmp.eq.s32.totalorder %s29, 3
      %p89 = por %p87, %p88
      %p91 = scmp.ne.s32.totalorder %s76, %s90
      %p92 = scmp.eq.s32.totalorder %s29, 0
      %p93 = por %p91, %p92
      %s95 = sadd.s32 %s94, 1
      %p98 = scmp.eq.s32.totalorder %s23, 3
      %p99 = scmp.ne.s32.totalorder %s94, %s96
      %p100 = scmp.eq.s32.totalorder %s23, 0
      %p101 = por %p99, %p100
      %p102 = scmp.ne.s32.totalorder %s94, %s96
      %p103 = scmp.eq.s32.totalorder %s28, 3
      %p104 = por %p102, %p103
      %p105 = scmp.ne.s32.totalorder %s96, %s97
      %p106 = scmp.eq.s32.totalorder %s28, 0
      %p107 = por %p105, %p106
      %p108 = scmp.ne.s32.totalorder %s96, %s97
      %p109 = scmp.eq.s32.totalorder %s29, 3
      %p110 = por %p108, %p109
      %p112 = scmp.ne.s32.totalorder %s97, %s111
      %p113 = scmp.eq.s32.totalorder %s29, 0
      %p114 = por %p112, %p113
      %s115 = ssub.s32 %s23, %s30
      %p116 = scmp.eq.s32.totalorder %s115, 0
      %s118 = sadd.s32 %s117, 1
      %s119 = scalar_select %p116, %s117, %s118
      %p122 = pneg %p116
      %p123 = scmp.eq.s32.totalorder %s23, 3
      %p124 = por %p122, %p123
      %p125 = scmp.ne.s32.totalorder %s117, %s120
      %p126 = scmp.eq.s32.totalorder %s23, 0
      %p127 = por %p125, %p126
      %p128 = scmp.ne.s32.totalorder %s117, %s120
      %p129 = scmp.eq.s32.totalorder %s28, 3
      %p130 = por %p128, %p129
      %p131 = scmp.ne.s32.totalorder %s120, %s121
      %p132 = scmp.eq.s32.totalorder %s28, 0
      %p133 = por %p131, %p132
      %p134 = scmp.ne.s32.totalorder %s120, %s121
      %p135 = scmp.eq.s32.totalorder %s29, 3
      %p136 = por %p134, %p135
      %p138 = scmp.ne.s32.totalorder %s121, %s137
      %p139 = scmp.eq.s32.totalorder %s29, 0
      %p140 = por %p138, %p139
      %s141 = ssub.s32 %s23, %s30
      %p142 = scmp.eq.s32.totalorder %s141, 0
      %s144 = sadd.s32 %s143, 1
      %s145 = scalar_select %p142, %s143, %s144
      %p148 = pneg %p142
      %p149 = scmp.eq.s32.totalorder %s23, 3
      %p150 = por %p148, %p149
      %p151 = scmp.ne.s32.totalorder %s143, %s146
      %p152 = scmp.eq.s32.totalorder %s23, 0
      %p153 = por %p151, %p152
      %p154 = scmp.ne.s32.totalorder %s143, %s146
      %p155 = scmp.eq.s32.totalorder %s28, 3
      %p156 = por %p154, %p155
      %p157 = scmp.ne.s32.totalorder %s146, %s147
      %p158 = scmp.eq.s32.totalorder %s28, 0
      %p159 = por %p157, %p158
      %p160 = scmp.ne.s32.totalorder %s146, %s147
      %p161 = scmp.eq.s32.totalorder %s29, 3
      %p162 = por %p160, %p161
      %p164 = scmp.ne.s32.totalorder %s147, %s163
      %p165 = scmp.eq.s32.totalorder %s29, 0
      %p166 = por %p164, %p165
      %s167 = ssub.s32 %s23, %s30
      %p168 = scmp.eq.s32.totalorder %s167, 0
      %s170 = sadd.s32 %s169, 1
      %s171 = scalar_select %p168, %s169, %s170
      %p174 = pneg %p168
      %p175 = scmp.eq.s32.totalorder %s23, 3
      %p176 = por %p174, %p175
      %p177 = scmp.ne.s32.totalorder %s169, %s172
      %p178 = scmp.eq.s32.totalorder %s23, 0
      %p179 = por %p177, %p178
      %p180 = scmp.ne.s32.totalorder %s169, %s172
      %p181 = scmp.eq.s32.totalorder %s28, 3
      %p182 = por %p180, %p181
      %p183 = scmp.ne.s32.totalorder %s172, %s173
      %p184 = scmp.eq.s32.totalorder %s28, 0
      %p185 = por %p183, %p184
      %p186 = scmp.ne.s32.totalorder %s172, %s173
      %p187 = scmp.eq.s32.totalorder %s29, 3
      %p188 = por %p186, %p187
      %p190 = scmp.ne.s32.totalorder %s173, %s189
      %p191 = scmp.eq.s32.totalorder %s29, 0
      %p192 = por %p190, %p191
      %s193 = ssub.s32 %s23, %s30
      %p194 = scmp.eq.s32.totalorder %s193, 0
      %s196 = sadd.s32 %s195, 1
      %s197 = scalar_select %p194, %s195, %s196
      %p200 = pneg %p194
      %p201 = scmp.eq.s32.totalorder %s23, 3
      %p202 = por %p200, %p201
      %p203 = scmp.ne.s32.totalorder %s195, %s198
      %p204 = scmp.eq.s32.totalorder %s23, 0
      %p205 = por %p203, %p204
      %p206 = scmp.ne.s32.totalorder %s195, %s198
      %p207 = scmp.eq.s32.totalorder %s28, 3
      %p208 = por %p206, %p207
      %p209 = scmp.ne.s32.totalorder %s198, %s199
      %p210 = scmp.eq.s32.totalorder %s28, 0
      %p211 = por %p209, %p210
      %p212 = scmp.ne.s32.totalorder %s198, %s199
      %p213 = scmp.eq.s32.totalorder %s29, 3
      %p214 = por %p212, %p213
      %p216 = scmp.ne.s32.totalorder %s199, %s215
      %p217 = scmp.eq.s32.totalorder %s29, 0
      %p218 = por %p216, %p217
      %p219 = scmp.le.s32.totalorder 1, %s23
      %p220 = scmp.lt.s32.totalorder %s23, 5
      %p221 = pnand %p219, %p220
      %p222 = pneg %p221
      // Predicated region
      $region9: #{tpu_custom_call.1} parent=5 // pred_check
        _
      $region10: #{tpu_custom_call.1} parent=5 // pred_check_branch
        %224 = sbr.rel (%p221) target = $region12
      $region11: #{tpu_custom_call.1} parent=5 // pred_region
        %s225 = ssub.s32 %s23, 1
        // Predicated region
        $region13: #{tpu_custom_call.1} parent=11 // pred_check
          %p226 = pneg %p44
        $region14: #{tpu_custom_call.1} parent=11 // pred_check_branch
          %228 = sbr.rel (%p226) target = $region16
        $region15: #{tpu_custom_call.1} parent=11 // pred_region
          %s230 = ssub.s32 256, 256
          %231 = vsyncadd [#allocation6], %s230
          %s232 = sshll.u32 [#allocation5], 4
          %s233 = int_to_ptr.vmem [resolvable:$true] %s232
          %238 = dma.hbm_to_vmem [thread:$0]  %s0, 256, %s233, [#allocation6], 128, 128, 8
        $region16: #{tpu_custom_call.1} parent=11 // pred_fallthru
          _
        // Predicated region
        $region17: #{tpu_custom_call.1} parent=11 // pred_check
          %p239 = pneg %p65
        $region18: #{tpu_custom_call.1} parent=11 // pred_check_branch
          %241 = sbr.rel (%p239) target = $region20
        $region19: #{tpu_custom_call.1} parent=11 // pred_region
          %s243 = ssub.s32 256, 256
          %244 = vsyncadd [#allocation9], %s243
          %s245 = sshll.u32 [#allocation8], 4
          %s246 = int_to_ptr.vmem [resolvable:$true] %s245
          %251 = dma.hbm_to_vmem [thread:$0]  %s1, 256, %s246, [#allocation9], 128, 128, 8
        $region20: #{tpu_custom_call.1} parent=11 // pred_fallthru
          _
        // Predicated region
        $region21: #{tpu_custom_call.1} parent=11 // pred_check
          %p252 = pneg %p86
        $region22: #{tpu_custom_call.1} parent=11 // pred_check_branch
          %254 = sbr.rel (%p252) target = $region24
        $region23: #{tpu_custom_call.1} parent=11 // pred_region
          %s256 = ssub.s32 4096, 4096
          %257 = vsyncadd [#allocation9], %s256
          %s258 = sshll.u32 [#allocation10], 4
          %s259 = int_to_ptr.vmem [resolvable:$true] %s258
          %264 = dma.hbm_to_vmem [thread:$0]  %s2, 4096, %s259, [#allocation9], 1024, 1024, 64
        $region24: #{tpu_custom_call.1} parent=11 // pred_fallthru
          _
        // Predicated region
        $region25: #{tpu_custom_call.1} parent=11 // pred_check
          %p265 = pneg %p107
        $region26: #{tpu_custom_call.1} parent=11 // pred_check_branch
          %267 = sbr.rel (%p265) target = $region28
        $region27: #{tpu_custom_call.1} parent=11 // pred_region
          %s269 = ssub.s32 4096, 4096
          %270 = vsyncadd [#allocation12], %s269
          %s271 = sshll.u32 [#allocation11], 4
          %s272 = int_to_ptr.vmem [resolvable:$true] %s271
          %277 = dma.hbm_to_vmem [thread:$0]  %s3, 4096, %s272, [#allocation12], 1024, 1024, 64
        $region28: #{tpu_custom_call.1} parent=11 // pred_fallthru
          _
      $region12: #{tpu_custom_call.1} parent=5 // pred_fallthru
        _
      %p278 = scmp.lt.s32.totalorder %s23, 4
      // Predicated region
      $region29: #{tpu_custom_call.1} parent=5 // pred_check
        %p279 = pneg %p278
      $region30: #{tpu_custom_call.1} parent=5 // pred_check_branch
        %281 = sbr.rel (%p279) target = $region32
      $region31: #{tpu_custom_call.1} parent=5 // pred_region
        // Predicated region
        $region33: #{tpu_custom_call.1} parent=31 // pred_check
          %p282 = pneg %p127
        $region34: #{tpu_custom_call.1} parent=31 // pred_check_branch
          %284 = sbr.rel (%p282) target = $region36
        $region35: #{tpu_custom_call.1} parent=31 // pred_region
          %s285 = sand.u32 %s23, 1
          %s286 = scalar_lea.sflag [#allocation6], %s285
          %s287 = sand.u32 %s117, 1
          %s288 = smul.addr %s287, 2048
          %s289 = scalar_lea.vmem [#allocation13], %s288
          %s291 = ssub.s32 32768, 32768
          %292 = vsyncadd %s286, %s291
          %s293 = smul.addr %s23, 512
          %s294 = smul.addr %s293, 64
          %s295 = scalar_lea.hbm %s4, %s294
          %s296 = sshll.u32 %s289, 4
          %s297 = int_to_ptr.vmem [resolvable:$true] %s296
          %302 = dma.hbm_to_vmem [thread:$0]  %s295, 32768, %s297, %s286, 256, 256, 16
        $region36: #{tpu_custom_call.1} parent=31 // pred_fallthru
          _
        // Predicated region
        $region37: #{tpu_custom_call.1} parent=31 // pred_check
          %p303 = pneg %p153
        $region38: #{tpu_custom_call.1} parent=31 // pred_check_branch
          %305 = sbr.rel (%p303) target = $region40
        $region39: #{tpu_custom_call.1} parent=31 // pred_region
          %s306 = sand.u32 %s23, 1
          %s307 = scalar_lea.sflag [#allocation6], %s306
          %s308 = sand.u32 %s143, 1
          %s309 = smul.addr %s308, 2048
          %s310 = scalar_lea.vmem [#allocation14], %s309
          %s312 = ssub.s32 32768, 32768
          %313 = vsyncadd %s307, %s312
          %s314 = smul.addr %s23, 512
          %s315 = smul.addr %s314, 64
          %s316 = scalar_lea.hbm %s5, %s315
          %s317 = sshll.u32 %s310, 4
          %s318 = int_to_ptr.vmem [resolvable:$true] %s317
          %323 = dma.hbm_to_vmem [thread:$0]  %s316, 32768, %s318, %s307, 256, 256, 16
        $region40: #{tpu_custom_call.1} parent=31 // pred_fallthru
          _
      $region32: #{tpu_custom_call.1} parent=5 // pred_fallthru
        _
      %p324 = scmp.le.s32.totalorder 1, %s23
      %p325 = scmp.lt.s32.totalorder %s23, 5
      %p326 = pnand %p324, %p325
      %p327 = pneg %p326
      // Predicated region
      $region41: #{tpu_custom_call.1} parent=5 // pred_check
        _
      $region42: #{tpu_custom_call.1} parent=5 // pred_check_branch
        %329 = sbr.rel (%p326) target = $region44
      $region43: #{tpu_custom_call.1} parent=5 // pred_region
        %s330 = ssub.s32 %s23, 1
        // Predicated region
        $region45: #{tpu_custom_call.1} parent=43 // pred_check
          %p331 = pneg %p44
        $region46: #{tpu_custom_call.1} parent=43 // pred_check_branch
          %333 = sbr.rel (%p331) target = $region48
        $region47: #{tpu_custom_call.1} parent=43 // pred_region
          %334 = dma.done [#allocation6], 256
        $region48: #{tpu_custom_call.1} parent=43 // pred_fallthru
          _
        // Predicated region
        $region49: #{tpu_custom_call.1} parent=43 // pred_check
          %p335 = pneg %p65
        $region50: #{tpu_custom_call.1} parent=43 // pred_check_branch
          %337 = sbr.rel (%p335) target = $region52
        $region51: #{tpu_custom_call.1} parent=43 // pred_region
          %338 = dma.done [#allocation9], 256
        $region52: #{tpu_custom_call.1} parent=43 // pred_fallthru
          _
        // Predicated region
        $region53: #{tpu_custom_call.1} parent=43 // pred_check
          %p339 = pneg %p86
        $region54: #{tpu_custom_call.1} parent=43 // pred_check_branch
          %341 = sbr.rel (%p339) target = $region56
        $region55: #{tpu_custom_call.1} parent=43 // pred_region
          %342 = dma.done [#allocation9], 4096
        $region56: #{tpu_custom_call.1} parent=43 // pred_fallthru
          _
        // Predicated region
        $region57: #{tpu_custom_call.1} parent=43 // pred_check
          %p343 = pneg %p107
        $region58: #{tpu_custom_call.1} parent=43 // pred_check_branch
          %345 = sbr.rel (%p343) target = $region60
        $region59: #{tpu_custom_call.1} parent=43 // pred_region
          %346 = dma.done [#allocation12], 4096
        $region60: #{tpu_custom_call.1} parent=43 // pred_fallthru
          _
        %s347 = sand.u32 %s28, 1
        %s348 = scalar_lea.sflag [#allocation6], %s347
        %s349 = sand.u32 %s120, 1
        %s350 = smul.addr %s349, 2048
        %s351 = scalar_lea.vmem [#allocation13], %s350
        // Predicated region
        $region61: #{tpu_custom_call.1} parent=43 // pred_check
          %p352 = pneg %p133
        $region62: #{tpu_custom_call.1} parent=43 // pred_check_branch
          %354 = sbr.rel (%p352) target = $region64
        $region63: #{tpu_custom_call.1} parent=43 // pred_region
          %355 = dma.done %s348, 32768
        $region64: #{tpu_custom_call.1} parent=43 // pred_fallthru
          _
        %s356 = sand.u32 %s28, 1
        %s357 = scalar_lea.sflag [#allocation6], %s356
        %s358 = sand.u32 %s146, 1
        %s359 = smul.addr %s358, 2048
        %s360 = scalar_lea.vmem [#allocation14], %s359
        // Predicated region
        $region65: #{tpu_custom_call.1} parent=43 // pred_check
          %p361 = pneg %p159
        $region66: #{tpu_custom_call.1} parent=43 // pred_check_branch
          %363 = sbr.rel (%p361) target = $region68
        $region67: #{tpu_custom_call.1} parent=43 // pred_region
          %364 = dma.done %s357, 32768
        $region68: #{tpu_custom_call.1} parent=43 // pred_fallthru
          _
        %p365 = pneg %p44
        %p366 = pneg %p41
        %p367 = pneg %p65
        %p368 = pneg %p62
        %p369 = pneg %p86
        %p370 = pneg %p83
        %p371 = pneg %p107
        %p372 = pneg %p104
        %s373 = sand.u32 %s28, 1
        %s374 = scalar_lea.sflag [#allocation6], %s373
        %s375 = sand.u32 %s120, 1
        %s376 = smul.addr %s375, 2048
        %s377 = scalar_lea.vmem [#allocation13], %s376
        %p378 = pneg %p133
        %p379 = pneg %p130
        %s380 = sand.u32 %s28, 1
        %s381 = scalar_lea.sflag [#allocation6], %s380
        %s382 = sand.u32 %s146, 1
        %s383 = smul.addr %s382, 2048
        %s384 = scalar_lea.vmem [#allocation14], %s383
        %p385 = pneg %p159
        %p386 = pneg %p156
        %p387 = pneg %p185
        %p388 = pneg %p182
        %s389 = sand.u32 %s172, 1
        %s390 = scalar_lea.sflag [#allocation7], %s389
        %s391 = sand.u32 %s172, 1
        %s392 = smul.addr %s391, 64
        %s393 = scalar_lea.vmem [#allocation15], %s392
        %p394 = pneg %p211
        %p395 = pneg %p208
        %s396 = sand.u32 %s198, 1
        %s397 = scalar_lea.sflag [#allocation17], %s396
        %s398 = sand.u32 %s198, 1
        %s399 = smul.addr %s398, 64
        %s400 = scalar_lea.vmem [#allocation16], %s399
        %s401 = smul.u32 4, %s28
        %s402 = smul.u32 4, %s28
        %p403 = scmp.eq.s32.totalorder %s28, 0
        // Predicated region
        $region69: #{tpu_custom_call.1} parent=43 // pred_check
          %p404 = pneg %p403
        $region70: #{tpu_custom_call.1} parent=43 // pred_check_branch
          %406 = sbr.rel (%p404) target = $region72
        $region71: #{tpu_custom_call.1} parent=43 // pred_region
          %v407 = vld [vmem:[#allocation8] sm:$0xff]
          %v408 = vld [vmem:[#allocation8 + $0x8] sm:$0xff]
          %vm409 = vcmask 130048
          %v410 = vsel %vm409, %v407, 0.0
          %411 = vadd.xlane.f32.xlu0 %v410
          %v412 = vpop.xlane.xlu0 %411
          %v413 = vsel %vm409, %v408, 0.0
          %414 = vadd.xlane.f32.xlu0 %v413
          %v415 = vpop.xlane.xlu0 %414
          %v416 = vmax.f32 %v412, 1e-12
          %v417 = vmax.f32 %v415, 1e-12
          %v418 = vrsqrt.pop %v416
          %v419 = vrsqrt.pop %v417
          %420 = vxpose.xlu0.b32.start [1/16] %v407, 128
          %421 = vxpose.xlu0.b32.cont [2/16] %v408, 128
          %422 = vxpose.xlu0.b32.cont [3/16] 0.0, 128
          %423 = vxpose.xlu0.b32.cont [4/16] 0.0, 128
          %424 = vxpose.xlu0.b32.cont [5/16] 0.0, 128
          %425 = vxpose.xlu0.b32.cont [6/16] 0.0, 128
          %426 = vxpose.xlu0.b32.cont [7/16] 0.0, 128
          %427 = vxpose.xlu0.b32.cont [8/16] 0.0, 128
          %428 = vxpose.xlu0.b32.cont [9/16] 0.0, 128
          %429 = vxpose.xlu0.b32.cont [10/16] 0.0, 128
          %430 = vxpose.xlu0.b32.cont [11/16] 0.0, 128
          %431 = vxpose.xlu0.b32.cont [12/16] 0.0, 128
          %432 = vxpose.xlu0.b32.cont [13/16] 0.0, 128
          %433 = vxpose.xlu0.b32.cont [14/16] 0.0, 128
          %434 = vxpose.xlu0.b32.cont [15/16] 0.0, 128
          %435 = vxpose.xlu0.b32.end [16/16] 0.0, 128
          %v436 = vpop.trf.xlu0
          %v437 = vpop.trf.xlu0
          %v438 = vpop.trf.xlu0
          %v439 = vpop.trf.xlu0
          %v440 = vpop.trf.xlu0
          %v441 = vpop.trf.xlu0
          %v442 = vpop.trf.xlu0
          %v443 = vpop.trf.xlu0
          %v444 = vpop.trf.xlu0
          %v445 = vpop.trf.xlu0
          %v446 = vpop.trf.xlu0
          %v447 = vpop.trf.xlu0
          %v448 = vpop.trf.xlu0
          %v449 = vpop.trf.xlu0
          %v450 = vpop.trf.xlu0
          %v451 = vpop.trf.xlu0
          %v452 = vmul.f32 %v418, %v436
          %v453 = vmul.f32 %v419, %v437
          %454 = vxpose.xlu0.b32.start [1/16] %v418, 128
          %455 = vxpose.xlu0.b32.cont [2/16] %v419, 128
          %456 = vxpose.xlu0.b32.cont [3/16] 0.0, 128
          %457 = vxpose.xlu0.b32.cont [4/16] 0.0, 128
          %458 = vxpose.xlu0.b32.cont [5/16] 0.0, 128
          %459 = vxpose.xlu0.b32.cont [6/16] 0.0, 128
          %460 = vxpose.xlu0.b32.cont [7/16] 0.0, 128
          %461 = vxpose.xlu0.b32.cont [8/16] 0.0, 128
          %462 = vxpose.xlu0.b32.cont [9/16] 0.0, 128
          %463 = vxpose.xlu0.b32.cont [10/16] 0.0, 128
          %464 = vxpose.xlu0.b32.cont [11/16] 0.0, 128
          %465 = vxpose.xlu0.b32.cont [12/16] 0.0, 128
          %466 = vxpose.xlu0.b32.cont [13/16] 0.0, 128
          %467 = vxpose.xlu0.b32.cont [14/16] 0.0, 128
          %468 = vxpose.xlu0.b32.cont [15/16] 0.0, 128
          %469 = vxpose.xlu0.b32.end [16/16] 0.0, 128
          %v470 = vpop.trf.xlu0
          %v471 = vpop.trf.xlu0
          %v472 = vpop.trf.xlu0
          %v473 = vpop.trf.xlu0
          %v474 = vpop.trf.xlu0
          %v475 = vpop.trf.xlu0
          %v476 = vpop.trf.xlu0
          %v477 = vpop.trf.xlu0
          %v478 = vpop.trf.xlu0
          %v479 = vpop.trf.xlu0
          %v480 = vpop.trf.xlu0
          %v481 = vpop.trf.xlu0
          %v482 = vpop.trf.xlu0
          %v483 = vpop.trf.xlu0
          %v484 = vpop.trf.xlu0
          %v485 = vpop.trf.xlu0
          %v486 = vlaneseq
          %v487 = vshrl.u32 %v486, 7
          %v488 = vsub.s32 0, %v487
          %v489 = vrot.slane %v470, %v488
          %v490 = vmul.f32 %v452, %v489
          %v491 = vmul.f32 %v453, %v489
          %492 = vst.msk [vmem:[#allocation2] sm:$0xff] %vm409, %v490
          %493 = vst.msk [vmem:[#allocation2 + $0x8] sm:$0xff] %vm409, %v491
          %v494 = vld [vmem:[#allocation5] sm:$0xff]
          %v495 = vld [vmem:[#allocation5 + $0x8] sm:$0xff]
          %v496 = vld [vmem:[#allocation10] sm:$0xff]
          %v497 = vld [vmem:[#allocation10 + $0x8] sm:$0xff]
          %v498 = vld [vmem:[#allocation10 + $0x10] sm:$0xff]
          %v499 = vld [vmem:[#allocation10 + $0x18] sm:$0xff]
          %v500 = vld [vmem:[#allocation10 + $0x20] sm:$0xff]
          %v501 = vld [vmem:[#allocation10 + $0x28] sm:$0xff]
          %v502 = vld [vmem:[#allocation10 + $0x30] sm:$0xff]
          %v503 = vld [vmem:[#allocation10 + $0x38] sm:$0xff]
          %v504 = vld [vmem:[#allocation10 + $0x40] sm:$0xff]
          %v505 = vld [vmem:[#allocation10 + $0x48] sm:$0xff]
          %v506 = vld [vmem:[#allocation10 + $0x50] sm:$0xff]
          %v507 = vld [vmem:[#allocation10 + $0x58] sm:$0xff]
          %v508 = vld [vmem:[#allocation10 + $0x60] sm:$0xff]
          %v509 = vld [vmem:[#allocation10 + $0x68] sm:$0xff]
          %v510 = vld [vmem:[#allocation10 + $0x70] sm:$0xff]
          %v511 = vld [vmem:[#allocation10 + $0x78] sm:$0xff]
          %v512 = vld [vmem:[#allocation10 + $0x80] sm:$0xff]
          %v513 = vld [vmem:[#allocation10 + $0x88] sm:$0xff]
          %v514 = vld [vmem:[#allocation10 + $0x90] sm:$0xff]
          %v515 = vld [vmem:[#allocation10 + $0x98] sm:$0xff]
          %v516 = vld [vmem:[#allocation10 + $0xa0] sm:$0xff]
          %v517 = vld [vmem:[#allocation10 + $0xa8] sm:$0xff]
          %v518 = vld [vmem:[#allocation10 + $0xb0] sm:$0xff]
          %v519 = vld [vmem:[#allocation10 + $0xb8] sm:$0xff]
          %v520 = vld [vmem:[#allocation10 + $0xc0] sm:$0xff]
          %v521 = vld [vmem:[#allocation10 + $0xc8] sm:$0xff]
          %v522 = vld [vmem:[#allocation10 + $0xd0] sm:$0xff]
          %v523 = vld [vmem:[#allocation10 + $0xd8] sm:$0xff]
          %v524 = vld [vmem:[#allocation10 + $0xe0] sm:$0xff]
          %v525 = vld [vmem:[#allocation10 + $0xe8] sm:$0xff]
          %v526 = vld [vmem:[#allocation10 + $0xf0] sm:$0xff]
          %v527 = vld [vmem:[#allocation10 + $0xf8] sm:$0xff]
          %vm528 = vcmask 261120
          %v530 = vsel %vm528, %v494, 0
          %v533 = vsel %vm528, %v495, 0
          %535 = vmatprep.subr.mxu0 %v497
          %536 = vmatpush1.msra.mxu0 %v496
          %537 = vmatprep.subr.mxu0 %v505
          %538 = vmatpush1.msra.mxu0 %v504
          %539 = vmatprep.subr.mxu0 %v513
          %540 = vmatpush1.msra.mxu0 %v512
          %541 = vmatprep.subr.mxu0 %v521
          %542 = vmatpush1.msra.mxu0 %v520
          %543 = vmatprep.subr.mxu0 0.0
          %544 = vmatpush1.msra.mxu0 0.0
          %545 = vmatprep.subr.mxu0 0.0
          %546 = vmatpush1.msra.mxu0 0.0
          %547 = vmatprep.subr.mxu0 0.0
          %548 = vmatpush1.msra.mxu0 0.0
          %549 = vmatprep.subr.mxu0 0.0
          %550 = vmatpush1.msra.mxu0 0.0
          %551 = vmatprep.subr.mxu0 0.0
          %552 = vmatpush1.msra.mxu0 0.0
          %553 = vmatprep.subr.mxu0 0.0
          %554 = vmatpush1.msra.mxu0 0.0
          %555 = vmatprep.subr.mxu0 0.0
          %556 = vmatpush1.msra.mxu0 0.0
          %557 = vmatprep.subr.mxu0 0.0
          %558 = vmatpush1.msra.mxu0 0.0
          %559 = vmatprep.subr.mxu0 0.0
          %560 = vmatpush1.msra.mxu0 0.0
          %561 = vmatprep.subr.mxu0 0.0
          %562 = vmatpush1.msra.mxu0 0.0
          %563 = vmatprep.subr.mxu0 0.0
          %564 = vmatpush1.msra.mxu0 0.0
          %565 = vmatprep.subr.mxu0 0.0
          %566 = vmatpush1.msra.mxu0 0.0
          %567 = vmatprep.subr.mxu0 0.0
          %568 = vmatpush1.msra.mxu0 0.0
          %569 = vmatprep.subr.mxu0 0.0
          %570 = vmatpush1.msra.mxu0 0.0
          %571 = vmatprep.subr.mxu0 0.0
          %572 = vmatpush1.msra.mxu0 0.0
          %573 = vmatprep.subr.mxu0 0.0
          %574 = vmatpush1.msra.mxu0 0.0
          %575 = vmatprep.subr.mxu0 0.0
          %576 = vmatpush1.msra.mxu0 0.0
          %577 = vmatprep.subr.mxu0 0.0
          %578 = vmatpush1.msra.mxu0 0.0
          %579 = vmatprep.subr.mxu0 0.0
          %580 = vmatpush1.msra.mxu0 0.0
          %581 = vmatprep.subr.mxu0 0.0
          %582 = vmatpush1.msra.mxu0 0.0
          %583 = vmatprep.subr.mxu0 0.0
          %584 = vmatpush1.msra.mxu0 0.0
          %585 = vmatprep.subr.mxu0 0.0
          %586 = vmatpush1.msra.mxu0 0.0
          %587 = vmatprep.subr.mxu0 0.0
          %588 = vmatpush1.msra.mxu0 0.0
          %589 = vmatprep.subr.mxu0 0.0
          %590 = vmatpush1.msra.mxu0 0.0
          %591 = vmatprep.subr.mxu0 0.0
          %592 = vmatpush1.msra.mxu0 0.0
          %593 = vmatprep.subr.mxu0 0.0
          %594 = vmatpush1.msra.mxu0 0.0
          %595 = vmatprep.subr.mxu0 0.0
          %596 = vmatpush1.msra.mxu0 0.0
          %597 = vmatprep.subr.mxu0 0.0
          %598 = vmatpush1.msra.mxu0 0.0
          %599 = vmatprep.mubr.f32.mxu0 0.0
          %600 = vmatmul.mubr.f32.gmra.mrb[0].mxu0 %v530
          %v601 = vpop.f32.mrb[0].mxu0
          %v602 = vadd.f32 0.0, %v601
          %v603 = vpop.f32.mrb[0].mxu0
          %v604 = vadd.f32 0.0, %v603
          %605 = vmatprep.mubr.f32.mxu0 0.0
          %606 = vmatmul.mubr.f32.gmra.mrb[0].mxu0 %v533
          %v607 = vpop.f32.mrb[0].mxu0
          %v608 = vadd.f32 0.0, %v607
          %v609 = vpop.f32.mrb[0].mxu0
          %v610 = vadd.f32 0.0, %v609
          %611 = vdwg.mxu0
          %612 = vmatprep.subr.mxu0 %v499
          %613 = vmatpush1.msra.mxu0 %v498
          %614 = vmatprep.subr.mxu0 %v507
          %615 = vmatpush1.msra.mxu0 %v506
          %616 = vmatprep.subr.mxu0 %v515
          %617 = vmatpush1.msra.mxu0 %v514
          %618 = vmatprep.subr.mxu0 %v523
          %619 = vmatpush1.msra.mxu0 %v522
          %620 = vmatprep.subr.mxu0 0.0
          %621 = vmatpush1.msra.mxu0 0.0
          %622 = vmatprep.subr.mxu0 0.0
          %623 = vmatpush1.msra.mxu0 0.0
          %624 = vmatprep.subr.mxu0 0.0
          %625 = vmatpush1.msra.mxu0 0.0
          %626 = vmatprep.subr.mxu0 0.0
          %627 = vmatpush1.msra.mxu0 0.0
          %628 = vmatprep.subr.mxu0 0.0
          %629 = vmatpush1.msra.mxu0 0.0
          %630 = vmatprep.subr.mxu0 0.0
          %631 = vmatpush1.msra.mxu0 0.0
          %632 = vmatprep.subr.mxu0 0.0
          %633 = vmatpush1.msra.mxu0 0.0
          %634 = vmatprep.subr.mxu0 0.0
          %635 = vmatpush1.msra.mxu0 0.0
          %636 = vmatprep.subr.mxu0 0.0
          %637 = vmatpush1.msra.mxu0 0.0
          %638 = vmatprep.subr.mxu0 0.0
          %639 = vmatpush1.msra.mxu0 0.0
          %640 = vmatprep.subr.mxu0 0.0
          %641 = vmatpush1.msra.mxu0 0.0
          %642 = vmatprep.subr.mxu0 0.0
          %643 = vmatpush1.msra.mxu0 0.0
          %644 = vmatprep.subr.mxu0 0.0
          %645 = vmatpush1.msra.mxu0 0.0
          %646 = vmatprep.subr.mxu0 0.0
          %647 = vmatpush1.msra.mxu0 0.0
          %648 = vmatprep.subr.mxu0 0.0
          %649 = vmatpush1.msra.mxu0 0.0
          %650 = vmatprep.subr.mxu0 0.0
          %651 = vmatpush1.msra.mxu0 0.0
          %652 = vmatprep.subr.mxu0 0.0
          %653 = vmatpush1.msra.mxu0 0.0
          %654 = vmatprep.subr.mxu0 0.0
          %655 = vmatpush1.msra.mxu0 0.0
          %656 = vmatprep.subr.mxu0 0.0
          %657 = vmatpush1.msra.mxu0 0.0
          %658 = vmatprep.subr.mxu0 0.0
          %659 = vmatpush1.msra.mxu0 0.0
          %660 = vmatprep.subr.mxu0 0.0
          %661 = vmatpush1.msra.mxu0 0.0
          %662 = vmatprep.subr.mxu0 0.0
          %663 = vmatpush1.msra.mxu0 0.0
          %664 = vmatprep.subr.mxu0 0.0
          %665 = vmatpush1.msra.mxu0 0.0
          %666 = vmatprep.subr.mxu0 0.0
          %667 = vmatpush1.msra.mxu0 0.0
          %668 = vmatprep.subr.mxu0 0.0
          %669 = vmatpush1.msra.mxu0 0.0
          %670 = vmatprep.subr.mxu0 0.0
          %671 = vmatpush1.msra.mxu0 0.0
          %672 = vmatprep.subr.mxu0 0.0
          %673 = vmatpush1.msra.mxu0 0.0
          %674 = vmatprep.subr.mxu0 0.0
          %675 = vmatpush1.msra.mxu0 0.0
          %676 = vmatprep.mubr.f32.mxu0 0.0
          %677 = vmatmul.mubr.f32.gmra.mrb[0].mxu0 %v530
          %v678 = vpop.f32.mrb[0].mxu0
          %v679 = vadd.f32 0.0, %v678
          %v680 = vpop.f32.mrb[0].mxu0
          %v681 = vadd.f32 0.0, %v680
          %682 = vmatprep.mubr.f32.mxu0 0.0
          %683 = vmatmul.mubr.f32.gmra.mrb[0].mxu0 %v533
          %v684 = vpop.f32.mrb[0].mxu0
          %v685 = vadd.f32 0.0, %v684
          %v686 = vpop.f32.mrb[0].mxu0
          %v687 = vadd.f32 0.0, %v686
          %688 = vdwg.mxu0
          %689 = vmatprep.subr.mxu0 %v501
          %690 = vmatpush1.msra.mxu0 %v500
          %691 = vmatprep.subr.mxu0 %v509
          %692 = vmatpush1.msra.mxu0 %v508
          %693 = vmatprep.subr.mxu0 %v517
          %694 = vmatpush1.msra.mxu0 %v516
          %695 = vmatprep.subr.mxu0 %v525
          %696 = vmatpush1.msra.mxu0 %v524
          %697 = vmatprep.subr.mxu0 0.0
          %698 = vmatpush1.msra.mxu0 0.0
          %699 = vmatprep.subr.mxu0 0.0
          %700 = vmatpush1.msra.mxu0 0.0
          %701 = vmatprep.subr.mxu0 0.0
          %702 = vmatpush1.msra.mxu0 0.0
          %703 = vmatprep.subr.mxu0 0.0
          %704 = vmatpush1.msra.mxu0 0.0
          %705 = vmatprep.subr.mxu0 0.0
          %706 = vmatpush1.msra.mxu0 0.0
          %707 = vmatprep.subr.mxu0 0.0
          %708 = vmatpush1.msra.mxu0 0.0
          %709 = vmatprep.subr.mxu0 0.0
          %710 = vmatpush1.msra.mxu0 0.0
          %711 = vmatprep.subr.mxu0 0.0
          %712 = vmatpush1.msra.mxu0 0.0
          %713 = vmatprep.subr.mxu0 0.0
          %714 = vmatpush1.msra.mxu0 0.0
          %715 = vmatprep.subr.mxu0 0.0
          %716 = vmatpush1.msra.mxu0 0.0
          %717 = vmatprep.subr.mxu0 0.0
          %718 = vmatpush1.msra.mxu0 0.0
          %719 = vmatprep.subr.mxu0 0.0
          %720 = vmatpush1.msra.mxu0 0.0
          %721 = vmatprep.subr.mxu0 0.0
          %722 = vmatpush1.msra.mxu0 0.0
          %723 = vmatprep.subr.mxu0 0.0
          %724 = vmatpush1.msra.mxu0 0.0
          %725 = vmatprep.subr.mxu0 0.0
          %726 = vmatpush1.msra.mxu0 0.0
          %727 = vmatprep.subr.mxu0 0.0
          %728 = vmatpush1.msra.mxu0 0.0
          %729 = vmatprep.subr.mxu0 0.0
          %730 = vmatpush1.msra.mxu0 0.0
          %731 = vmatprep.subr.mxu0 0.0
          %732 = vmatpush1.msra.mxu0 0.0
          %733 = vmatprep.subr.mxu0 0.0
          %734 = vmatpush1.msra.mxu0 0.0
          %735 = vmatprep.subr.mxu0 0.0
          %736 = vmatpush1.msra.mxu0 0.0
          %737 = vmatprep.subr.mxu0 0.0
          %738 = vmatpush1.msra.mxu0 0.0
          %739 = vmatprep.subr.mxu0 0.0
          %740 = vmatpush1.msra.mxu0 0.0
          %741 = vmatprep.subr.mxu0 0.0
          %742 = vmatpush1.msra.mxu0 0.0
          %743 = vmatprep.subr.mxu0 0.0
          %744 = vmatpush1.msra.mxu0 0.0
          %745 = vmatprep.subr.mxu0 0.0
          %746 = vmatpush1.msra.mxu0 0.0
          %747 = vmatprep.subr.mxu0 0.0
          %748 = vmatpush1.msra.mxu0 0.0
          %749 = vmatprep.subr.mxu0 0.0
          %750 = vmatpush1.msra.mxu0 0.0
          %751 = vmatprep.subr.mxu0 0.0
          %752 = vmatpush1.msra.mxu0 0.0
          %753 = vmatprep.mubr.f32.mxu0 0.0
          %754 = vmatmul.mubr.f32.gmra.mrb[0].mxu0 %v530
          %v755 = vpop.f32.mrb[0].mxu0
          %v756 = vadd.f32 0.0, %v755
          %v757 = vpop.f32.mrb[0].mxu0
          %v758 = vadd.f32 0.0, %v757
          %759 = vmatprep.mubr.f32.mxu0 0.0
          %760 = vmatmul.mubr.f32.gmra.mrb[0].mxu0 %v533
          %v761 = vpop.f32.mrb[0].mxu0
          %v762 = vadd.f32 0.0, %v761
          %v763 = vpop.f32.mrb[0].mxu0
          %v764 = vadd.f32 0.0, %v763
          %765 = vdwg.mxu0
          %766 = vmatprep.subr.mxu0 %v503
          %767 = vmatpush1.msra.mxu0 %v502
          %768 = vmatprep.subr.mxu0 %v511
          %769 = vmatpush1.msra.mxu0 %v510
          %770 = vmatprep.subr.mxu0 %v519
          %771 = vmatpush1.msra.mxu0 %v518
          %772 = vmatprep.subr.mxu0 %v527
          %773 = vmatpush1.msra.mxu0 %v526
          %774 = vmatprep.subr.mxu0 0.0
          %775 = vmatpush1.msra.mxu0 0.0
          %776 = vmatprep.subr.mxu0 0.0
          %777 = vmatpush1.msra.mxu0 0.0
          %778 = vmatprep.subr.mxu0 0.0
          %779 = vmatpush1.msra.mxu0 0.0
          %780 = vmatprep.subr.mxu0 0.0
          %781 = vmatpush1.msra.mxu0 0.0
          %782 = vmatprep.subr.mxu0 0.0
          %783 = vmatpush1.msra.mxu0 0.0
          %784 = vmatprep.subr.mxu0 0.0
          %785 = vmatpush1.msra.mxu0 0.0
          %786 = vmatprep.subr.mxu0 0.0
          %787 = vmatpush1.msra.mxu0 0.0
          %788 = vmatprep.subr.mxu0 0.0
          %789 = vmatpush1.msra.mxu0 0.0
          %790 = vmatprep.subr.mxu0 0.0
          %791 = vmatpush1.msra.mxu0 0.0
          %792 = vmatprep.subr.mxu0 0.0
          %793 = vmatpush1.msra.mxu0 0.0
          %794 = vmatprep.subr.mxu0 0.0
          %795 = vmatpush1.msra.mxu0 0.0
          %796 = vmatprep.subr.mxu0 0.0
          %797 = vmatpush1.msra.mxu0 0.0
          %798 = vmatprep.subr.mxu0 0.0
          %799 = vmatpush1.msra.mxu0 0.0
          %800 = vmatprep.subr.mxu0 0.0
          %801 = vmatpush1.msra.mxu0 0.0
          %802 = vmatprep.subr.mxu0 0.0
          %803 = vmatpush1.msra.mxu0 0.0
          %804 = vmatprep.subr.mxu0 0.0
          %805 = vmatpush1.msra.mxu0 0.0
          %806 = vmatprep.subr.mxu0 0.0
          %807 = vmatpush1.msra.mxu0 0.0
          %808 = vmatprep.subr.mxu0 0.0
          %809 = vmatpush1.msra.mxu0 0.0
          %810 = vmatprep.subr.mxu0 0.0
          %811 = vmatpush1.msra.mxu0 0.0
          %812 = vmatprep.subr.mxu0 0.0
          %813 = vmatpush1.msra.mxu0 0.0
          %814 = vmatprep.subr.mxu0 0.0
          %815 = vmatpush1.msra.mxu0 0.0
          %816 = vmatprep.subr.mxu0 0.0
          %817 = vmatpush1.msra.mxu0 0.0
          %818 = vmatprep.subr.mxu0 0.0
          %819 = vmatpush1.msra.mxu0 0.0
          %820 = vmatprep.subr.mxu0 0.0
          %821 = vmatpush1.msra.mxu0 0.0
          %822 = vmatprep.subr.mxu0 0.0
          %823 = vmatpush1.msra.mxu0 0.0
          %824 = vmatprep.subr.mxu0 0.0
          %825 = vmatpush1.msra.mxu0 0.0
          %826 = vmatprep.subr.mxu0 0.0
          %827 = vmatpush1.msra.mxu0 0.0
          %828 = vmatprep.subr.mxu0 0.0
          %829 = vmatpush1.msra.mxu0 0.0
          %830 = vmatprep.mubr.f32.mxu0 0.0
          %831 = vmatmul.mubr.f32.gmra.mrb[0].mxu0 %v530
          %v832 = vpop.f32.mrb[0].mxu0
          %v833 = vadd.f32 0.0, %v832
          %v834 = vpop.f32.mrb[0].mxu0
          %v835 = vadd.f32 0.0, %v834
          %836 = vmatprep.mubr.f32.mxu0 0.0
          %837 = vmatmul.mubr.f32.gmra.mrb[0].mxu0 %v533
          %v838 = vpop.f32.mrb[0].mxu0
          %v839 = vadd.f32 0.0, %v838
          %v840 = vpop.f32.mrb[0].mxu0
          %v841 = vadd.f32 0.0, %v840
          %842 = vdwg.mxu0
          %v844 = vsel %vm409, %v490, 0
          %v847 = vsel %vm409, %v491, 0
          %849 = vmatprep.subr.mxu0 %v604
          %850 = vmatpush1.msra.mxu0 %v602
          %851 = vmatprep.subr.mxu0 %v610
          %852 = vmatpush1.msra.mxu0 %v608
          %853 = vmatprep.subr.mxu0 0.0
          %854 = vmatpush1.msra.mxu0 0.0
          %855 = vmatprep.subr.mxu0 0.0
          %856 = vmatpush1.msra.mxu0 0.0
          %857 = vmatprep.subr.mxu0 0.0
          %858 = vmatpush1.msra.mxu0 0.0
          %859 = vmatprep.subr.mxu0 0.0
          %860 = vmatpush1.msra.mxu0 0.0
          %861 = vmatprep.subr.mxu0 0.0
          %862 = vmatpush1.msra.mxu0 0.0
          %863 = vmatprep.subr.mxu0 0.0
          %864 = vmatpush1.msra.mxu0 0.0
          %865 = vmatprep.subr.mxu0 0.0
          %866 = vmatpush1.msra.mxu0 0.0
          %867 = vmatprep.subr.mxu0 0.0
          %868 = vmatpush1.msra.mxu0 0.0
          %869 = vmatprep.subr.mxu0 0.0
          %870 = vmatpush1.msra.mxu0 0.0
          %871 = vmatprep.subr.mxu0 0.0
          %872 = vmatpush1.msra.mxu0 0.0
          %873 = vmatprep.subr.mxu0 0.0
          %874 = vmatpush1.msra.mxu0 0.0
          %875 = vmatprep.subr.mxu0 0.0
          %876 = vmatpush1.msra.mxu0 0.0
          %877 = vmatprep.subr.mxu0 0.0
          %878 = vmatpush1.msra.mxu0 0.0
          %879 = vmatprep.subr.mxu0 0.0
          %880 = vmatpush1.msra.mxu0 0.0
          %881 = vmatprep.subr.mxu0 0.0
          %882 = vmatpush1.msra.mxu0 0.0
          %883 = vmatprep.subr.mxu0 0.0
          %884 = vmatpush1.msra.mxu0 0.0
          %885 = vmatprep.subr.mxu0 0.0
          %886 = vmatpush1.msra.mxu0 0.0
          %887 = vmatprep.subr.mxu0 0.0
          %888 = vmatpush1.msra.mxu0 0.0
          %889 = vmatprep.subr.mxu0 0.0
          %890 = vmatpush1.msra.mxu0 0.0
          %891 = vmatprep.subr.mxu0 0.0
          %892 = vmatpush1.msra.mxu0 0.0
          %893 = vmatprep.subr.mxu0 0.0
          %894 = vmatpush1.msra.mxu0 0.0
          %895 = vmatprep.subr.mxu0 0.0
          %896 = vmatpush1.msra.mxu0 0.0
          %897 = vmatprep.subr.mxu0 0.0
          %898 = vmatpush1.msra.mxu0 0.0
          %899 = vmatprep.subr.mxu0 0.0
          %900 = vmatpush1.msra.mxu0 0.0
          %901 = vmatprep.subr.mxu0 0.0
          %902 = vmatpush1.msra.mxu0 0.0
          %903 = vmatprep.subr.mxu0 0.0
          %904 = vmatpush1.msra.mxu0 0.0
          %905 = vmatprep.subr.mxu0 0.0
          %906 = vmatpush1.msra.mxu0 0.0
          %907 = vmatprep.subr.mxu0 0.0
          %908 = vmatpush1.msra.mxu0 0.0
          %909 = vmatprep.subr.mxu0 0.0
          %910 = vmatpush1.msra.mxu0 0.0
          %911 = vmatprep.subr.mxu0 0.0
          %912 = vmatpush1.msra.mxu0 0.0
          %913 = vmatprep.mubr.f32.mxu0 0.0
          %914 = vmatmul.mubr.f32.gmra.mrb[0].mxu0 %v844
          %v915 = vpop.f32.mrb[0].mxu0
          %v916 = vadd.f32 0.0, %v915
          %v917 = vpop.f32.mrb[0].mxu0
          %v918 = vadd.f32 0.0, %v917
          %919 = vmatprep.mubr.f32.mxu0 0.0
          %920 = vmatmul.mubr.f32.gmra.mrb[0].mxu0 %v847
          %v921 = vpop.f32.mrb[0].mxu0
          %v922 = vadd.f32 0.0, %v921
          %v923 = vpop.f32.mrb[0].mxu0
          %v924 = vadd.f32 0.0, %v923
          %925 = vdwg.mxu0
          %926 = vmatprep.subr.mxu0 %v681
          %927 = vmatpush1.msra.mxu0 %v679
          %928 = vmatprep.subr.mxu0 %v687
          %929 = vmatpush1.msra.mxu0 %v685
          %930 = vmatprep.subr.mxu0 0.0
          %931 = vmatpush1.msra.mxu0 0.0
          %932 = vmatprep.subr.mxu0 0.0
          %933 = vmatpush1.msra.mxu0 0.0
          %934 = vmatprep.subr.mxu0 0.0
          %935 = vmatpush1.msra.mxu0 0.0
          %936 = vmatprep.subr.mxu0 0.0
          %937 = vmatpush1.msra.mxu0 0.0
          %938 = vmatprep.subr.mxu0 0.0
          %939 = vmatpush1.msra.mxu0 0.0
          %940 = vmatprep.subr.mxu0 0.0
          %941 = vmatpush1.msra.mxu0 0.0
          %942 = vmatprep.subr.mxu0 0.0
          %943 = vmatpush1.msra.mxu0 0.0
          %944 = vmatprep.subr.mxu0 0.0
          %945 = vmatpush1.msra.mxu0 0.0
          %946 = vmatprep.subr.mxu0 0.0
          %947 = vmatpush1.msra.mxu0 0.0
          %948 = vmatprep.subr.mxu0 0.0
          %949 = vmatpush1.msra.mxu0 0.0
          %950 = vmatprep.subr.mxu0 0.0
          %951 = vmatpush1.msra.mxu0 0.0
          %952 = vmatprep.subr.mxu0 0.0
          %953 = vmatpush1.msra.mxu0 0.0
          %954 = vmatprep.subr.mxu0 0.0
          %955 = vmatpush1.msra.mxu0 0.0
          %956 = vmatprep.subr.mxu0 0.0
          %957 = vmatpush1.msra.mxu0 0.0
          %958 = vmatprep.subr.mxu0 0.0
          %959 = vmatpush1.msra.mxu0 0.0
          %960 = vmatprep.subr.mxu0 0.0
          %961 = vmatpush1.msra.mxu0 0.0
          %962 = vmatprep.subr.mxu0 0.0
          %963 = vmatpush1.msra.mxu0 0.0
          %964 = vmatprep.subr.mxu0 0.0
          %965 = vmatpush1.msra.mxu0 0.0
          %966 = vmatprep.subr.mxu0 0.0
          %967 = vmatpush1.msra.mxu0 0.0
          %968 = vmatprep.subr.mxu0 0.0
          %969 = vmatpush1.msra.mxu0 0.0
          %970 = vmatprep.subr.mxu0 0.0
          %971 = vmatpush1.msra.mxu0 0.0
          %972 = vmatprep.subr.mxu0 0.0
          %973 = vmatpush1.msra.mxu0 0.0
          %974 = vmatprep.subr.mxu0 0.0
          %975 = vmatpush1.msra.mxu0 0.0
          %976 = vmatprep.subr.mxu0 0.0
          %977 = vmatpush1.msra.mxu0 0.0
          %978 = vmatprep.subr.mxu0 0.0
          %979 = vmatpush1.msra.mxu0 0.0
          %980 = vmatprep.subr.mxu0 0.0
          %981 = vmatpush1.msra.mxu0 0.0
          %982 = vmatprep.subr.mxu0 0.0
          %983 = vmatpush1.msra.mxu0 0.0
          %984 = vmatprep.subr.mxu0 0.0
          %985 = vmatpush1.msra.mxu0 0.0
          %986 = vmatprep.subr.mxu0 0.0
          %987 = vmatpush1.msra.mxu0 0.0
          %988 = vmatprep.subr.mxu0 0.0
          %989 = vmatpush1.msra.mxu0 0.0
          %990 = vmatprep.mubr.f32.mxu0 0.0
          %991 = vmatmul.mubr.f32.gmra.mrb[0].mxu0 %v844
          %v992 = vpop.f32.mrb[0].mxu0
          %v993 = vadd.f32 0.0, %v992
          %v994 = vpop.f32.mrb[0].mxu0
          %v995 = vadd.f32 0.0, %v994
          %996 = vmatprep.mubr.f32.mxu0 0.0
          %997 = vmatmul.mubr.f32.gmra.mrb[0].mxu0 %v847
          %v998 = vpop.f32.mrb[0].mxu0
          %v999 = vadd.f32 0.0, %v998
          %v1000 = vpop.f32.mrb[0].mxu0
          %v1001 = vadd.f32 0.0, %v1000
          %1002 = vdwg.mxu0
          %1003 = vmatprep.subr.mxu0 %v758
          %1004 = vmatpush1.msra.mxu0 %v756
          %1005 = vmatprep.subr.mxu0 %v764
          %1006 = vmatpush1.msra.mxu0 %v762
          %1007 = vmatprep.subr.mxu0 0.0
          %1008 = vmatpush1.msra.mxu0 0.0
          %1009 = vmatprep.subr.mxu0 0.0
          %1010 = vmatpush1.msra.mxu0 0.0
          %1011 = vmatprep.subr.mxu0 0.0
          %1012 = vmatpush1.msra.mxu0 0.0
          %1013 = vmatprep.subr.mxu0 0.0
          %1014 = vmatpush1.msra.mxu0 0.0
          %1015 = vmatprep.subr.mxu0 0.0
          %1016 = vmatpush1.msra.mxu0 0.0
          %1017 = vmatprep.subr.mxu0 0.0
          %1018 = vmatpush1.msra.mxu0 0.0
          %1019 = vmatprep.subr.mxu0 0.0
          %1020 = vmatpush1.msra.mxu0 0.0
          %1021 = vmatprep.subr.mxu0 0.0
          %1022 = vmatpush1.msra.mxu0 0.0
          %1023 = vmatprep.subr.mxu0 0.0
          %1024 = vmatpush1.msra.mxu0 0.0
          %1025 = vmatprep.subr.mxu0 0.0
          %1026 = vmatpush1.msra.mxu0 0.0
          %1027 = vmatprep.subr.mxu0 0.0
          %1028 = vmatpush1.msra.mxu0 0.0
          %1029 = vmatprep.subr.mxu0 0.0
          %1030 = vmatpush1.msra.mxu0 0.0
          %1031 = vmatprep.subr.mxu0 0.0
          %1032 = vmatpush1.msra.mxu0 0.0
          %1033 = vmatprep.subr.mxu0 0.0
          %1034 = vmatpush1.msra.mxu0 0.0
          %1035 = vmatprep.subr.mxu0 0.0
          %1036 = vmatpush1.msra.mxu0 0.0
          %1037 = vmatprep.subr.mxu0 0.0
          %1038 = vmatpush1.msra.mxu0 0.0
          %1039 = vmatprep.subr.mxu0 0.0
          %1040 = vmatpush1.msra.mxu0 0.0
          %1041 = vmatprep.subr.mxu0 0.0
          %1042 = vmatpush1.msra.mxu0 0.0
          %1043 = vmatprep.subr.mxu0 0.0
          %1044 = vmatpush1.msra.mxu0 0.0
          %1045 = vmatprep.subr.mxu0 0.0
          %1046 = vmatpush1.msra.mxu0 0.0
          %1047 = vmatprep.subr.mxu0 0.0
          %1048 = vmatpush1.msra.mxu0 0.0
          %1049 = vmatprep.subr.mxu0 0.0
          %1050 = vmatpush1.msra.mxu0 0.0
          %1051 = vmatprep.subr.mxu0 0.0
          %1052 = vmatpush1.msra.mxu0 0.0
          %1053 = vmatprep.subr.mxu0 0.0
          %1054 = vmatpush1.msra.mxu0 0.0
          %1055 = vmatprep.subr.mxu0 0.0
          %1056 = vmatpush1.msra.mxu0 0.0
          %1057 = vmatprep.subr.mxu0 0.0
          %1058 = vmatpush1.msra.mxu0 0.0
          %1059 = vmatprep.subr.mxu0 0.0
          %1060 = vmatpush1.msra.mxu0 0.0
          %1061 = vmatprep.subr.mxu0 0.0
          %1062 = vmatpush1.msra.mxu0 0.0
          %1063 = vmatprep.subr.mxu0 0.0
          %1064 = vmatpush1.msra.mxu0 0.0
          %1065 = vmatprep.subr.mxu0 0.0
          %1066 = vmatpush1.msra.mxu0 0.0
          %1067 = vmatprep.mubr.f32.mxu0 0.0
          %1068 = vmatmul.mubr.f32.gmra.mrb[0].mxu0 %v844
          %v1069 = vpop.f32.mrb[0].mxu0
          %v1070 = vadd.f32 0.0, %v1069
          %v1071 = vpop.f32.mrb[0].mxu0
          %v1072 = vadd.f32 0.0, %v1071
          %1073 = vmatprep.mubr.f32.mxu0 0.0
          %1074 = vmatmul.mubr.f32.gmra.mrb[0].mxu0 %v847
          %v1075 = vpop.f32.mrb[0].mxu0
          %v1076 = vadd.f32 0.0, %v1075
          %v1077 = vpop.f32.mrb[0].mxu0
          %v1078 = vadd.f32 0.0, %v1077
          %1079 = vdwg.mxu0
          %1080 = vmatprep.subr.mxu0 %v835
          %1081 = vmatpush1.msra.mxu0 %v833
          %1082 = vmatprep.subr.mxu0 %v841
          %1083 = vmatpush1.msra.mxu0 %v839
          %1084 = vmatprep.subr.mxu0 0.0
          %1085 = vmatpush1.msra.mxu0 0.0
          %1086 = vmatprep.subr.mxu0 0.0
          %1087 = vmatpush1.msra.mxu0 0.0
          %1088 = vmatprep.subr.mxu0 0.0
          %1089 = vmatpush1.msra.mxu0 0.0
          %1090 = vmatprep.subr.mxu0 0.0
          %1091 = vmatpush1.msra.mxu0 0.0
          %1092 = vmatprep.subr.mxu0 0.0
          %1093 = vmatpush1.msra.mxu0 0.0
          %1094 = vmatprep.subr.mxu0 0.0
          %1095 = vmatpush1.msra.mxu0 0.0
          %1096 = vmatprep.subr.mxu0 0.0
          %1097 = vmatpush1.msra.mxu0 0.0
          %1098 = vmatprep.subr.mxu0 0.0
          %1099 = vmatpush1.msra.mxu0 0.0
          %1100 = vmatprep.subr.mxu0 0.0
          %1101 = vmatpush1.msra.mxu0 0.0
          %1102 = vmatprep.subr.mxu0 0.0
          %1103 = vmatpush1.msra.mxu0 0.0
          %1104 = vmatprep.subr.mxu0 0.0
          %1105 = vmatpush1.msra.mxu0 0.0
          %1106 = vmatprep.subr.mxu0 0.0
          %1107 = vmatpush1.msra.mxu0 0.0
          %1108 = vmatprep.subr.mxu0 0.0
          %1109 = vmatpush1.msra.mxu0 0.0
          %1110 = vmatprep.subr.mxu0 0.0
          %1111 = vmatpush1.msra.mxu0 0.0
          %1112 = vmatprep.subr.mxu0 0.0
          %1113 = vmatpush1.msra.mxu0 0.0
          %1114 = vmatprep.subr.mxu0 0.0
          %1115 = vmatpush1.msra.mxu0 0.0
          %1116 = vmatprep.subr.mxu0 0.0
          %1117 = vmatpush1.msra.mxu0 0.0
          %1118 = vmatprep.subr.mxu0 0.0
          %1119 = vmatpush1.msra.mxu0 0.0
          %1120 = vmatprep.subr.mxu0 0.0
          %1121 = vmatpush1.msra.mxu0 0.0
          %1122 = vmatprep.subr.mxu0 0.0
          %1123 = vmatpush1.msra.mxu0 0.0
          %1124 = vmatprep.subr.mxu0 0.0
          %1125 = vmatpush1.msra.mxu0 0.0
          %1126 = vmatprep.subr.mxu0 0.0
          %1127 = vmatpush1.msra.mxu0 0.0
          %1128 = vmatprep.subr.mxu0 0.0
          %1129 = vmatpush1.msra.mxu0 0.0
          %1130 = vmatprep.subr.mxu0 0.0
          %1131 = vmatpush1.msra.mxu0 0.0
          %1132 = vmatprep.subr.mxu0 0.0
          %1133 = vmatpush1.msra.mxu0 0.0
          %1134 = vmatprep.subr.mxu0 0.0
          %1135 = vmatpush1.msra.mxu0 0.0
          %1136 = vmatprep.subr.mxu0 0.0
          %1137 = vmatpush1.msra.mxu0 0.0
          %1138 = vmatprep.subr.mxu0 0.0
          %1139 = vmatpush1.msra.mxu0 0.0
          %1140 = vmatprep.subr.mxu0 0.0
          %1141 = vmatpush1.msra.mxu0 0.0
          %1142 = vmatprep.subr.mxu0 0.0
          %1143 = vmatpush1.msra.mxu0 0.0
          %1144 = vmatprep.mubr.f32.mxu0 0.0
          %1145 = vmatmul.mubr.f32.gmra.mrb[0].mxu0 %v844
          %v1146 = vpop.f32.mrb[0].mxu0
          %v1147 = vadd.f32 0.0, %v1146
          %v1148 = vpop.f32.mrb[0].mxu0
          %v1149 = vadd.f32 0.0, %v1148
          %1150 = vmatprep.mubr.f32.mxu0 0.0
          %1151 = vmatmul.mubr.f32.gmra.mrb[0].mxu0 %v847
          %v1152 = vpop.f32.mrb[0].mxu0
          %v1153 = vadd.f32 0.0, %v1152
          %v1154 = vpop.f32.mrb[0].mxu0
          %v1155 = vadd.f32 0.0, %v1154
          %1156 = vdwg.mxu0
          %v1157 = vld [vmem:[#allocation11] sm:$0xff]
          %v1158 = vld [vmem:[#allocation11 + $0x8] sm:$0xff]
          %v1159 = vld [vmem:[#allocation11 + $0x10] sm:$0xff]
          %v1160 = vld [vmem:[#allocation11 + $0x18] sm:$0xff]
          %v1161 = vld [vmem:[#allocation11 + $0x20] sm:$0xff]
          %v1162 = vld [vmem:[#allocation11 + $0x28] sm:$0xff]
          %v1163 = vld [vmem:[#allocation11 + $0x30] sm:$0xff]
          %v1164 = vld [vmem:[#allocation11 + $0x38] sm:$0xff]
          %v1165 = vld [vmem:[#allocation11 + $0x40] sm:$0xff]
          %v1166 = vld [vmem:[#allocation11 + $0x48] sm:$0xff]
          %v1167 = vld [vmem:[#allocation11 + $0x50] sm:$0xff]
          %v1168 = vld [vmem:[#allocation11 + $0x58] sm:$0xff]
          %v1169 = vld [vmem:[#allocation11 + $0x60] sm:$0xff]
          %v1170 = vld [vmem:[#allocation11 + $0x68] sm:$0xff]
          %v1171 = vld [vmem:[#allocation11 + $0x70] sm:$0xff]
          %v1172 = vld [vmem:[#allocation11 + $0x78] sm:$0xff]
          %v1173 = vld [vmem:[#allocation11 + $0x80] sm:$0xff]
          %v1174 = vld [vmem:[#allocation11 + $0x88] sm:$0xff]
          %v1175 = vld [vmem:[#allocation11 + $0x90] sm:$0xff]
          %v1176 = vld [vmem:[#allocation11 + $0x98] sm:$0xff]
          %v1177 = vld [vmem:[#allocation11 + $0xa0] sm:$0xff]
          %v1178 = vld [vmem:[#allocation11 + $0xa8] sm:$0xff]
          %v1179 = vld [vmem:[#allocation11 + $0xb0] sm:$0xff]
          %v1180 = vld [vmem:[#allocation11 + $0xb8] sm:$0xff]
          %v1181 = vld [vmem:[#allocation11 + $0xc0] sm:$0xff]
          %v1182 = vld [vmem:[#allocation11 + $0xc8] sm:$0xff]
          %v1183 = vld [vmem:[#allocation11 + $0xd0] sm:$0xff]
          %v1184 = vld [vmem:[#allocation11 + $0xd8] sm:$0xff]
          %v1185 = vld [vmem:[#allocation11 + $0xe0] sm:$0xff]
          %v1186 = vld [vmem:[#allocation11 + $0xe8] sm:$0xff]
          %v1187 = vld [vmem:[#allocation11 + $0xf0] sm:$0xff]
          %v1188 = vld [vmem:[#allocation11 + $0xf8] sm:$0xff]
          %1189 = vmatprep.subr.mxu0 %v1158
          %1190 = vmatpush1.msra.mxu0 %v1157
          %1191 = vmatprep.subr.mxu0 %v1166
          %1192 = vmatpush1.msra.mxu0 %v1165
          %1193 = vmatprep.subr.mxu0 %v1174
          %1194 = vmatpush1.msra.mxu0 %v1173
          %1195 = vmatprep.subr.mxu0 %v1182
          %1196 = vmatpush1.msra.mxu0 %v1181
          %1197 = vmatprep.subr.mxu0 0.0
          %1198 = vmatpush1.msra.mxu0 0.0
          %1199 = vmatprep.subr.mxu0 0.0
          %1200 = vmatpush1.msra.mxu0 0.0
          %1201 = vmatprep.subr.mxu0 0.0
          %1202 = vmatpush1.msra.mxu0 0.0
          %1203 = vmatprep.subr.mxu0 0.0
          %1204 = vmatpush1.msra.mxu0 0.0
          %1205 = vmatprep.subr.mxu0 0.0
          %1206 = vmatpush1.msra.mxu0 0.0
          %1207 = vmatprep.subr.mxu0 0.0
          %1208 = vmatpush1.msra.mxu0 0.0
          %1209 = vmatprep.subr.mxu0 0.0
          %1210 = vmatpush1.msra.mxu0 0.0
          %1211 = vmatprep.subr.mxu0 0.0
          %1212 = vmatpush1.msra.mxu0 0.0
          %1213 = vmatprep.subr.mxu0 0.0
          %1214 = vmatpush1.msra.mxu0 0.0
          %1215 = vmatprep.subr.mxu0 0.0
          %1216 = vmatpush1.msra.mxu0 0.0
          %1217 = vmatprep.subr.mxu0 0.0
          %1218 = vmatpush1.msra.mxu0 0.0
          %1219 = vmatprep.subr.mxu0 0.0
          %1220 = vmatpush1.msra.mxu0 0.0
          %1221 = vmatprep.subr.mxu0 0.0
          %1222 = vmatpush1.msra.mxu0 0.0
          %1223 = vmatprep.subr.mxu0 0.0
          %1224 = vmatpush1.msra.mxu0 0.0
          %1225 = vmatprep.subr.mxu0 0.0
          %1226 = vmatpush1.msra.mxu0 0.0
          %1227 = vmatprep.subr.mxu0 0.0
          %1228 = vmatpush1.msra.mxu0 0.0
          %1229 = vmatprep.subr.mxu0 0.0
          %1230 = vmatpush1.msra.mxu0 0.0
          %1231 = vmatprep.subr.mxu0 0.0
          %1232 = vmatpush1.msra.mxu0 0.0
          %1233 = vmatprep.subr.mxu0 0.0
          %1234 = vmatpush1.msra.mxu0 0.0
          %1235 = vmatprep.subr.mxu0 0.0
          %1236 = vmatpush1.msra.mxu0 0.0
          %1237 = vmatprep.subr.mxu0 0.0
          %1238 = vmatpush1.msra.mxu0 0.0
          %1239 = vmatprep.subr.mxu0 0.0
          %1240 = vmatpush1.msra.mxu0 0.0
          %1241 = vmatprep.subr.mxu0 0.0
          %1242 = vmatpush1.msra.mxu0 0.0
          %1243 = vmatprep.subr.mxu0 0.0
          %1244 = vmatpush1.msra.mxu0 0.0
          %1245 = vmatprep.subr.mxu0 0.0
          %1246 = vmatpush1.msra.mxu0 0.0
          %1247 = vmatprep.subr.mxu0 0.0
          %1248 = vmatpush1.msra.mxu0 0.0
          %1249 = vmatprep.subr.mxu0 0.0
          %1250 = vmatpush1.msra.mxu0 0.0
          %1251 = vmatprep.subr.mxu0 0.0
          %1252 = vmatpush1.msra.mxu0 0.0
          %1253 = vmatprep.mubr.f32.mxu0 0.0
          %1254 = vmatmul.mubr.f32.gmra.mrb[0].mxu0 %v530
          %v1255 = vpop.f32.mrb[0].mxu0
          %v1256 = vadd.f32 0.0, %v1255
          %v1257 = vpop.f32.mrb[0].mxu0
          %v1258 = vadd.f32 0.0, %v1257
          %1259 = vmatprep.mubr.f32.mxu0 0.0
          %1260 = vmatmul.mubr.f32.gmra.mrb[0].mxu0 %v533
          %v1261 = vpop.f32.mrb[0].mxu0
          %v1262 = vadd.f32 0.0, %v1261
          %v1263 = vpop.f32.mrb[0].mxu0
          %v1264 = vadd.f32 0.0, %v1263
          %1265 = vdwg.mxu0
          %1266 = vmatprep.subr.mxu0 %v1160
          %1267 = vmatpush1.msra.mxu0 %v1159
          %1268 = vmatprep.subr.mxu0 %v1168
          %1269 = vmatpush1.msra.mxu0 %v1167
          %1270 = vmatprep.subr.mxu0 %v1176
          %1271 = vmatpush1.msra.mxu0 %v1175
          %1272 = vmatprep.subr.mxu0 %v1184
          %1273 = vmatpush1.msra.mxu0 %v1183
          %1274 = vmatprep.subr.mxu0 0.0
          %1275 = vmatpush1.msra.mxu0 0.0
          %1276 = vmatprep.subr.mxu0 0.0
          %1277 = vmatpush1.msra.mxu0 0.0
          %1278 = vmatprep.subr.mxu0 0.0
          %1279 = vmatpush1.msra.mxu0 0.0
          %1280 = vmatprep.subr.mxu0 0.0
          %1281 = vmatpush1.msra.mxu0 0.0
          %1282 = vmatprep.subr.mxu0 0.0
          %1283 = vmatpush1.msra.mxu0 0.0
          %1284 = vmatprep.subr.mxu0 0.0
          %1285 = vmatpush1.msra.mxu0 0.0
          %1286 = vmatprep.subr.mxu0 0.0
          %1287 = vmatpush1.msra.mxu0 0.0
          %1288 = vmatprep.subr.mxu0 0.0
          %1289 = vmatpush1.msra.mxu0 0.0
          %1290 = vmatprep.subr.mxu0 0.0
          %1291 = vmatpush1.msra.mxu0 0.0
          %1292 = vmatprep.subr.mxu0 0.0
          %1293 = vmatpush1.msra.mxu0 0.0
          %1294 = vmatprep.subr.mxu0 0.0
          %1295 = vmatpush1.msra.mxu0 0.0
          %1296 = vmatprep.subr.mxu0 0.0
          %1297 = vmatpush1.msra.mxu0 0.0
          %1298 = vmatprep.subr.mxu0 0.0
          %1299 = vmatpush1.msra.mxu0 0.0
          %1300 = vmatprep.subr.mxu0 0.0
          %1301 = vmatpush1.msra.mxu0 0.0
          %1302 = vmatprep.subr.mxu0 0.0
          %1303 = vmatpush1.msra.mxu0 0.0
          %1304 = vmatprep.subr.mxu0 0.0
          %1305 = vmatpush1.msra.mxu0 0.0
          %1306 = vmatprep.subr.mxu0 0.0
          %1307 = vmatpush1.msra.mxu0 0.0
          %1308 = vmatprep.subr.mxu0 0.0
          %1309 = vmatpush1.msra.mxu0 0.0
          %1310 = vmatprep.subr.mxu0 0.0
          %1311 = vmatpush1.msra.mxu0 0.0
          %1312 = vmatprep.subr.mxu0 0.0
          %1313 = vmatpush1.msra.mxu0 0.0
          %1314 = vmatprep.subr.mxu0 0.0
          %1315 = vmatpush1.msra.mxu0 0.0
          %1316 = vmatprep.subr.mxu0 0.0
          %1317 = vmatpush1.msra.mxu0 0.0
          %1318 = vmatprep.subr.mxu0 0.0
          %1319 = vmatpush1.msra.mxu0 0.0
          %1320 = vmatprep.subr.mxu0 0.0
          %1321 = vmatpush1.msra.mxu0 0.0
          %1322 = vmatprep.subr.mxu0 0.0
          %1323 = vmatpush1.msra.mxu0 0.0
          %1324 = vmatprep.subr.mxu0 0.0
          %1325 = vmatpush1.msra.mxu0 0.0
          %1326 = vmatprep.subr.mxu0 0.0
          %1327 = vmatpush1.msra.mxu0 0.0
          %1328 = vmatprep.subr.mxu0 0.0
          %1329 = vmatpush1.msra.mxu0 0.0
          %1330 = vmatprep.mubr.f32.mxu0 0.0
          %1331 = vmatmul.mubr.f32.gmra.mrb[0].mxu0 %v530
          %v1332 = vpop.f32.mrb[0].mxu0
          %v1333 = vadd.f32 0.0, %v1332
          %v1334 = vpop.f32.mrb[0].mxu0
          %v1335 = vadd.f32 0.0, %v1334
          %1336 = vmatprep.mubr.f32.mxu0 0.0
          %1337 = vmatmul.mubr.f32.gmra.mrb[0].mxu0 %v533
          %v1338 = vpop.f32.mrb[0].mxu0
          %v1339 = vadd.f32 0.0, %v1338
          %v1340 = vpop.f32.mrb[0].mxu0
          %v1341 = vadd.f32 0.0, %v1340
          %1342 = vdwg.mxu0
          %1343 = vmatprep.subr.mxu0 %v1162
          %1344 = vmatpush1.msra.mxu0 %v1161
          %1345 = vmatprep.subr.mxu0 %v1170
          %1346 = vmatpush1.msra.mxu0 %v1169
          %1347 = vmatprep.subr.mxu0 %v1178
          %1348 = vmatpush1.msra.mxu0 %v1177
          %1349 = vmatprep.subr.mxu0 %v1186
          %1350 = vmatpush1.msra.mxu0 %v1185
          %1351 = vmatprep.subr.mxu0 0.0
          %1352 = vmatpush1.msra.mxu0 0.0
          %1353 = vmatprep.subr.mxu0 0.0
          %1354 = vmatpush1.msra.mxu0 0.0
          %1355 = vmatprep.subr.mxu0 0.0
          %1356 = vmatpush1.msra.mxu0 0.0
          %1357 = vmatprep.subr.mxu0 0.0
          %1358 = vmatpush1.msra.mxu0 0.0
          %1359 = vmatprep.subr.mxu0 0.0
          %1360 = vmatpush1.msra.mxu0 0.0
          %1361 = vmatprep.subr.mxu0 0.0
          %1362 = vmatpush1.msra.mxu0 0.0
          %1363 = vmatprep.subr.mxu0 0.0
          %1364 = vmatpush1.msra.mxu0 0.0
          %1365 = vmatprep.subr.mxu0 0.0
          %1366 = vmatpush1.msra.mxu0 0.0
          %1367 = vmatprep.subr.mxu0 0.0
          %1368 = vmatpush1.msra.mxu0 0.0
          %1369 = vmatprep.subr.mxu0 0.0
          %1370 = vmatpush1.msra.mxu0 0.0
          %1371 = vmatprep.subr.mxu0 0.0
          %1372 = vmatpush1.msra.mxu0 0.0
          %1373 = vmatprep.subr.mxu0 0.0
          %1374 = vmatpush1.msra.mxu0 0.0
          %1375 = vmatprep.subr.mxu0 0.0
          %1376 = vmatpush1.msra.mxu0 0.0
          %1377 = vmatprep.subr.mxu0 0.0
          %1378 = vmatpush1.msra.mxu0 0.0
          %1379 = vmatprep.subr.mxu0 0.0
          %1380 = vmatpush1.msra.mxu0 0.0
          %1381 = vmatprep.subr.mxu0 0.0
          %1382 = vmatpush1.msra.mxu0 0.0
          %1383 = vmatprep.subr.mxu0 0.0
          %1384 = vmatpush1.msra.mxu0 0.0
          %1385 = vmatprep.subr.mxu0 0.0
          %1386 = vmatpush1.msra.mxu0 0.0
          %1387 = vmatprep.subr.mxu0 0.0
          %1388 = vmatpush1.msra.mxu0 0.0
          %1389 = vmatprep.subr.mxu0 0.0
          %1390 = vmatpush1.msra.mxu0 0.0
          %1391 = vmatprep.subr.mxu0 0.0
          %1392 = vmatpush1.msra.mxu0 0.0
          %1393 = vmatprep.subr.mxu0 0.0
          %1394 = vmatpush1.msra.mxu0 0.0
          %1395 = vmatprep.subr.mxu0 0.0
          %1396 = vmatpush1.msra.mxu0 0.0
          %1397 = vmatprep.subr.mxu0 0.0
          %1398 = vmatpush1.msra.mxu0 0.0
          %1399 = vmatprep.subr.mxu0 0.0
          %1400 = vmatpush1.msra.mxu0 0.0
          %1401 = vmatprep.subr.mxu0 0.0
          %1402 = vmatpush1.msra.mxu0 0.0
          %1403 = vmatprep.subr.mxu0 0.0
          %1404 = vmatpush1.msra.mxu0 0.0
          %1405 = vmatprep.subr.mxu0 0.0
          %1406 = vmatpush1.msra.mxu0 0.0
          %1407 = vmatprep.mubr.f32.mxu0 0.0
          %1408 = vmatmul.mubr.f32.gmra.mrb[0].mxu0 %v530
          %v1409 = vpop.f32.mrb[0].mxu0
          %v1410 = vadd.f32 0.0, %v1409
          %v1411 = vpop.f32.mrb[0].mxu0
          %v1412 = vadd.f32 0.0, %v1411
          %1413 = vmatprep.mubr.f32.mxu0 0.0
          %1414 = vmatmul.mubr.f32.gmra.mrb[0].mxu0 %v533
          %v1415 = vpop.f32.mrb[0].mxu0
          %v1416 = vadd.f32 0.0, %v1415
          %v1417 = vpop.f32.mrb[0].mxu0
          %v1418 = vadd.f32 0.0, %v1417
          %1419 = vdwg.mxu0
          %1420 = vmatprep.subr.mxu0 %v1164
          %1421 = vmatpush1.msra.mxu0 %v1163
          %1422 = vmatprep.subr.mxu0 %v1172
          %1423 = vmatpush1.msra.mxu0 %v1171
          %1424 = vmatprep.subr.mxu0 %v1180
          %1425 = vmatpush1.msra.mxu0 %v1179
          %1426 = vmatprep.subr.mxu0 %v1188
          %1427 = vmatpush1.msra.mxu0 %v1187
          %1428 = vmatprep.subr.mxu0 0.0
          %1429 = vmatpush1.msra.mxu0 0.0
          %1430 = vmatprep.subr.mxu0 0.0
          %1431 = vmatpush1.msra.mxu0 0.0
          %1432 = vmatprep.subr.mxu0 0.0
          %1433 = vmatpush1.msra.mxu0 0.0
          %1434 = vmatprep.subr.mxu0 0.0
          %1435 = vmatpush1.msra.mxu0 0.0
          %1436 = vmatprep.subr.mxu0 0.0
          %1437 = vmatpush1.msra.mxu0 0.0
          %1438 = vmatprep.subr.mxu0 0.0
          %1439 = vmatpush1.msra.mxu0 0.0
          %1440 = vmatprep.subr.mxu0 0.0
          %1441 = vmatpush1.msra.mxu0 0.0
          %1442 = vmatprep.subr.mxu0 0.0
          %1443 = vmatpush1.msra.mxu0 0.0
          %1444 = vmatprep.subr.mxu0 0.0
          %1445 = vmatpush1.msra.mxu0 0.0
          %1446 = vmatprep.subr.mxu0 0.0
          %1447 = vmatpush1.msra.mxu0 0.0
          %1448 = vmatprep.subr.mxu0 0.0
          %1449 = vmatpush1.msra.mxu0 0.0
          %1450 = vmatprep.subr.mxu0 0.0
          %1451 = vmatpush1.msra.mxu0 0.0
          %1452 = vmatprep.subr.mxu0 0.0
          %1453 = vmatpush1.msra.mxu0 0.0
          %1454 = vmatprep.subr.mxu0 0.0
          %1455 = vmatpush1.msra.mxu0 0.0
          %1456 = vmatprep.subr.mxu0 0.0
          %1457 = vmatpush1.msra.mxu0 0.0
          %1458 = vmatprep.subr.mxu0 0.0
          %1459 = vmatpush1.msra.mxu0 0.0
          %1460 = vmatprep.subr.mxu0 0.0
          %1461 = vmatpush1.msra.mxu0 0.0
          %1462 = vmatprep.subr.mxu0 0.0
          %1463 = vmatpush1.msra.mxu0 0.0
          %1464 = vmatprep.subr.mxu0 0.0
          %1465 = vmatpush1.msra.mxu0 0.0
          %1466 = vmatprep.subr.mxu0 0.0
          %1467 = vmatpush1.msra.mxu0 0.0
          %1468 = vmatprep.subr.mxu0 0.0
          %1469 = vmatpush1.msra.mxu0 0.0
          %1470 = vmatprep.subr.mxu0 0.0
          %1471 = vmatpush1.msra.mxu0 0.0
          %1472 = vmatprep.subr.mxu0 0.0
          %1473 = vmatpush1.msra.mxu0 0.0
          %1474 = vmatprep.subr.mxu0 0.0
          %1475 = vmatpush1.msra.mxu0 0.0
          %1476 = vmatprep.subr.mxu0 0.0
          %1477 = vmatpush1.msra.mxu0 0.0
          %1478 = vmatprep.subr.mxu0 0.0
          %1479 = vmatpush1.msra.mxu0 0.0
          %1480 = vmatprep.subr.mxu0 0.0
          %1481 = vmatpush1.msra.mxu0 0.0
          %1482 = vmatprep.subr.mxu0 0.0
          %1483 = vmatpush1.msra.mxu0 0.0
          %1484 = vmatprep.mubr.f32.mxu0 0.0
          %1485 = vmatmul.mubr.f32.gmra.mrb[0].mxu0 %v530
          %v1486 = vpop.f32.mrb[0].mxu0
          %v1487 = vadd.f32 0.0, %v1486
          %v1488 = vpop.f32.mrb[0].mxu0
          %v1489 = vadd.f32 0.0, %v1488
          %1490 = vmatprep.mubr.f32.mxu0 0.0
          %1491 = vmatmul.mubr.f32.gmra.mrb[0].mxu0 %v533
          %v1492 = vpop.f32.mrb[0].mxu0
          %v1493 = vadd.f32 0.0, %v1492
          %v1494 = vpop.f32.mrb[0].mxu0
          %v1495 = vadd.f32 0.0, %v1494
          %1496 = vdwg.mxu0
          %1497 = vmatprep.subr.mxu0 %v1258
          %1498 = vmatpush1.msra.mxu0 %v1256
          %1499 = vmatprep.subr.mxu0 %v1264
          %1500 = vmatpush1.msra.mxu0 %v1262
          %1501 = vmatprep.subr.mxu0 0.0
          %1502 = vmatpush1.msra.mxu0 0.0
          %1503 = vmatprep.subr.mxu0 0.0
          %1504 = vmatpush1.msra.mxu0 0.0
          %1505 = vmatprep.subr.mxu0 0.0
          %1506 = vmatpush1.msra.mxu0 0.0
          %1507 = vmatprep.subr.mxu0 0.0
          %1508 = vmatpush1.msra.mxu0 0.0
          %1509 = vmatprep.subr.mxu0 0.0
          %1510 = vmatpush1.msra.mxu0 0.0
          %1511 = vmatprep.subr.mxu0 0.0
          %1512 = vmatpush1.msra.mxu0 0.0
          %1513 = vmatprep.subr.mxu0 0.0
          %1514 = vmatpush1.msra.mxu0 0.0
          %1515 = vmatprep.subr.mxu0 0.0
          %1516 = vmatpush1.msra.mxu0 0.0
          %1517 = vmatprep.subr.mxu0 0.0
          %1518 = vmatpush1.msra.mxu0 0.0
          %1519 = vmatprep.subr.mxu0 0.0
          %1520 = vmatpush1.msra.mxu0 0.0
          %1521 = vmatprep.subr.mxu0 0.0
          %1522 = vmatpush1.msra.mxu0 0.0
          %1523 = vmatprep.subr.mxu0 0.0
          %1524 = vmatpush1.msra.mxu0 0.0
          %1525 = vmatprep.subr.mxu0 0.0
          %1526 = vmatpush1.msra.mxu0 0.0
          %1527 = vmatprep.subr.mxu0 0.0
          %1528 = vmatpush1.msra.mxu0 0.0
          %1529 = vmatprep.subr.mxu0 0.0
          %1530 = vmatpush1.msra.mxu0 0.0
          %1531 = vmatprep.subr.mxu0 0.0
          %1532 = vmatpush1.msra.mxu0 0.0
          %1533 = vmatprep.subr.mxu0 0.0
          %1534 = vmatpush1.msra.mxu0 0.0
          %1535 = vmatprep.subr.mxu0 0.0
          %1536 = vmatpush1.msra.mxu0 0.0
          %1537 = vmatprep.subr.mxu0 0.0
          %1538 = vmatpush1.msra.mxu0 0.0
          %1539 = vmatprep.subr.mxu0 0.0
          %1540 = vmatpush1.msra.mxu0 0.0
          %1541 = vmatprep.subr.mxu0 0.0
          %1542 = vmatpush1.msra.mxu0 0.0
          %1543 = vmatprep.subr.mxu0 0.0
          %1544 = vmatpush1.msra.mxu0 0.0
          %1545 = vmatprep.subr.mxu0 0.0
          %1546 = vmatpush1.msra.mxu0 0.0
          %1547 = vmatprep.subr.mxu0 0.0
          %1548 = vmatpush1.msra.mxu0 0.0
          %1549 = vmatprep.subr.mxu0 0.0
          %1550 = vmatpush1.msra.mxu0 0.0
          %1551 = vmatprep.subr.mxu0 0.0
          %1552 = vmatpush1.msra.mxu0 0.0
          %1553 = vmatprep.subr.mxu0 0.0
          %1554 = vmatpush1.msra.mxu0 0.0
          %1555 = vmatprep.subr.mxu0 0.0
          %1556 = vmatpush1.msra.mxu0 0.0
          %1557 = vmatprep.subr.mxu0 0.0
          %1558 = vmatpush1.msra.mxu0 0.0
          %1559 = vmatprep.subr.mxu0 0.0
          %1560 = vmatpush1.msra.mxu0 0.0
          %1561 = vmatprep.mubr.f32.mxu0 0.0
          %1562 = vmatmul.mubr.f32.gmra.mrb[0].mxu0 %v844
          %v1563 = vpop.f32.mrb[0].mxu0
          %v1564 = vadd.f32 0.0, %v1563
          %v1565 = vpop.f32.mrb[0].mxu0
          %v1566 = vadd.f32 0.0, %v1565
          %1567 = vmatprep.mubr.f32.mxu0 0.0
          %1568 = vmatmul.mubr.f32.gmra.mrb[0].mxu0 %v847
          %v1569 = vpop.f32.mrb[0].mxu0
          %v1570 = vadd.f32 0.0, %v1569
          %v1571 = vpop.f32.mrb[0].mxu0
          %v1572 = vadd.f32 0.0, %v1571
          %1573 = vdwg.mxu0
          %1574 = vmatprep.subr.mxu0 %v1335
          %1575 = vmatpush1.msra.mxu0 %v1333
          %1576 = vmatprep.subr.mxu0 %v1341
          %1577 = vmatpush1.msra.mxu0 %v1339
          %1578 = vmatprep.subr.mxu0 0.0
          %1579 = vmatpush1.msra.mxu0 0.0
          %1580 = vmatprep.subr.mxu0 0.0
          %1581 = vmatpush1.msra.mxu0 0.0
          %1582 = vmatprep.subr.mxu0 0.0
          %1583 = vmatpush1.msra.mxu0 0.0
          %1584 = vmatprep.subr.mxu0 0.0
          %1585 = vmatpush1.msra.mxu0 0.0
          %1586 = vmatprep.subr.mxu0 0.0
          %1587 = vmatpush1.msra.mxu0 0.0
          %1588 = vmatprep.subr.mxu0 0.0
          %1589 = vmatpush1.msra.mxu0 0.0
          %1590 = vmatprep.subr.mxu0 0.0
          %1591 = vmatpush1.msra.mxu0 0.0
          %1592 = vmatprep.subr.mxu0 0.0
          %1593 = vmatpush1.msra.mxu0 0.0
          %1594 = vmatprep.subr.mxu0 0.0
          %1595 = vmatpush1.msra.mxu0 0.0
          %1596 = vmatprep.subr.mxu0 0.0
          %1597 = vmatpush1.msra.mxu0 0.0
          %1598 = vmatprep.subr.mxu0 0.0
          %1599 = vmatpush1.msra.mxu0 0.0
          %1600 = vmatprep.subr.mxu0 0.0
          %1601 = vmatpush1.msra.mxu0 0.0
          %1602 = vmatprep.subr.mxu0 0.0
          %1603 = vmatpush1.msra.mxu0 0.0
          %1604 = vmatprep.subr.mxu0 0.0
          %1605 = vmatpush1.msra.mxu0 0.0
          %1606 = vmatprep.subr.mxu0 0.0
          %1607 = vmatpush1.msra.mxu0 0.0
          %1608 = vmatprep.subr.mxu0 0.0
          %1609 = vmatpush1.msra.mxu0 0.0
          %1610 = vmatprep.subr.mxu0 0.0
          %1611 = vmatpush1.msra.mxu0 0.0
          %1612 = vmatprep.subr.mxu0 0.0
          %1613 = vmatpush1.msra.mxu0 0.0
          %1614 = vmatprep.subr.mxu0 0.0
          %1615 = vmatpush1.msra.mxu0 0.0
          %1616 = vmatprep.subr.mxu0 0.0
          %1617 = vmatpush1.msra.mxu0 0.0
          %1618 = vmatprep.subr.mxu0 0.0
          %1619 = vmatpush1.msra.mxu0 0.0
          %1620 = vmatprep.subr.mxu0 0.0
          %1621 = vmatpush1.msra.mxu0 0.0
          %1622 = vmatprep.subr.mxu0 0.0
          %1623 = vmatpush1.msra.mxu0 0.0
          %1624 = vmatprep.subr.mxu0 0.0
          %1625 = vmatpush1.msra.mxu0 0.0
          %1626 = vmatprep.subr.mxu0 0.0
          %1627 = vmatpush1.msra.mxu0 0.0
          %1628 = vmatprep.subr.mxu0 0.0
          %1629 = vmatpush1.msra.mxu0 0.0
          %1630 = vmatprep.subr.mxu0 0.0
          %1631 = vmatpush1.msra.mxu0 0.0
          %1632 = vmatprep.subr.mxu0 0.0
          %1633 = vmatpush1.msra.mxu0 0.0
          %1634 = vmatprep.subr.mxu0 0.0
          %1635 = vmatpush1.msra.mxu0 0.0
          %1636 = vmatprep.subr.mxu0 0.0
          %1637 = vmatpush1.msra.mxu0 0.0
          %1638 = vmatprep.mubr.f32.mxu0 0.0
          %1639 = vmatmul.mubr.f32.gmra.mrb[0].mxu0 %v844
          %v1640 = vpop.f32.mrb[0].mxu0
          %v1641 = vadd.f32 0.0, %v1640
          %v1642 = vpop.f32.mrb[0].mxu0
          %v1643 = vadd.f32 0.0, %v1642
          %1644 = vmatprep.mubr.f32.mxu0 0.0
          %1645 = vmatmul.mubr.f32.gmra.mrb[0].mxu0 %v847
          %v1646 = vpop.f32.mrb[0].mxu0
          %v1647 = vadd.f32 0.0, %v1646
          %v1648 = vpop.f32.mrb[0].mxu0
          %v1649 = vadd.f32 0.0, %v1648
          %1650 = vdwg.mxu0
          %1651 = vmatprep.subr.mxu0 %v1412
          %1652 = vmatpush1.msra.mxu0 %v1410
          %1653 = vmatprep.subr.mxu0 %v1418
          %1654 = vmatpush1.msra.mxu0 %v1416
          %1655 = vmatprep.subr.mxu0 0.0
          %1656 = vmatpush1.msra.mxu0 0.0
          %1657 = vmatprep.subr.mxu0 0.0
          %1658 = vmatpush1.msra.mxu0 0.0
          %1659 = vmatprep.subr.mxu0 0.0
          %1660 = vmatpush1.msra.mxu0 0.0
          %1661 = vmatprep.subr.mxu0 0.0
          %1662 = vmatpush1.msra.mxu0 0.0
          %1663 = vmatprep.subr.mxu0 0.0
          %1664 = vmatpush1.msra.mxu0 0.0
          %1665 = vmatprep.subr.mxu0 0.0
          %1666 = vmatpush1.msra.mxu0 0.0
          %1667 = vmatprep.subr.mxu0 0.0
          %1668 = vmatpush1.msra.mxu0 0.0
          %1669 = vmatprep.subr.mxu0 0.0
          %1670 = vmatpush1.msra.mxu0 0.0
          %1671 = vmatprep.subr.mxu0 0.0
          %1672 = vmatpush1.msra.mxu0 0.0
          %1673 = vmatprep.subr.mxu0 0.0
          %1674 = vmatpush1.msra.mxu0 0.0
          %1675 = vmatprep.subr.mxu0 0.0
          %1676 = vmatpush1.msra.mxu0 0.0
          %1677 = vmatprep.subr.mxu0 0.0
          %1678 = vmatpush1.msra.mxu0 0.0
          %1679 = vmatprep.subr.mxu0 0.0
          %1680 = vmatpush1.msra.mxu0 0.0
          %1681 = vmatprep.subr.mxu0 0.0
          %1682 = vmatpush1.msra.mxu0 0.0
          %1683 = vmatprep.subr.mxu0 0.0
          %1684 = vmatpush1.msra.mxu0 0.0
          %1685 = vmatprep.subr.mxu0 0.0
          %1686 = vmatpush1.msra.mxu0 0.0
          %1687 = vmatprep.subr.mxu0 0.0
          %1688 = vmatpush1.msra.mxu0 0.0
          %1689 = vmatprep.subr.mxu0 0.0
          %1690 = vmatpush1.msra.mxu0 0.0
          %1691 = vmatprep.subr.mxu0 0.0
          %1692 = vmatpush1.msra.mxu0 0.0
          %1693 = vmatprep.subr.mxu0 0.0
          %1694 = vmatpush1.msra.mxu0 0.0
          %1695 = vmatprep.subr.mxu0 0.0
          %1696 = vmatpush1.msra.mxu0 0.0
          %1697 = vmatprep.subr.mxu0 0.0
          %1698 = vmatpush1.msra.mxu0 0.0
          %1699 = vmatprep.subr.mxu0 0.0
          %1700 = vmatpush1.msra.mxu0 0.0
          %1701 = vmatprep.subr.mxu0 0.0
          %1702 = vmatpush1.msra.mxu0 0.0
          %1703 = vmatprep.subr.mxu0 0.0
          %1704 = vmatpush1.msra.mxu0 0.0
          %1705 = vmatprep.subr.mxu0 0.0
          %1706 = vmatpush1.msra.mxu0 0.0
          %1707 = vmatprep.subr.mxu0 0.0
          %1708 = vmatpush1.msra.mxu0 0.0
          %1709 = vmatprep.subr.mxu0 0.0
          %1710 = vmatpush1.msra.mxu0 0.0
          %1711 = vmatprep.subr.mxu0 0.0
          %1712 = vmatpush1.msra.mxu0 0.0
          %1713 = vmatprep.subr.mxu0 0.0
          %1714 = vmatpush1.msra.mxu0 0.0
          %1715 = vmatprep.mubr.f32.mxu0 0.0
          %1716 = vmatmul.mubr.f32.gmra.mrb[0].mxu0 %v844
          %v1717 = vpop.f32.mrb[0].mxu0
          %v1718 = vadd.f32 0.0, %v1717
          %v1719 = vpop.f32.mrb[0].mxu0
          %v1720 = vadd.f32 0.0, %v1719
          %1721 = vmatprep.mubr.f32.mxu0 0.0
          %1722 = vmatmul.mubr.f32.gmra.mrb[0].mxu0 %v847
          %v1723 = vpop.f32.mrb[0].mxu0
          %v1724 = vadd.f32 0.0, %v1723
          %v1725 = vpop.f32.mrb[0].mxu0
          %v1726 = vadd.f32 0.0, %v1725
          %1727 = vdwg.mxu0
          %1728 = vmatprep.subr.mxu0 %v1489
          %1729 = vmatpush1.msra.mxu0 %v1487
          %1730 = vmatprep.subr.mxu0 %v1495
          %1731 = vmatpush1.msra.mxu0 %v1493
          %1732 = vmatprep.subr.mxu0 0.0
          %1733 = vmatpush1.msra.mxu0 0.0
          %1734 = vmatprep.subr.mxu0 0.0
          %1735 = vmatpush1.msra.mxu0 0.0
          %1736 = vmatprep.subr.mxu0 0.0
          %1737 = vmatpush1.msra.mxu0 0.0
          %1738 = vmatprep.subr.mxu0 0.0
          %1739 = vmatpush1.msra.mxu0 0.0
          %1740 = vmatprep.subr.mxu0 0.0
          %1741 = vmatpush1.msra.mxu0 0.0
          %1742 = vmatprep.subr.mxu0 0.0
          %1743 = vmatpush1.msra.mxu0 0.0
          %1744 = vmatprep.subr.mxu0 0.0
          %1745 = vmatpush1.msra.mxu0 0.0
          %1746 = vmatprep.subr.mxu0 0.0
          %1747 = vmatpush1.msra.mxu0 0.0
          %1748 = vmatprep.subr.mxu0 0.0
          %1749 = vmatpush1.msra.mxu0 0.0
          %1750 = vmatprep.subr.mxu0 0.0
          %1751 = vmatpush1.msra.mxu0 0.0
          %1752 = vmatprep.subr.mxu0 0.0
          %1753 = vmatpush1.msra.mxu0 0.0
          %1754 = vmatprep.subr.mxu0 0.0
          %1755 = vmatpush1.msra.mxu0 0.0
          %1756 = vmatprep.subr.mxu0 0.0
          %1757 = vmatpush1.msra.mxu0 0.0
          %1758 = vmatprep.subr.mxu0 0.0
          %1759 = vmatpush1.msra.mxu0 0.0
          %1760 = vmatprep.subr.mxu0 0.0
          %1761 = vmatpush1.msra.mxu0 0.0
          %1762 = vmatprep.subr.mxu0 0.0
          %1763 = vmatpush1.msra.mxu0 0.0
          %1764 = vmatprep.subr.mxu0 0.0
          %1765 = vmatpush1.msra.mxu0 0.0
          %1766 = vmatprep.subr.mxu0 0.0
          %1767 = vmatpush1.msra.mxu0 0.0
          %1768 = vmatprep.subr.mxu0 0.0
          %1769 = vmatpush1.msra.mxu0 0.0
          %1770 = vmatprep.subr.mxu0 0.0
          %1771 = vmatpush1.msra.mxu0 0.0
          %1772 = vmatprep.subr.mxu0 0.0
          %1773 = vmatpush1.msra.mxu0 0.0
          %1774 = vmatprep.subr.mxu0 0.0
          %1775 = vmatpush1.msra.mxu0 0.0
          %1776 = vmatprep.subr.mxu0 0.0
          %1777 = vmatpush1.msra.mxu0 0.0
          %1778 = vmatprep.subr.mxu0 0.0
          %1779 = vmatpush1.msra.mxu0 0.0
          %1780 = vmatprep.subr.mxu0 0.0
          %1781 = vmatpush1.msra.mxu0 0.0
          %1782 = vmatprep.subr.mxu0 0.0
          %1783 = vmatpush1.msra.mxu0 0.0
          %1784 = vmatprep.subr.mxu0 0.0
          %1785 = vmatpush1.msra.mxu0 0.0
          %1786 = vmatprep.subr.mxu0 0.0
          %1787 = vmatpush1.msra.mxu0 0.0
          %1788 = vmatprep.subr.mxu0 0.0
          %1789 = vmatpush1.msra.mxu0 0.0
          %1790 = vmatprep.subr.mxu0 0.0
          %1791 = vmatpush1.msra.mxu0 0.0
          %1792 = vmatprep.mubr.f32.mxu0 0.0
          %1793 = vmatmul.mubr.f32.gmra.mrb[0].mxu0 %v844
          %v1794 = vpop.f32.mrb[0].mxu0
          %v1795 = vadd.f32 0.0, %v1794
          %v1796 = vpop.f32.mrb[0].mxu0
          %v1797 = vadd.f32 0.0, %v1796
          %1798 = vmatprep.mubr.f32.mxu0 0.0
          %1799 = vmatmul.mubr.f32.gmra.mrb[0].mxu0 %v847
          %v1800 = vpop.f32.mrb[0].mxu0
          %v1801 = vadd.f32 0.0, %v1800
          %v1802 = vpop.f32.mrb[0].mxu0
          %v1803 = vadd.f32 0.0, %v1802
          %1804 = vdwg.mxu0
          %vm1805 = vcmp.gt.f32.partialorder %v916, 0.0
          %vm1806 = vcmp.gt.f32.partialorder %v918, 0.0
          %vm1807 = vcmp.gt.f32.partialorder %v993, 0.0
          %vm1808 = vcmp.gt.f32.partialorder %v995, 0.0
          %vm1809 = vcmp.gt.f32.partialorder %v1070, 0.0
          %vm1810 = vcmp.gt.f32.partialorder %v1072, 0.0
          %vm1811 = vcmp.gt.f32.partialorder %v1147, 0.0
          %vm1812 = vcmp.gt.f32.partialorder %v1149, 0.0
          %vm1813 = vcmp.gt.f32.partialorder %v922, 0.0
          %vm1814 = vcmp.gt.f32.partialorder %v924, 0.0
          %vm1815 = vcmp.gt.f32.partialorder %v999, 0.0
          %vm1816 = vcmp.gt.f32.partialorder %v1001, 0.0
          %vm1817 = vcmp.gt.f32.partialorder %v1076, 0.0
          %vm1818 = vcmp.gt.f32.partialorder %v1078, 0.0
          %vm1819 = vcmp.gt.f32.partialorder %v1153, 0.0
          %vm1820 = vcmp.gt.f32.partialorder %v1155, 0.0
          %v1821 = vmul.f32 %v916, 0.2
          %v1822 = vmul.f32 %v918, 0.2
          %v1823 = vmul.f32 %v993, 0.2
          %v1824 = vmul.f32 %v995, 0.2
          %v1825 = vmul.f32 %v1070, 0.2
          %v1826 = vmul.f32 %v1072, 0.2
          %v1827 = vmul.f32 %v1147, 0.2
          %v1828 = vmul.f32 %v1149, 0.2
          %v1829 = vmul.f32 %v922, 0.2
          %v1830 = vmul.f32 %v924, 0.2
          %v1831 = vmul.f32 %v999, 0.2
          %v1832 = vmul.f32 %v1001, 0.2
          %v1833 = vmul.f32 %v1076, 0.2
          %v1834 = vmul.f32 %v1078, 0.2
          %v1835 = vmul.f32 %v1153, 0.2
          %v1836 = vmul.f32 %v1155, 0.2
          %v1837 = vsel %vm1805, %v916, %v1821
          %v1838 = vsel %vm1806, %v918, %v1822
          %v1839 = vsel %vm1807, %v993, %v1823
          %v1840 = vsel %vm1808, %v995, %v1824
          %v1841 = vsel %vm1809, %v1070, %v1825
          %v1842 = vsel %vm1810, %v1072, %v1826
          %v1843 = vsel %vm1811, %v1147, %v1827
          %v1844 = vsel %vm1812, %v1149, %v1828
          %v1845 = vsel %vm1813, %v922, %v1829
          %v1846 = vsel %vm1814, %v924, %v1830
          %v1847 = vsel %vm1815, %v999, %v1831
          %v1848 = vsel %vm1816, %v1001, %v1832
          %v1849 = vsel %vm1817, %v1076, %v1833
          %v1850 = vsel %vm1818, %v1078, %v1834
          %v1851 = vsel %vm1819, %v1153, %v1835
          %v1852 = vsel %vm1820, %v1155, %v1836
          %vm1853 = vcmp.gt.f32.partialorder %v1564, 0.0
          %vm1854 = vcmp.gt.f32.partialorder %v1566, 0.0
          %vm1855 = vcmp.gt.f32.partialorder %v1641, 0.0
          %vm1856 = vcmp.gt.f32.partialorder %v1643, 0.0
          %vm1857 = vcmp.gt.f32.partialorder %v1718, 0.0
          %vm1858 = vcmp.gt.f32.partialorder %v1720, 0.0
          %vm1859 = vcmp.gt.f32.partialorder %v1795, 0.0
          %vm1860 = vcmp.gt.f32.partialorder %v1797, 0.0
          %vm1861 = vcmp.gt.f32.partialorder %v1570, 0.0
          %vm1862 = vcmp.gt.f32.partialorder %v1572, 0.0
          %vm1863 = vcmp.gt.f32.partialorder %v1647, 0.0
          %vm1864 = vcmp.gt.f32.partialorder %v1649, 0.0
          %vm1865 = vcmp.gt.f32.partialorder %v1724, 0.0
          %vm1866 = vcmp.gt.f32.partialorder %v1726, 0.0
          %vm1867 = vcmp.gt.f32.partialorder %v1801, 0.0
          %vm1868 = vcmp.gt.f32.partialorder %v1803, 0.0
          %v1869 = vmul.f32 %v1564, 0.2
          %v1870 = vmul.f32 %v1566, 0.2
          %v1871 = vmul.f32 %v1641, 0.2
          %v1872 = vmul.f32 %v1643, 0.2
          %v1873 = vmul.f32 %v1718, 0.2
          %v1874 = vmul.f32 %v1720, 0.2
          %v1875 = vmul.f32 %v1795, 0.2
          %v1876 = vmul.f32 %v1797, 0.2
          %v1877 = vmul.f32 %v1570, 0.2
          %v1878 = vmul.f32 %v1572, 0.2
          %v1879 = vmul.f32 %v1647, 0.2
          %v1880 = vmul.f32 %v1649, 0.2
          %v1881 = vmul.f32 %v1724, 0.2
          %v1882 = vmul.f32 %v1726, 0.2
          %v1883 = vmul.f32 %v1801, 0.2
          %v1884 = vmul.f32 %v1803, 0.2
          %v1885 = vsel %vm1853, %v1564, %v1869
          %v1886 = vsel %vm1854, %v1566, %v1870
          %v1887 = vsel %vm1855, %v1641, %v1871
          %v1888 = vsel %vm1856, %v1643, %v1872
          %v1889 = vsel %vm1857, %v1718, %v1873
          %v1890 = vsel %vm1858, %v1720, %v1874
          %v1891 = vsel %vm1859, %v1795, %v1875
          %v1892 = vsel %vm1860, %v1797, %v1876
          %v1893 = vsel %vm1861, %v1570, %v1877
          %v1894 = vsel %vm1862, %v1572, %v1878
          %v1895 = vsel %vm1863, %v1647, %v1879
          %v1896 = vsel %vm1864, %v1649, %v1880
          %v1897 = vsel %vm1865, %v1724, %v1881
          %v1898 = vsel %vm1866, %v1726, %v1882
          %v1899 = vsel %vm1867, %v1801, %v1883
          %v1900 = vsel %vm1868, %v1803, %v1884
          %v1901 = vpack.c.bf16 %v1845, %v1837
          %v1902 = vpack.c.bf16 %v1846, %v1838
          %v1903 = vpack.c.bf16 %v1847, %v1839
          %v1904 = vpack.c.bf16 %v1848, %v1840
          %v1905 = vpack.c.bf16 %v1849, %v1841
          %v1906 = vpack.c.bf16 %v1850, %v1842
          %v1907 = vpack.c.bf16 %v1851, %v1843
          %v1908 = vpack.c.bf16 %v1852, %v1844
          %1909 = vst [vmem:[#allocation3] sm:$0xff] %v1901
          %1910 = vst [vmem:[#allocation3 + $0x8] sm:$0xff] %v1902
          %1911 = vst [vmem:[#allocation3 + $0x10] sm:$0xff] %v1903
          %1912 = vst [vmem:[#allocation3 + $0x18] sm:$0xff] %v1904
          %1913 = vst [vmem:[#allocation3 + $0x20] sm:$0xff] %v1905
          %1914 = vst [vmem:[#allocation3 + $0x28] sm:$0xff] %v1906
          %1915 = vst [vmem:[#allocation3 + $0x30] sm:$0xff] %v1907
          %1916 = vst [vmem:[#allocation3 + $0x38] sm:$0xff] %v1908
          %v1917 = vpack.c.bf16 %v1893, %v1885
          %v1918 = vpack.c.bf16 %v1894, %v1886
          %v1919 = vpack.c.bf16 %v1895, %v1887
          %v1920 = vpack.c.bf16 %v1896, %v1888
          %v1921 = vpack.c.bf16 %v1897, %v1889
          %v1922 = vpack.c.bf16 %v1898, %v1890
          %v1923 = vpack.c.bf16 %v1899, %v1891
          %v1924 = vpack.c.bf16 %v1900, %v1892
          %1925 = vst [vmem:[#allocation4] sm:$0xff] %v1917
          %1926 = vst [vmem:[#allocation4 + $0x8] sm:$0xff] %v1918
          %1927 = vst [vmem:[#allocation4 + $0x10] sm:$0xff] %v1919
          %1928 = vst [vmem:[#allocation4 + $0x18] sm:$0xff] %v1920
          %1929 = vst [vmem:[#allocation4 + $0x20] sm:$0xff] %v1921
          %1930 = vst [vmem:[#allocation4 + $0x28] sm:$0xff] %v1922
          %1931 = vst [vmem:[#allocation4 + $0x30] sm:$0xff] %v1923
          %1932 = vst [vmem:[#allocation4 + $0x38] sm:$0xff] %v1924
        $region72: #{tpu_custom_call.1} parent=43 // pred_fallthru
          _
        %v1933 = vld [vmem:[#allocation3] sm:$0xff]
        %v1934 = vld [vmem:[#allocation3 + $0x8] sm:$0xff]
        %v1935 = vld [vmem:[#allocation3 + $0x10] sm:$0xff]
        %v1936 = vld [vmem:[#allocation3 + $0x18] sm:$0xff]
        %v1937 = vld [vmem:[#allocation3 + $0x20] sm:$0xff]
        %v1938 = vld [vmem:[#allocation3 + $0x28] sm:$0xff]
        %v1939 = vld [vmem:[#allocation3 + $0x30] sm:$0xff]
        %v1940 = vld [vmem:[#allocation3 + $0x38] sm:$0xff]
        %v1941 = vld [vmem:[%s351] sm:$0xff]
        %v1942 = vld [vmem:[%s351 + $0x8] sm:$0xff]
        %v1943 = vld [vmem:[%s351 + $0x10] sm:$0xff]
        %v1944 = vld [vmem:[%s351 + $0x18] sm:$0xff]
        %v1945 = vld [vmem:[%s351 + $0x20] sm:$0xff]
        %v1946 = vld [vmem:[%s351 + $0x28] sm:$0xff]
        %v1947 = vld [vmem:[%s351 + $0x30] sm:$0xff]
        %v1948 = vld [vmem:[%s351 + $0x38] sm:$0xff]
        %v1949 = vld [vmem:[%s351 + $0x40] sm:$0xff]
        %v1950 = vld [vmem:[%s351 + $0x48] sm:$0xff]
        %v1951 = vld [vmem:[%s351 + $0x50] sm:$0xff]
        %v1952 = vld [vmem:[%s351 + $0x58] sm:$0xff]
        %v1953 = vld [vmem:[%s351 + $0x60] sm:$0xff]
        %v1954 = vld [vmem:[%s351 + $0x68] sm:$0xff]
        %v1955 = vld [vmem:[%s351 + $0x70] sm:$0xff]
        %v1956 = vld [vmem:[%s351 + $0x78] sm:$0xff]
        %v1957 = vld [vmem:[%s351 + $0x80] sm:$0xff]
        %v1958 = vld [vmem:[%s351 + $0x88] sm:$0xff]
        %v1959 = vld [vmem:[%s351 + $0x90] sm:$0xff]
        %v1960 = vld [vmem:[%s351 + $0x98] sm:$0xff]
        %v1961 = vld [vmem:[%s351 + $0xa0] sm:$0xff]
        %v1962 = vld [vmem:[%s351 + $0xa8] sm:$0xff]
        %v1963 = vld [vmem:[%s351 + $0xb0] sm:$0xff]
        %v1964 = vld [vmem:[%s351 + $0xb8] sm:$0xff]
        %v1965 = vld [vmem:[%s351 + $0xc0] sm:$0xff]
        %v1966 = vld [vmem:[%s351 + $0xc8] sm:$0xff]
        %v1967 = vld [vmem:[%s351 + $0xd0] sm:$0xff]
        %v1968 = vld [vmem:[%s351 + $0xd8] sm:$0xff]
        %v1969 = vld [vmem:[%s351 + $0xe0] sm:$0xff]
        %v1970 = vld [vmem:[%s351 + $0xe8] sm:$0xff]
        %v1971 = vld [vmem:[%s351 + $0xf0] sm:$0xff]
        %v1972 = vld [vmem:[%s351 + $0xf8] sm:$0xff]
        %v1973 = vld [vmem:[%s351 + $0x100] sm:$0xff]
        %v1974 = vld [vmem:[%s351 + $0x108] sm:$0xff]
        %v1975 = vld [vmem:[%s351 + $0x110] sm:$0xff]
        %v1976 = vld [vmem:[%s351 + $0x118] sm:$0xff]
        %v1977 = vld [vmem:[%s351 + $0x120] sm:$0xff]
        %v1978 = vld [vmem:[%s351 + $0x128] sm:$0xff]
        %v1979 = vld [vmem:[%s351 + $0x130] sm:$0xff]
        %v1980 = vld [vmem:[%s351 + $0x138] sm:$0xff]
        %v1981 = vld [vmem:[%s351 + $0x140] sm:$0xff]
        %v1982 = vld [vmem:[%s351 + $0x148] sm:$0xff]
        %v1983 = vld [vmem:[%s351 + $0x150] sm:$0xff]
        %v1984 = vld [vmem:[%s351 + $0x158] sm:$0xff]
        %v1985 = vld [vmem:[%s351 + $0x160] sm:$0xff]
        %v1986 = vld [vmem:[%s351 + $0x168] sm:$0xff]
        %v1987 = vld [vmem:[%s351 + $0x170] sm:$0xff]
        %v1988 = vld [vmem:[%s351 + $0x178] sm:$0xff]
        %v1989 = vld [vmem:[%s351 + $0x180] sm:$0xff]
        %v1990 = vld [vmem:[%s351 + $0x188] sm:$0xff]
        %v1991 = vld [vmem:[%s351 + $0x190] sm:$0xff]
        %v1992 = vld [vmem:[%s351 + $0x198] sm:$0xff]
        %v1993 = vld [vmem:[%s351 + $0x1a0] sm:$0xff]
        %v1994 = vld [vmem:[%s351 + $0x1a8] sm:$0xff]
        %v1995 = vld [vmem:[%s351 + $0x1b0] sm:$0xff]
        %v1996 = vld [vmem:[%s351 + $0x1b8] sm:$0xff]
        %v1997 = vld [vmem:[%s351 + $0x1c0] sm:$0xff]
        %v1998 = vld [vmem:[%s351 + $0x1c8] sm:$0xff]
        %v1999 = vld [vmem:[%s351 + $0x1d0] sm:$0xff]
        %v2000 = vld [vmem:[%s351 + $0x1d8] sm:$0xff]
        %v2001 = vld [vmem:[%s351 + $0x1e0] sm:$0xff]
        %v2002 = vld [vmem:[%s351 + $0x1e8] sm:$0xff]
        %v2003 = vld [vmem:[%s351 + $0x1f0] sm:$0xff]
        %v2004 = vld [vmem:[%s351 + $0x1f8] sm:$0xff]
        %v2005 = vld [vmem:[%s351 + $0x200] sm:$0xff]
        %v2006 = vld [vmem:[%s351 + $0x208] sm:$0xff]
        %v2007 = vld [vmem:[%s351 + $0x210] sm:$0xff]
        %v2008 = vld [vmem:[%s351 + $0x218] sm:$0xff]
        %v2009 = vld [vmem:[%s351 + $0x220] sm:$0xff]
        %v2010 = vld [vmem:[%s351 + $0x228] sm:$0xff]
        %v2011 = vld [vmem:[%s351 + $0x230] sm:$0xff]
        %v2012 = vld [vmem:[%s351 + $0x238] sm:$0xff]
        %v2013 = vld [vmem:[%s351 + $0x240] sm:$0xff]
        %v2014 = vld [vmem:[%s351 + $0x248] sm:$0xff]
        %v2015 = vld [vmem:[%s351 + $0x250] sm:$0xff]
        %v2016 = vld [vmem:[%s351 + $0x258] sm:$0xff]
        %v2017 = vld [vmem:[%s351 + $0x260] sm:$0xff]
        %v2018 = vld [vmem:[%s351 + $0x268] sm:$0xff]
        %v2019 = vld [vmem:[%s351 + $0x270] sm:$0xff]
        %v2020 = vld [vmem:[%s351 + $0x278] sm:$0xff]
        %v2021 = vld [vmem:[%s351 + $0x280] sm:$0xff]
        %v2022 = vld [vmem:[%s351 + $0x288] sm:$0xff]
        %v2023 = vld [vmem:[%s351 + $0x290] sm:$0xff]
        %v2024 = vld [vmem:[%s351 + $0x298] sm:$0xff]
        %v2025 = vld [vmem:[%s351 + $0x2a0] sm:$0xff]
        %v2026 = vld [vmem:[%s351 + $0x2a8] sm:$0xff]
        %v2027 = vld [vmem:[%s351 + $0x2b0] sm:$0xff]
        %v2028 = vld [vmem:[%s351 + $0x2b8] sm:$0xff]
        %v2029 = vld [vmem:[%s351 + $0x2c0] sm:$0xff]
        %v2030 = vld [vmem:[%s351 + $0x2c8] sm:$0xff]
        %v2031 = vld [vmem:[%s351 + $0x2d0] sm:$0xff]
        %v2032 = vld [vmem:[%s351 + $0x2d8] sm:$0xff]
        %v2033 = vld [vmem:[%s351 + $0x2e0] sm:$0xff]
        %v2034 = vld [vmem:[%s351 + $0x2e8] sm:$0xff]
        %v2035 = vld [vmem:[%s351 + $0x2f0] sm:$0xff]
        %v2036 = vld [vmem:[%s351 + $0x2f8] sm:$0xff]
        %v2037 = vld [vmem:[%s351 + $0x300] sm:$0xff]
        %v2038 = vld [vmem:[%s351 + $0x308] sm:$0xff]
        %v2039 = vld [vmem:[%s351 + $0x310] sm:$0xff]
        %v2040 = vld [vmem:[%s351 + $0x318] sm:$0xff]
        %v2041 = vld [vmem:[%s351 + $0x320] sm:$0xff]
        %v2042 = vld [vmem:[%s351 + $0x328] sm:$0xff]
        %v2043 = vld [vmem:[%s351 + $0x330] sm:$0xff]
        %v2044 = vld [vmem:[%s351 + $0x338] sm:$0xff]
        %v2045 = vld [vmem:[%s351 + $0x340] sm:$0xff]
        %v2046 = vld [vmem:[%s351 + $0x348] sm:$0xff]
        %v2047 = vld [vmem:[%s351 + $0x350] sm:$0xff]
        %v2048 = vld [vmem:[%s351 + $0x358] sm:$0xff]
        %v2049 = vld [vmem:[%s351 + $0x360] sm:$0xff]
        %v2050 = vld [vmem:[%s351 + $0x368] sm:$0xff]
        %v2051 = vld [vmem:[%s351 + $0x370] sm:$0xff]
        %v2052 = vld [vmem:[%s351 + $0x378] sm:$0xff]
        %v2053 = vld [vmem:[%s351 + $0x380] sm:$0xff]
        %v2054 = vld [vmem:[%s351 + $0x388] sm:$0xff]
        %v2055 = vld [vmem:[%s351 + $0x390] sm:$0xff]
        %v2056 = vld [vmem:[%s351 + $0x398] sm:$0xff]
        %v2057 = vld [vmem:[%s351 + $0x3a0] sm:$0xff]
        %v2058 = vld [vmem:[%s351 + $0x3a8] sm:$0xff]
        %v2059 = vld [vmem:[%s351 + $0x3b0] sm:$0xff]
        %v2060 = vld [vmem:[%s351 + $0x3b8] sm:$0xff]
        %v2061 = vld [vmem:[%s351 + $0x3c0] sm:$0xff]
        %v2062 = vld [vmem:[%s351 + $0x3c8] sm:$0xff]
        %v2063 = vld [vmem:[%s351 + $0x3d0] sm:$0xff]
        %v2064 = vld [vmem:[%s351 + $0x3d8] sm:$0xff]
        %v2065 = vld [vmem:[%s351 + $0x3e0] sm:$0xff]
        %v2066 = vld [vmem:[%s351 + $0x3e8] sm:$0xff]
        %v2067 = vld [vmem:[%s351 + $0x3f0] sm:$0xff]
        %v2068 = vld [vmem:[%s351 + $0x3f8] sm:$0xff]
        %v2069 = vld [vmem:[%s351 + $0x400] sm:$0xff]
        %v2070 = vld [vmem:[%s351 + $0x408] sm:$0xff]
        %v2071 = vld [vmem:[%s351 + $0x410] sm:$0xff]
        %v2072 = vld [vmem:[%s351 + $0x418] sm:$0xff]
        %v2073 = vld [vmem:[%s351 + $0x420] sm:$0xff]
        %v2074 = vld [vmem:[%s351 + $0x428] sm:$0xff]
        %v2075 = vld [vmem:[%s351 + $0x430] sm:$0xff]
        %v2076 = vld [vmem:[%s351 + $0x438] sm:$0xff]
        %v2077 = vld [vmem:[%s351 + $0x440] sm:$0xff]
        %v2078 = vld [vmem:[%s351 + $0x448] sm:$0xff]
        %v2079 = vld [vmem:[%s351 + $0x450] sm:$0xff]
        %v2080 = vld [vmem:[%s351 + $0x458] sm:$0xff]
        %v2081 = vld [vmem:[%s351 + $0x460] sm:$0xff]
        %v2082 = vld [vmem:[%s351 + $0x468] sm:$0xff]
        %v2083 = vld [vmem:[%s351 + $0x470] sm:$0xff]
        %v2084 = vld [vmem:[%s351 + $0x478] sm:$0xff]
        %v2085 = vld [vmem:[%s351 + $0x480] sm:$0xff]
        %v2086 = vld [vmem:[%s351 + $0x488] sm:$0xff]
        %v2087 = vld [vmem:[%s351 + $0x490] sm:$0xff]
        %v2088 = vld [vmem:[%s351 + $0x498] sm:$0xff]
        %v2089 = vld [vmem:[%s351 + $0x4a0] sm:$0xff]
        %v2090 = vld [vmem:[%s351 + $0x4a8] sm:$0xff]
        %v2091 = vld [vmem:[%s351 + $0x4b0] sm:$0xff]
        %v2092 = vld [vmem:[%s351 + $0x4b8] sm:$0xff]
        %v2093 = vld [vmem:[%s351 + $0x4c0] sm:$0xff]
        %v2094 = vld [vmem:[%s351 + $0x4c8] sm:$0xff]
        %v2095 = vld [vmem:[%s351 + $0x4d0] sm:$0xff]
        %v2096 = vld [vmem:[%s351 + $0x4d8] sm:$0xff]
        %v2097 = vld [vmem:[%s351 + $0x4e0] sm:$0xff]
        %v2098 = vld [vmem:[%s351 + $0x4e8] sm:$0xff]
        %v2099 = vld [vmem:[%s351 + $0x4f0] sm:$0xff]
        %v2100 = vld [vmem:[%s351 + $0x4f8] sm:$0xff]
        %v2101 = vld [vmem:[%s351 + $0x500] sm:$0xff]
        %v2102 = vld [vmem:[%s351 + $0x508] sm:$0xff]
        %v2103 = vld [vmem:[%s351 + $0x510] sm:$0xff]
        %v2104 = vld [vmem:[%s351 + $0x518] sm:$0xff]
        %v2105 = vld [vmem:[%s351 + $0x520] sm:$0xff]
        %v2106 = vld [vmem:[%s351 + $0x528] sm:$0xff]
        %v2107 = vld [vmem:[%s351 + $0x530] sm:$0xff]
        %v2108 = vld [vmem:[%s351 + $0x538] sm:$0xff]
        %v2109 = vld [vmem:[%s351 + $0x540] sm:$0xff]
        %v2110 = vld [vmem:[%s351 + $0x548] sm:$0xff]
        %v2111 = vld [vmem:[%s351 + $0x550] sm:$0xff]
        %v2112 = vld [vmem:[%s351 + $0x558] sm:$0xff]
        %v2113 = vld [vmem:[%s351 + $0x560] sm:$0xff]
        %v2114 = vld [vmem:[%s351 + $0x568] sm:$0xff]
        %v2115 = vld [vmem:[%s351 + $0x570] sm:$0xff]
        %v2116 = vld [vmem:[%s351 + $0x578] sm:$0xff]
        %v2117 = vld [vmem:[%s351 + $0x580] sm:$0xff]
        %v2118 = vld [vmem:[%s351 + $0x588] sm:$0xff]
        %v2119 = vld [vmem:[%s351 + $0x590] sm:$0xff]
        %v2120 = vld [vmem:[%s351 + $0x598] sm:$0xff]
        %v2121 = vld [vmem:[%s351 + $0x5a0] sm:$0xff]
        %v2122 = vld [vmem:[%s351 + $0x5a8] sm:$0xff]
        %v2123 = vld [vmem:[%s351 + $0x5b0] sm:$0xff]
        %v2124 = vld [vmem:[%s351 + $0x5b8] sm:$0xff]
        %v2125 = vld [vmem:[%s351 + $0x5c0] sm:$0xff]
        %v2126 = vld [vmem:[%s351 + $0x5c8] sm:$0xff]
        %v2127 = vld [vmem:[%s351 + $0x5d0] sm:$0xff]
        %v2128 = vld [vmem:[%s351 + $0x5d8] sm:$0xff]
        %v2129 = vld [vmem:[%s351 + $0x5e0] sm:$0xff]
        %v2130 = vld [vmem:[%s351 + $0x5e8] sm:$0xff]
        %v2131 = vld [vmem:[%s351 + $0x5f0] sm:$0xff]
        %v2132 = vld [vmem:[%s351 + $0x5f8] sm:$0xff]
        %v2133 = vld [vmem:[%s351 + $0x600] sm:$0xff]
        %v2134 = vld [vmem:[%s351 + $0x608] sm:$0xff]
        %v2135 = vld [vmem:[%s351 + $0x610] sm:$0xff]
        %v2136 = vld [vmem:[%s351 + $0x618] sm:$0xff]
        %v2137 = vld [vmem:[%s351 + $0x620] sm:$0xff]
        %v2138 = vld [vmem:[%s351 + $0x628] sm:$0xff]
        %v2139 = vld [vmem:[%s351 + $0x630] sm:$0xff]
        %v2140 = vld [vmem:[%s351 + $0x638] sm:$0xff]
        %v2141 = vld [vmem:[%s351 + $0x640] sm:$0xff]
        %v2142 = vld [vmem:[%s351 + $0x648] sm:$0xff]
        %v2143 = vld [vmem:[%s351 + $0x650] sm:$0xff]
        %v2144 = vld [vmem:[%s351 + $0x658] sm:$0xff]
        %v2145 = vld [vmem:[%s351 + $0x660] sm:$0xff]
        %v2146 = vld [vmem:[%s351 + $0x668] sm:$0xff]
        %v2147 = vld [vmem:[%s351 + $0x670] sm:$0xff]
        %v2148 = vld [vmem:[%s351 + $0x678] sm:$0xff]
        %v2149 = vld [vmem:[%s351 + $0x680] sm:$0xff]
        %v2150 = vld [vmem:[%s351 + $0x688] sm:$0xff]
        %v2151 = vld [vmem:[%s351 + $0x690] sm:$0xff]
        %v2152 = vld [vmem:[%s351 + $0x698] sm:$0xff]
        %v2153 = vld [vmem:[%s351 + $0x6a0] sm:$0xff]
        %v2154 = vld [vmem:[%s351 + $0x6a8] sm:$0xff]
        %v2155 = vld [vmem:[%s351 + $0x6b0] sm:$0xff]
        %v2156 = vld [vmem:[%s351 + $0x6b8] sm:$0xff]
        %v2157 = vld [vmem:[%s351 + $0x6c0] sm:$0xff]
        %v2158 = vld [vmem:[%s351 + $0x6c8] sm:$0xff]
        %v2159 = vld [vmem:[%s351 + $0x6d0] sm:$0xff]
        %v2160 = vld [vmem:[%s351 + $0x6d8] sm:$0xff]
        %v2161 = vld [vmem:[%s351 + $0x6e0] sm:$0xff]
        %v2162 = vld [vmem:[%s351 + $0x6e8] sm:$0xff]
        %v2163 = vld [vmem:[%s351 + $0x6f0] sm:$0xff]
        %v2164 = vld [vmem:[%s351 + $0x6f8] sm:$0xff]
        %v2165 = vld [vmem:[%s351 + $0x700] sm:$0xff]
        %v2166 = vld [vmem:[%s351 + $0x708] sm:$0xff]
        %v2167 = vld [vmem:[%s351 + $0x710] sm:$0xff]
        %v2168 = vld [vmem:[%s351 + $0x718] sm:$0xff]
        %v2169 = vld [vmem:[%s351 + $0x720] sm:$0xff]
        %v2170 = vld [vmem:[%s351 + $0x728] sm:$0xff]
        %v2171 = vld [vmem:[%s351 + $0x730] sm:$0xff]
        %v2172 = vld [vmem:[%s351 + $0x738] sm:$0xff]
        %v2173 = vld [vmem:[%s351 + $0x740] sm:$0xff]
        %v2174 = vld [vmem:[%s351 + $0x748] sm:$0xff]
        %v2175 = vld [vmem:[%s351 + $0x750] sm:$0xff]
        %v2176 = vld [vmem:[%s351 + $0x758] sm:$0xff]
        %v2177 = vld [vmem:[%s351 + $0x760] sm:$0xff]
        %v2178 = vld [vmem:[%s351 + $0x768] sm:$0xff]
        %v2179 = vld [vmem:[%s351 + $0x770] sm:$0xff]
        %v2180 = vld [vmem:[%s351 + $0x778] sm:$0xff]
        %v2181 = vld [vmem:[%s351 + $0x780] sm:$0xff]
        %v2182 = vld [vmem:[%s351 + $0x788] sm:$0xff]
        %v2183 = vld [vmem:[%s351 + $0x790] sm:$0xff]
        %v2184 = vld [vmem:[%s351 + $0x798] sm:$0xff]
        %v2185 = vld [vmem:[%s351 + $0x7a0] sm:$0xff]
        %v2186 = vld [vmem:[%s351 + $0x7a8] sm:$0xff]
        %v2187 = vld [vmem:[%s351 + $0x7b0] sm:$0xff]
        %v2188 = vld [vmem:[%s351 + $0x7b8] sm:$0xff]
        %v2189 = vld [vmem:[%s351 + $0x7c0] sm:$0xff]
        %v2190 = vld [vmem:[%s351 + $0x7c8] sm:$0xff]
        %v2191 = vld [vmem:[%s351 + $0x7d0] sm:$0xff]
        %v2192 = vld [vmem:[%s351 + $0x7d8] sm:$0xff]
        %v2193 = vld [vmem:[%s351 + $0x7e0] sm:$0xff]
        %v2194 = vld [vmem:[%s351 + $0x7e8] sm:$0xff]
        %v2195 = vld [vmem:[%s351 + $0x7f0] sm:$0xff]
        %v2196 = vld [vmem:[%s351 + $0x7f8] sm:$0xff]
        %v2453 = vunpack.c.l.b16 %v1941
        %v2454 = vunpack.c.h.b16 %v1941
        %v2455 = vunpack.c.l.b16 %v1942
        %v2456 = vunpack.c.h.b16 %v1942
        %v2457 = vunpack.c.l.b16 %v1943
        %v2458 = vunpack.c.h.b16 %v1943
        %v2459 = vunpack.c.l.b16 %v1944
        %v2460 = vunpack.c.h.b16 %v1944
        %v2461 = vunpack.c.l.b16 %v1945
        %v2462 = vunpack.c.h.b16 %v1945
        %v2463 = vunpack.c.l.b16 %v1946
        %v2464 = vunpack.c.h.b16 %v1946
        %v2465 = vunpack.c.l.b16 %v1947
        %v2466 = vunpack.c.h.b16 %v1947
        %v2467 = vunpack.c.l.b16 %v1948
        %v2468 = vunpack.c.h.b16 %v1948
        %v2469 = vunpack.c.l.b16 %v1949
        %v2470 = vunpack.c.h.b16 %v1949
        %v2471 = vunpack.c.l.b16 %v1950
        %v2472 = vunpack.c.h.b16 %v1950
        %v2473 = vunpack.c.l.b16 %v1951
        %v2474 = vunpack.c.h.b16 %v1951
        %v2475 = vunpack.c.l.b16 %v1952
        %v2476 = vunpack.c.h.b16 %v1952
        %v2477 = vunpack.c.l.b16 %v1953
        %v2478 = vunpack.c.h.b16 %v1953
        %v2479 = vunpack.c.l.b16 %v1954
        %v2480 = vunpack.c.h.b16 %v1954
        %v2481 = vunpack.c.l.b16 %v1955
        %v2482 = vunpack.c.h.b16 %v1955
        %v2483 = vunpack.c.l.b16 %v1956
        %v2484 = vunpack.c.h.b16 %v1956
        %v2485 = vunpack.c.l.b16 %v1957
        %v2486 = vunpack.c.h.b16 %v1957
        %v2487 = vunpack.c.l.b16 %v1958
        %v2488 = vunpack.c.h.b16 %v1958
        %v2489 = vunpack.c.l.b16 %v1959
        %v2490 = vunpack.c.h.b16 %v1959
        %v2491 = vunpack.c.l.b16 %v1960
        %v2492 = vunpack.c.h.b16 %v1960
        %v2493 = vunpack.c.l.b16 %v1961
        %v2494 = vunpack.c.h.b16 %v1961
        %v2495 = vunpack.c.l.b16 %v1962
        %v2496 = vunpack.c.h.b16 %v1962
        %v2497 = vunpack.c.l.b16 %v1963
        %v2498 = vunpack.c.h.b16 %v1963
        %v2499 = vunpack.c.l.b16 %v1964
        %v2500 = vunpack.c.h.b16 %v1964
        %v2501 = vunpack.c.l.b16 %v1965
        %v2502 = vunpack.c.h.b16 %v1965
        %v2503 = vunpack.c.l.b16 %v1966
        %v2504 = vunpack.c.h.b16 %v1966
        %v2505 = vunpack.c.l.b16 %v1967
        %v2506 = vunpack.c.h.b16 %v1967
        %v2507 = vunpack.c.l.b16 %v1968
        %v2508 = vunpack.c.h.b16 %v1968
        %v2509 = vunpack.c.l.b16 %v1969
        %v2510 = vunpack.c.h.b16 %v1969
        %v2511 = vunpack.c.l.b16 %v1970
        %v2512 = vunpack.c.h.b16 %v1970
        %v2513 = vunpack.c.l.b16 %v1971
        %v2514 = vunpack.c.h.b16 %v1971
        %v2515 = vunpack.c.l.b16 %v1972
        %v2516 = vunpack.c.h.b16 %v1972
        %v2517 = vunpack.c.l.b16 %v1973
        %v2518 = vunpack.c.h.b16 %v1973
        %v2519 = vunpack.c.l.b16 %v1974
        %v2520 = vunpack.c.h.b16 %v1974
        %v2521 = vunpack.c.l.b16 %v1975
        %v2522 = vunpack.c.h.b16 %v1975
        %v2523 = vunpack.c.l.b16 %v1976
        %v2524 = vunpack.c.h.b16 %v1976
        %v2525 = vunpack.c.l.b16 %v1977
        %v2526 = vunpack.c.h.b16 %v1977
        %v2527 = vunpack.c.l.b16 %v1978
        %v2528 = vunpack.c.h.b16 %v1978
        %v2529 = vunpack.c.l.b16 %v1979
        %v2530 = vunpack.c.h.b16 %v1979
        %v2531 = vunpack.c.l.b16 %v1980
        %v2532 = vunpack.c.h.b16 %v1980
        %v2533 = vunpack.c.l.b16 %v1981
        %v2534 = vunpack.c.h.b16 %v1981
        %v2535 = vunpack.c.l.b16 %v1982
        %v2536 = vunpack.c.h.b16 %v1982
        %v2537 = vunpack.c.l.b16 %v1983
        %v2538 = vunpack.c.h.b16 %v1983
        %v2539 = vunpack.c.l.b16 %v1984
        %v2540 = vunpack.c.h.b16 %v1984
        %v2541 = vunpack.c.l.b16 %v1985
        %v2542 = vunpack.c.h.b16 %v1985
        %v2543 = vunpack.c.l.b16 %v1986
        %v2544 = vunpack.c.h.b16 %v1986
        %v2545 = vunpack.c.l.b16 %v1987
        %v2546 = vunpack.c.h.b16 %v1987
        %v2547 = vunpack.c.l.b16 %v1988
        %v2548 = vunpack.c.h.b16 %v1988
        %v2549 = vunpack.c.l.b16 %v1989
        %v2550 = vunpack.c.h.b16 %v1989
        %v2551 = vunpack.c.l.b16 %v1990
        %v2552 = vunpack.c.h.b16 %v1990
        %v2553 = vunpack.c.l.b16 %v1991
        %v2554 = vunpack.c.h.b16 %v1991
        %v2555 = vunpack.c.l.b16 %v1992
        %v2556 = vunpack.c.h.b16 %v1992
        %v2557 = vunpack.c.l.b16 %v1993
        %v2558 = vunpack.c.h.b16 %v1993
        %v2559 = vunpack.c.l.b16 %v1994
        %v2560 = vunpack.c.h.b16 %v1994
        %v2561 = vunpack.c.l.b16 %v1995
        %v2562 = vunpack.c.h.b16 %v1995
        %v2563 = vunpack.c.l.b16 %v1996
        %v2564 = vunpack.c.h.b16 %v1996
        %v2565 = vunpack.c.l.b16 %v1997
        %v2566 = vunpack.c.h.b16 %v1997
        %v2567 = vunpack.c.l.b16 %v1998
        %v2568 = vunpack.c.h.b16 %v1998
        %v2569 = vunpack.c.l.b16 %v1999
        %v2570 = vunpack.c.h.b16 %v1999
        %v2571 = vunpack.c.l.b16 %v2000
        %v2572 = vunpack.c.h.b16 %v2000
        %v2573 = vunpack.c.l.b16 %v2001
        %v2574 = vunpack.c.h.b16 %v2001
        %v2575 = vunpack.c.l.b16 %v2002
        %v2576 = vunpack.c.h.b16 %v2002
        %v2577 = vunpack.c.l.b16 %v2003
        %v2578 = vunpack.c.h.b16 %v2003
        %v2579 = vunpack.c.l.b16 %v2004
        %v2580 = vunpack.c.h.b16 %v2004
        %v2581 = vunpack.c.l.b16 %v2005
        %v2582 = vunpack.c.h.b16 %v2005
        %v2583 = vunpack.c.l.b16 %v2006
        %v2584 = vunpack.c.h.b16 %v2006
        %v2585 = vunpack.c.l.b16 %v2007
        %v2586 = vunpack.c.h.b16 %v2007
        %v2587 = vunpack.c.l.b16 %v2008
        %v2588 = vunpack.c.h.b16 %v2008
        %v2589 = vunpack.c.l.b16 %v2009
        %v2590 = vunpack.c.h.b16 %v2009
        %v2591 = vunpack.c.l.b16 %v2010
        %v2592 = vunpack.c.h.b16 %v2010
        %v2593 = vunpack.c.l.b16 %v2011
        %v2594 = vunpack.c.h.b16 %v2011
        %v2595 = vunpack.c.l.b16 %v2012
        %v2596 = vunpack.c.h.b16 %v2012
        %v2597 = vunpack.c.l.b16 %v2013
        %v2598 = vunpack.c.h.b16 %v2013
        %v2599 = vunpack.c.l.b16 %v2014
        %v2600 = vunpack.c.h.b16 %v2014
        %v2601 = vunpack.c.l.b16 %v2015
        %v2602 = vunpack.c.h.b16 %v2015
        %v2603 = vunpack.c.l.b16 %v2016
        %v2604 = vunpack.c.h.b16 %v2016
        %v2605 = vunpack.c.l.b16 %v2017
        %v2606 = vunpack.c.h.b16 %v2017
        %v2607 = vunpack.c.l.b16 %v2018
        %v2608 = vunpack.c.h.b16 %v2018
        %v2609 = vunpack.c.l.b16 %v2019
        %v2610 = vunpack.c.h.b16 %v2019
        %v2611 = vunpack.c.l.b16 %v2020
        %v2612 = vunpack.c.h.b16 %v2020
        %v2613 = vunpack.c.l.b16 %v2021
        %v2614 = vunpack.c.h.b16 %v2021
        %v2615 = vunpack.c.l.b16 %v2022
        %v2616 = vunpack.c.h.b16 %v2022
        %v2617 = vunpack.c.l.b16 %v2023
        %v2618 = vunpack.c.h.b16 %v2023
        %v2619 = vunpack.c.l.b16 %v2024
        %v2620 = vunpack.c.h.b16 %v2024
        %v2621 = vunpack.c.l.b16 %v2025
        %v2622 = vunpack.c.h.b16 %v2025
        %v2623 = vunpack.c.l.b16 %v2026
        %v2624 = vunpack.c.h.b16 %v2026
        %v2625 = vunpack.c.l.b16 %v2027
        %v2626 = vunpack.c.h.b16 %v2027
        %v2627 = vunpack.c.l.b16 %v2028
        %v2628 = vunpack.c.h.b16 %v2028
        %v2629 = vunpack.c.l.b16 %v2029
        %v2630 = vunpack.c.h.b16 %v2029
        %v2631 = vunpack.c.l.b16 %v2030
        %v2632 = vunpack.c.h.b16 %v2030
        %v2633 = vunpack.c.l.b16 %v2031
        %v2634 = vunpack.c.h.b16 %v2031
        %v2635 = vunpack.c.l.b16 %v2032
        %v2636 = vunpack.c.h.b16 %v2032
        %v2637 = vunpack.c.l.b16 %v2033
        %v2638 = vunpack.c.h.b16 %v2033
        %v2639 = vunpack.c.l.b16 %v2034
        %v2640 = vunpack.c.h.b16 %v2034
        %v2641 = vunpack.c.l.b16 %v2035
        %v2642 = vunpack.c.h.b16 %v2035
        %v2643 = vunpack.c.l.b16 %v2036
        %v2644 = vunpack.c.h.b16 %v2036
        %v2645 = vunpack.c.l.b16 %v2037
        %v2646 = vunpack.c.h.b16 %v2037
        %v2647 = vunpack.c.l.b16 %v2038
        %v2648 = vunpack.c.h.b16 %v2038
        %v2649 = vunpack.c.l.b16 %v2039
        %v2650 = vunpack.c.h.b16 %v2039
        %v2651 = vunpack.c.l.b16 %v2040
        %v2652 = vunpack.c.h.b16 %v2040
        %v2653 = vunpack.c.l.b16 %v2041
        %v2654 = vunpack.c.h.b16 %v2041
        %v2655 = vunpack.c.l.b16 %v2042
        %v2656 = vunpack.c.h.b16 %v2042
        %v2657 = vunpack.c.l.b16 %v2043
        %v2658 = vunpack.c.h.b16 %v2043
        %v2659 = vunpack.c.l.b16 %v2044
        %v2660 = vunpack.c.h.b16 %v2044
        %v2661 = vunpack.c.l.b16 %v2045
        %v2662 = vunpack.c.h.b16 %v2045
        %v2663 = vunpack.c.l.b16 %v2046
        %v2664 = vunpack.c.h.b16 %v2046
        %v2665 = vunpack.c.l.b16 %v2047
        %v2666 = vunpack.c.h.b16 %v2047
        %v2667 = vunpack.c.l.b16 %v2048
        %v2668 = vunpack.c.h.b16 %v2048
        %v2669 = vunpack.c.l.b16 %v2049
        %v2670 = vunpack.c.h.b16 %v2049
        %v2671 = vunpack.c.l.b16 %v2050
        %v2672 = vunpack.c.h.b16 %v2050
        %v2673 = vunpack.c.l.b16 %v2051
        %v2674 = vunpack.c.h.b16 %v2051
        %v2675 = vunpack.c.l.b16 %v2052
        %v2676 = vunpack.c.h.b16 %v2052
        %v2677 = vunpack.c.l.b16 %v2053
        %v2678 = vunpack.c.h.b16 %v2053
        %v2679 = vunpack.c.l.b16 %v2054
        %v2680 = vunpack.c.h.b16 %v2054
        %v2681 = vunpack.c.l.b16 %v2055
        %v2682 = vunpack.c.h.b16 %v2055
        %v2683 = vunpack.c.l.b16 %v2056
        %v2684 = vunpack.c.h.b16 %v2056
        %v2685 = vunpack.c.l.b16 %v2057
        %v2686 = vunpack.c.h.b16 %v2057
        %v2687 = vunpack.c.l.b16 %v2058
        %v2688 = vunpack.c.h.b16 %v2058
        %v2689 = vunpack.c.l.b16 %v2059
        %v2690 = vunpack.c.h.b16 %v2059
        %v2691 = vunpack.c.l.b16 %v2060
        %v2692 = vunpack.c.h.b16 %v2060
        %v2693 = vunpack.c.l.b16 %v2061
        %v2694 = vunpack.c.h.b16 %v2061
        %v2695 = vunpack.c.l.b16 %v2062
        %v2696 = vunpack.c.h.b16 %v2062
        %v2697 = vunpack.c.l.b16 %v2063
        %v2698 = vunpack.c.h.b16 %v2063
        %v2699 = vunpack.c.l.b16 %v2064
        %v2700 = vunpack.c.h.b16 %v2064
        %v2701 = vunpack.c.l.b16 %v2065
        %v2702 = vunpack.c.h.b16 %v2065
        %v2703 = vunpack.c.l.b16 %v2066
        %v2704 = vunpack.c.h.b16 %v2066
        %v2705 = vunpack.c.l.b16 %v2067
        %v2706 = vunpack.c.h.b16 %v2067
        %v2707 = vunpack.c.l.b16 %v2068
        %v2708 = vunpack.c.h.b16 %v2068
        %v2709 = vunpack.c.l.b16 %v2069
        %v2710 = vunpack.c.h.b16 %v2069
        %v2711 = vunpack.c.l.b16 %v2070
        %v2712 = vunpack.c.h.b16 %v2070
        %v2713 = vunpack.c.l.b16 %v2071
        %v2714 = vunpack.c.h.b16 %v2071
        %v2715 = vunpack.c.l.b16 %v2072
        %v2716 = vunpack.c.h.b16 %v2072
        %v2717 = vunpack.c.l.b16 %v2073
        %v2718 = vunpack.c.h.b16 %v2073
        %v2719 = vunpack.c.l.b16 %v2074
        %v2720 = vunpack.c.h.b16 %v2074
        %v2721 = vunpack.c.l.b16 %v2075
        %v2722 = vunpack.c.h.b16 %v2075
        %v2723 = vunpack.c.l.b16 %v2076
        %v2724 = vunpack.c.h.b16 %v2076
        %v2725 = vunpack.c.l.b16 %v2077
        %v2726 = vunpack.c.h.b16 %v2077
        %v2727 = vunpack.c.l.b16 %v2078
        %v2728 = vunpack.c.h.b16 %v2078
        %v2729 = vunpack.c.l.b16 %v2079
        %v2730 = vunpack.c.h.b16 %v2079
        %v2731 = vunpack.c.l.b16 %v2080
        %v2732 = vunpack.c.h.b16 %v2080
        %v2733 = vunpack.c.l.b16 %v2081
        %v2734 = vunpack.c.h.b16 %v2081
        %v2735 = vunpack.c.l.b16 %v2082
        %v2736 = vunpack.c.h.b16 %v2082
        %v2737 = vunpack.c.l.b16 %v2083
        %v2738 = vunpack.c.h.b16 %v2083
        %v2739 = vunpack.c.l.b16 %v2084
        %v2740 = vunpack.c.h.b16 %v2084
        %v2741 = vunpack.c.l.b16 %v2085
        %v2742 = vunpack.c.h.b16 %v2085
        %v2743 = vunpack.c.l.b16 %v2086
        %v2744 = vunpack.c.h.b16 %v2086
        %v2745 = vunpack.c.l.b16 %v2087
        %v2746 = vunpack.c.h.b16 %v2087
        %v2747 = vunpack.c.l.b16 %v2088
        %v2748 = vunpack.c.h.b16 %v2088
        %v2749 = vunpack.c.l.b16 %v2089
        %v2750 = vunpack.c.h.b16 %v2089
        %v2751 = vunpack.c.l.b16 %v2090
        %v2752 = vunpack.c.h.b16 %v2090
        %v2753 = vunpack.c.l.b16 %v2091
        %v2754 = vunpack.c.h.b16 %v2091
        %v2755 = vunpack.c.l.b16 %v2092
        %v2756 = vunpack.c.h.b16 %v2092
        %v2757 = vunpack.c.l.b16 %v2093
        %v2758 = vunpack.c.h.b16 %v2093
        %v2759 = vunpack.c.l.b16 %v2094
        %v2760 = vunpack.c.h.b16 %v2094
        %v2761 = vunpack.c.l.b16 %v2095
        %v2762 = vunpack.c.h.b16 %v2095
        %v2763 = vunpack.c.l.b16 %v2096
        %v2764 = vunpack.c.h.b16 %v2096
        %v2765 = vunpack.c.l.b16 %v2097
        %v2766 = vunpack.c.h.b16 %v2097
        %v2767 = vunpack.c.l.b16 %v2098
        %v2768 = vunpack.c.h.b16 %v2098
        %v2769 = vunpack.c.l.b16 %v2099
        %v2770 = vunpack.c.h.b16 %v2099
        %v2771 = vunpack.c.l.b16 %v2100
        %v2772 = vunpack.c.h.b16 %v2100
        %v2773 = vunpack.c.l.b16 %v2101
        %v2774 = vunpack.c.h.b16 %v2101
        %v2775 = vunpack.c.l.b16 %v2102
        %v2776 = vunpack.c.h.b16 %v2102
        %v2777 = vunpack.c.l.b16 %v2103
        %v2778 = vunpack.c.h.b16 %v2103
        %v2779 = vunpack.c.l.b16 %v2104
        %v2780 = vunpack.c.h.b16 %v2104
        %v2781 = vunpack.c.l.b16 %v2105
        %v2782 = vunpack.c.h.b16 %v2105
        %v2783 = vunpack.c.l.b16 %v2106
        %v2784 = vunpack.c.h.b16 %v2106
        %v2785 = vunpack.c.l.b16 %v2107
        %v2786 = vunpack.c.h.b16 %v2107
        %v2787 = vunpack.c.l.b16 %v2108
        %v2788 = vunpack.c.h.b16 %v2108
        %v2789 = vunpack.c.l.b16 %v2109
        %v2790 = vunpack.c.h.b16 %v2109
        %v2791 = vunpack.c.l.b16 %v2110
        %v2792 = vunpack.c.h.b16 %v2110
        %v2793 = vunpack.c.l.b16 %v2111
        %v2794 = vunpack.c.h.b16 %v2111
        %v2795 = vunpack.c.l.b16 %v2112
        %v2796 = vunpack.c.h.b16 %v2112
        %v2797 = vunpack.c.l.b16 %v2113
        %v2798 = vunpack.c.h.b16 %v2113
        %v2799 = vunpack.c.l.b16 %v2114
        %v2800 = vunpack.c.h.b16 %v2114
        %v2801 = vunpack.c.l.b16 %v2115
        %v2802 = vunpack.c.h.b16 %v2115
        %v2803 = vunpack.c.l.b16 %v2116
        %v2804 = vunpack.c.h.b16 %v2116
        %v2805 = vunpack.c.l.b16 %v2117
        %v2806 = vunpack.c.h.b16 %v2117
        %v2807 = vunpack.c.l.b16 %v2118
        %v2808 = vunpack.c.h.b16 %v2118
        %v2809 = vunpack.c.l.b16 %v2119
        %v2810 = vunpack.c.h.b16 %v2119
        %v2811 = vunpack.c.l.b16 %v2120
        %v2812 = vunpack.c.h.b16 %v2120
        %v2813 = vunpack.c.l.b16 %v2121
        %v2814 = vunpack.c.h.b16 %v2121
        %v2815 = vunpack.c.l.b16 %v2122
        %v2816 = vunpack.c.h.b16 %v2122
        %v2817 = vunpack.c.l.b16 %v2123
        %v2818 = vunpack.c.h.b16 %v2123
        %v2819 = vunpack.c.l.b16 %v2124
        %v2820 = vunpack.c.h.b16 %v2124
        %v2821 = vunpack.c.l.b16 %v2125
        %v2822 = vunpack.c.h.b16 %v2125
        %v2823 = vunpack.c.l.b16 %v2126
        %v2824 = vunpack.c.h.b16 %v2126
        %v2825 = vunpack.c.l.b16 %v2127
        %v2826 = vunpack.c.h.b16 %v2127
        %v2827 = vunpack.c.l.b16 %v2128
        %v2828 = vunpack.c.h.b16 %v2128
        %v2829 = vunpack.c.l.b16 %v2129
        %v2830 = vunpack.c.h.b16 %v2129
        %v2831 = vunpack.c.l.b16 %v2130
        %v2832 = vunpack.c.h.b16 %v2130
        %v2833 = vunpack.c.l.b16 %v2131
        %v2834 = vunpack.c.h.b16 %v2131
        %v2835 = vunpack.c.l.b16 %v2132
        %v2836 = vunpack.c.h.b16 %v2132
        %v2837 = vunpack.c.l.b16 %v2133
        %v2838 = vunpack.c.h.b16 %v2133
        %v2839 = vunpack.c.l.b16 %v2134
        %v2840 = vunpack.c.h.b16 %v2134
        %v2841 = vunpack.c.l.b16 %v2135
        %v2842 = vunpack.c.h.b16 %v2135
        %v2843 = vunpack.c.l.b16 %v2136
        %v2844 = vunpack.c.h.b16 %v2136
        %v2845 = vunpack.c.l.b16 %v2137
        %v2846 = vunpack.c.h.b16 %v2137
        %v2847 = vunpack.c.l.b16 %v2138
        %v2848 = vunpack.c.h.b16 %v2138
        %v2849 = vunpack.c.l.b16 %v2139
        %v2850 = vunpack.c.h.b16 %v2139
        %v2851 = vunpack.c.l.b16 %v2140
        %v2852 = vunpack.c.h.b16 %v2140
        %v2853 = vunpack.c.l.b16 %v2141
        %v2854 = vunpack.c.h.b16 %v2141
        %v2855 = vunpack.c.l.b16 %v2142
        %v2856 = vunpack.c.h.b16 %v2142
        %v2857 = vunpack.c.l.b16 %v2143
        %v2858 = vunpack.c.h.b16 %v2143
        %v2859 = vunpack.c.l.b16 %v2144
        %v2860 = vunpack.c.h.b16 %v2144
        %v2861 = vunpack.c.l.b16 %v2145
        %v2862 = vunpack.c.h.b16 %v2145
        %v2863 = vunpack.c.l.b16 %v2146
        %v2864 = vunpack.c.h.b16 %v2146
        %v2865 = vunpack.c.l.b16 %v2147
        %v2866 = vunpack.c.h.b16 %v2147
        %v2867 = vunpack.c.l.b16 %v2148
        %v2868 = vunpack.c.h.b16 %v2148
        %v2869 = vunpack.c.l.b16 %v2149
        %v2870 = vunpack.c.h.b16 %v2149
        %v2871 = vunpack.c.l.b16 %v2150
        %v2872 = vunpack.c.h.b16 %v2150
        %v2873 = vunpack.c.l.b16 %v2151
        %v2874 = vunpack.c.h.b16 %v2151
        %v2875 = vunpack.c.l.b16 %v2152
        %v2876 = vunpack.c.h.b16 %v2152
        %v2877 = vunpack.c.l.b16 %v2153
        %v2878 = vunpack.c.h.b16 %v2153
        %v2879 = vunpack.c.l.b16 %v2154
        %v2880 = vunpack.c.h.b16 %v2154
        %v2881 = vunpack.c.l.b16 %v2155
        %v2882 = vunpack.c.h.b16 %v2155
        %v2883 = vunpack.c.l.b16 %v2156
        %v2884 = vunpack.c.h.b16 %v2156
        %v2885 = vunpack.c.l.b16 %v2157
        %v2886 = vunpack.c.h.b16 %v2157
        %v2887 = vunpack.c.l.b16 %v2158
        %v2888 = vunpack.c.h.b16 %v2158
        %v2889 = vunpack.c.l.b16 %v2159
        %v2890 = vunpack.c.h.b16 %v2159
        %v2891 = vunpack.c.l.b16 %v2160
        %v2892 = vunpack.c.h.b16 %v2160
        %v2893 = vunpack.c.l.b16 %v2161
        %v2894 = vunpack.c.h.b16 %v2161
        %v2895 = vunpack.c.l.b16 %v2162
        %v2896 = vunpack.c.h.b16 %v2162
        %v2897 = vunpack.c.l.b16 %v2163
        %v2898 = vunpack.c.h.b16 %v2163
        %v2899 = vunpack.c.l.b16 %v2164
        %v2900 = vunpack.c.h.b16 %v2164
        %v2901 = vunpack.c.l.b16 %v2165
        %v2902 = vunpack.c.h.b16 %v2165
        %v2903 = vunpack.c.l.b16 %v2166
        %v2904 = vunpack.c.h.b16 %v2166
        %v2905 = vunpack.c.l.b16 %v2167
        %v2906 = vunpack.c.h.b16 %v2167
        %v2907 = vunpack.c.l.b16 %v2168
        %v2908 = vunpack.c.h.b16 %v2168
        %v2909 = vunpack.c.l.b16 %v2169
        %v2910 = vunpack.c.h.b16 %v2169
        %v2911 = vunpack.c.l.b16 %v2170
        %v2912 = vunpack.c.h.b16 %v2170
        %v2913 = vunpack.c.l.b16 %v2171
        %v2914 = vunpack.c.h.b16 %v2171
        %v2915 = vunpack.c.l.b16 %v2172
        %v2916 = vunpack.c.h.b16 %v2172
        %v2917 = vunpack.c.l.b16 %v2173
        %v2918 = vunpack.c.h.b16 %v2173
        %v2919 = vunpack.c.l.b16 %v2174
        %v2920 = vunpack.c.h.b16 %v2174
        %v2921 = vunpack.c.l.b16 %v2175
        %v2922 = vunpack.c.h.b16 %v2175
        %v2923 = vunpack.c.l.b16 %v2176
        %v2924 = vunpack.c.h.b16 %v2176
        %v2925 = vunpack.c.l.b16 %v2177
        %v2926 = vunpack.c.h.b16 %v2177
        %v2927 = vunpack.c.l.b16 %v2178
        %v2928 = vunpack.c.h.b16 %v2178
        %v2929 = vunpack.c.l.b16 %v2179
        %v2930 = vunpack.c.h.b16 %v2179
        %v2931 = vunpack.c.l.b16 %v2180
        %v2932 = vunpack.c.h.b16 %v2180
        %v2933 = vunpack.c.l.b16 %v2181
        %v2934 = vunpack.c.h.b16 %v2181
        %v2935 = vunpack.c.l.b16 %v2182
        %v2936 = vunpack.c.h.b16 %v2182
        %v2937 = vunpack.c.l.b16 %v2183
        %v2938 = vunpack.c.h.b16 %v2183
        %v2939 = vunpack.c.l.b16 %v2184
        %v2940 = vunpack.c.h.b16 %v2184
        %v2941 = vunpack.c.l.b16 %v2185
        %v2942 = vunpack.c.h.b16 %v2185
        %v2943 = vunpack.c.l.b16 %v2186
        %v2944 = vunpack.c.h.b16 %v2186
        %v2945 = vunpack.c.l.b16 %v2187
        %v2946 = vunpack.c.h.b16 %v2187
        %v2947 = vunpack.c.l.b16 %v2188
        %v2948 = vunpack.c.h.b16 %v2188
        %v2949 = vunpack.c.l.b16 %v2189
        %v2950 = vunpack.c.h.b16 %v2189
        %v2951 = vunpack.c.l.b16 %v2190
        %v2952 = vunpack.c.h.b16 %v2190
        %v2953 = vunpack.c.l.b16 %v2191
        %v2954 = vunpack.c.h.b16 %v2191
        %v2955 = vunpack.c.l.b16 %v2192
        %v2956 = vunpack.c.h.b16 %v2192
        %v2957 = vunpack.c.l.b16 %v2193
        %v2958 = vunpack.c.h.b16 %v2193
        %v2959 = vunpack.c.l.b16 %v2194
        %v2960 = vunpack.c.h.b16 %v2194
        %v2961 = vunpack.c.l.b16 %v2195
        %v2962 = vunpack.c.h.b16 %v2195
        %v2963 = vunpack.c.l.b16 %v2196
        %v2964 = vunpack.c.h.b16 %v2196
        %v2965 = vpack.c.b16 %v2457, %v2453
        %v2966 = vpack.c.b16 %v2458, %v2454
        %v2967 = vpack.c.b16 %v2459, %v2455
        %v2968 = vpack.c.b16 %v2460, %v2456
        %v2969 = vpack.c.b16 %v2465, %v2461
        %v2970 = vpack.c.b16 %v2466, %v2462
        %v2971 = vpack.c.b16 %v2467, %v2463
        %v2972 = vpack.c.b16 %v2468, %v2464
        %v2973 = vpack.c.b16 %v2473, %v2469
        %v2974 = vpack.c.b16 %v2474, %v2470
        %v2975 = vpack.c.b16 %v2475, %v2471
        %v2976 = vpack.c.b16 %v2476, %v2472
        %v2977 = vpack.c.b16 %v2481, %v2477
        %v2978 = vpack.c.b16 %v2482, %v2478
        %v2979 = vpack.c.b16 %v2483, %v2479
        %v2980 = vpack.c.b16 %v2484, %v2480
        %v2981 = vpack.c.b16 %v2489, %v2485
        %v2982 = vpack.c.b16 %v2490, %v2486
        %v2983 = vpack.c.b16 %v2491, %v2487
        %v2984 = vpack.c.b16 %v2492, %v2488
        %v2985 = vpack.c.b16 %v2497, %v2493
        %v2986 = vpack.c.b16 %v2498, %v2494
        %v2987 = vpack.c.b16 %v2499, %v2495
        %v2988 = vpack.c.b16 %v2500, %v2496
        %v2989 = vpack.c.b16 %v2505, %v2501
        %v2990 = vpack.c.b16 %v2506, %v2502
        %v2991 = vpack.c.b16 %v2507, %v2503
        %v2992 = vpack.c.b16 %v2508, %v2504
        %v2993 = vpack.c.b16 %v2513, %v2509
        %v2994 = vpack.c.b16 %v2514, %v2510
        %v2995 = vpack.c.b16 %v2515, %v2511
        %v2996 = vpack.c.b16 %v2516, %v2512
        %v2997 = vpack.c.b16 %v2521, %v2517
        %v2998 = vpack.c.b16 %v2522, %v2518
        %v2999 = vpack.c.b16 %v2523, %v2519
        %v3000 = vpack.c.b16 %v2524, %v2520
        %v3001 = vpack.c.b16 %v2529, %v2525
        %v3002 = vpack.c.b16 %v2530, %v2526
        %v3003 = vpack.c.b16 %v2531, %v2527
        %v3004 = vpack.c.b16 %v2532, %v2528
        %v3005 = vpack.c.b16 %v2537, %v2533
        %v3006 = vpack.c.b16 %v2538, %v2534
        %v3007 = vpack.c.b16 %v2539, %v2535
        %v3008 = vpack.c.b16 %v2540, %v2536
        %v3009 = vpack.c.b16 %v2545, %v2541
        %v3010 = vpack.c.b16 %v2546, %v2542
        %v3011 = vpack.c.b16 %v2547, %v2543
        %v3012 = vpack.c.b16 %v2548, %v2544
        %v3013 = vpack.c.b16 %v2553, %v2549
        %v3014 = vpack.c.b16 %v2554, %v2550
        %v3015 = vpack.c.b16 %v2555, %v2551
        %v3016 = vpack.c.b16 %v2556, %v2552
        %v3017 = vpack.c.b16 %v2561, %v2557
        %v3018 = vpack.c.b16 %v2562, %v2558
        %v3019 = vpack.c.b16 %v2563, %v2559
        %v3020 = vpack.c.b16 %v2564, %v2560
        %v3021 = vpack.c.b16 %v2569, %v2565
        %v3022 = vpack.c.b16 %v2570, %v2566
        %v3023 = vpack.c.b16 %v2571, %v2567
        %v3024 = vpack.c.b16 %v2572, %v2568
        %v3025 = vpack.c.b16 %v2577, %v2573
        %v3026 = vpack.c.b16 %v2578, %v2574
        %v3027 = vpack.c.b16 %v2579, %v2575
        %v3028 = vpack.c.b16 %v2580, %v2576
        %v3029 = vpack.c.b16 %v2585, %v2581
        %v3030 = vpack.c.b16 %v2586, %v2582
        %v3031 = vpack.c.b16 %v2587, %v2583
        %v3032 = vpack.c.b16 %v2588, %v2584
        %v3033 = vpack.c.b16 %v2593, %v2589
        %v3034 = vpack.c.b16 %v2594, %v2590
        %v3035 = vpack.c.b16 %v2595, %v2591
        %v3036 = vpack.c.b16 %v2596, %v2592
        %v3037 = vpack.c.b16 %v2601, %v2597
        %v3038 = vpack.c.b16 %v2602, %v2598
        %v3039 = vpack.c.b16 %v2603, %v2599
        %v3040 = vpack.c.b16 %v2604, %v2600
        %v3041 = vpack.c.b16 %v2609, %v2605
        %v3042 = vpack.c.b16 %v2610, %v2606
        %v3043 = vpack.c.b16 %v2611, %v2607
        %v3044 = vpack.c.b16 %v2612, %v2608
        %v3045 = vpack.c.b16 %v2617, %v2613
        %v3046 = vpack.c.b16 %v2618, %v2614
        %v3047 = vpack.c.b16 %v2619, %v2615
        %v3048 = vpack.c.b16 %v2620, %v2616
        %v3049 = vpack.c.b16 %v2625, %v2621
        %v3050 = vpack.c.b16 %v2626, %v2622
        %v3051 = vpack.c.b16 %v2627, %v2623
        %v3052 = vpack.c.b16 %v2628, %v2624
        %v3053 = vpack.c.b16 %v2633, %v2629
        %v3054 = vpack.c.b16 %v2634, %v2630
        %v3055 = vpack.c.b16 %v2635, %v2631
        %v3056 = vpack.c.b16 %v2636, %v2632
        %v3057 = vpack.c.b16 %v2641, %v2637
        %v3058 = vpack.c.b16 %v2642, %v2638
        %v3059 = vpack.c.b16 %v2643, %v2639
        %v3060 = vpack.c.b16 %v2644, %v2640
        %v3061 = vpack.c.b16 %v2649, %v2645
        %v3062 = vpack.c.b16 %v2650, %v2646
        %v3063 = vpack.c.b16 %v2651, %v2647
        %v3064 = vpack.c.b16 %v2652, %v2648
        %v3065 = vpack.c.b16 %v2657, %v2653
        %v3066 = vpack.c.b16 %v2658, %v2654
        %v3067 = vpack.c.b16 %v2659, %v2655
        %v3068 = vpack.c.b16 %v2660, %v2656
        %v3069 = vpack.c.b16 %v2665, %v2661
        %v3070 = vpack.c.b16 %v2666, %v2662
        %v3071 = vpack.c.b16 %v2667, %v2663
        %v3072 = vpack.c.b16 %v2668, %v2664
        %v3073 = vpack.c.b16 %v2673, %v2669
        %v3074 = vpack.c.b16 %v2674, %v2670
        %v3075 = vpack.c.b16 %v2675, %v2671
        %v3076 = vpack.c.b16 %v2676, %v2672
        %v3077 = vpack.c.b16 %v2681, %v2677
        %v3078 = vpack.c.b16 %v2682, %v2678
        %v3079 = vpack.c.b16 %v2683, %v2679
        %v3080 = vpack.c.b16 %v2684, %v2680
        %v3081 = vpack.c.b16 %v2689, %v2685
        %v3082 = vpack.c.b16 %v2690, %v2686
        %v3083 = vpack.c.b16 %v2691, %v2687
        %v3084 = vpack.c.b16 %v2692, %v2688
        %v3085 = vpack.c.b16 %v2697, %v2693
        %v3086 = vpack.c.b16 %v2698, %v2694
        %v3087 = vpack.c.b16 %v2699, %v2695
        %v3088 = vpack.c.b16 %v2700, %v2696
        %v3089 = vpack.c.b16 %v2705, %v2701
        %v3090 = vpack.c.b16 %v2706, %v2702
        %v3091 = vpack.c.b16 %v2707, %v2703
        %v3092 = vpack.c.b16 %v2708, %v2704
        %v3093 = vpack.c.b16 %v2713, %v2709
        %v3094 = vpack.c.b16 %v2714, %v2710
        %v3095 = vpack.c.b16 %v2715, %v2711
        %v3096 = vpack.c.b16 %v2716, %v2712
        %v3097 = vpack.c.b16 %v2721, %v2717
        %v3098 = vpack.c.b16 %v2722, %v2718
        %v3099 = vpack.c.b16 %v2723, %v2719
        %v3100 = vpack.c.b16 %v2724, %v2720
        %v3101 = vpack.c.b16 %v2729, %v2725
        %v3102 = vpack.c.b16 %v2730, %v2726
        %v3103 = vpack.c.b16 %v2731, %v2727
        %v3104 = vpack.c.b16 %v2732, %v2728
        %v3105 = vpack.c.b16 %v2737, %v2733
        %v3106 = vpack.c.b16 %v2738, %v2734
        %v3107 = vpack.c.b16 %v2739, %v2735
        %v3108 = vpack.c.b16 %v2740, %v2736
        %v3109 = vpack.c.b16 %v2745, %v2741
        %v3110 = vpack.c.b16 %v2746, %v2742
        %v3111 = vpack.c.b16 %v2747, %v2743
        %v3112 = vpack.c.b16 %v2748, %v2744
        %v3113 = vpack.c.b16 %v2753, %v2749
        %v3114 = vpack.c.b16 %v2754, %v2750
        %v3115 = vpack.c.b16 %v2755, %v2751
        %v3116 = vpack.c.b16 %v2756, %v2752
        %v3117 = vpack.c.b16 %v2761, %v2757
        %v3118 = vpack.c.b16 %v2762, %v2758
        %v3119 = vpack.c.b16 %v2763, %v2759
        %v3120 = vpack.c.b16 %v2764, %v2760
        %v3121 = vpack.c.b16 %v2769, %v2765
        %v3122 = vpack.c.b16 %v2770, %v2766
        %v3123 = vpack.c.b16 %v2771, %v2767
        %v3124 = vpack.c.b16 %v2772, %v2768
        %v3125 = vpack.c.b16 %v2777, %v2773
        %v3126 = vpack.c.b16 %v2778, %v2774
        %v3127 = vpack.c.b16 %v2779, %v2775
        %v3128 = vpack.c.b16 %v2780, %v2776
        %v3129 = vpack.c.b16 %v2785, %v2781
        %v3130 = vpack.c.b16 %v2786, %v2782
        %v3131 = vpack.c.b16 %v2787, %v2783
        %v3132 = vpack.c.b16 %v2788, %v2784
        %v3133 = vpack.c.b16 %v2793, %v2789
        %v3134 = vpack.c.b16 %v2794, %v2790
        %v3135 = vpack.c.b16 %v2795, %v2791
        %v3136 = vpack.c.b16 %v2796, %v2792
        %v3137 = vpack.c.b16 %v2801, %v2797
        %v3138 = vpack.c.b16 %v2802, %v2798
        %v3139 = vpack.c.b16 %v2803, %v2799
        %v3140 = vpack.c.b16 %v2804, %v2800
        %v3141 = vpack.c.b16 %v2809, %v2805
        %v3142 = vpack.c.b16 %v2810, %v2806
        %v3143 = vpack.c.b16 %v2811, %v2807
        %v3144 = vpack.c.b16 %v2812, %v2808
        %v3145 = vpack.c.b16 %v2817, %v2813
        %v3146 = vpack.c.b16 %v2818, %v2814
        %v3147 = vpack.c.b16 %v2819, %v2815
        %v3148 = vpack.c.b16 %v2820, %v2816
        %v3149 = vpack.c.b16 %v2825, %v2821
        %v3150 = vpack.c.b16 %v2826, %v2822
        %v3151 = vpack.c.b16 %v2827, %v2823
        %v3152 = vpack.c.b16 %v2828, %v2824
        %v3153 = vpack.c.b16 %v2833, %v2829
        %v3154 = vpack.c.b16 %v2834, %v2830
        %v3155 = vpack.c.b16 %v2835, %v2831
        %v3156 = vpack.c.b16 %v2836, %v2832
        %v3157 = vpack.c.b16 %v2841, %v2837
        %v3158 = vpack.c.b16 %v2842, %v2838
        %v3159 = vpack.c.b16 %v2843, %v2839
        %v3160 = vpack.c.b16 %v2844, %v2840
        %v3161 = vpack.c.b16 %v2849, %v2845
        %v3162 = vpack.c.b16 %v2850, %v2846
        %v3163 = vpack.c.b16 %v2851, %v2847
        %v3164 = vpack.c.b16 %v2852, %v2848
        %v3165 = vpack.c.b16 %v2857, %v2853
        %v3166 = vpack.c.b16 %v2858, %v2854
        %v3167 = vpack.c.b16 %v2859, %v2855
        %v3168 = vpack.c.b16 %v2860, %v2856
        %v3169 = vpack.c.b16 %v2865, %v2861
        %v3170 = vpack.c.b16 %v2866, %v2862
        %v3171 = vpack.c.b16 %v2867, %v2863
        %v3172 = vpack.c.b16 %v2868, %v2864
        %v3173 = vpack.c.b16 %v2873, %v2869
        %v3174 = vpack.c.b16 %v2874, %v2870
        %v3175 = vpack.c.b16 %v2875, %v2871
        %v3176 = vpack.c.b16 %v2876, %v2872
        %v3177 = vpack.c.b16 %v2881, %v2877
        %v3178 = vpack.c.b16 %v2882, %v2878
        %v3179 = vpack.c.b16 %v2883, %v2879
        %v3180 = vpack.c.b16 %v2884, %v2880
        %v3181 = vpack.c.b16 %v2889, %v2885
        %v3182 = vpack.c.b16 %v2890, %v2886
        %v3183 = vpack.c.b16 %v2891, %v2887
        %v3184 = vpack.c.b16 %v2892, %v2888
        %v3185 = vpack.c.b16 %v2897, %v2893
        %v3186 = vpack.c.b16 %v2898, %v2894
        %v3187 = vpack.c.b16 %v2899, %v2895
        %v3188 = vpack.c.b16 %v2900, %v2896
        %v3189 = vpack.c.b16 %v2905, %v2901
        %v3190 = vpack.c.b16 %v2906, %v2902
        %v3191 = vpack.c.b16 %v2907, %v2903
        %v3192 = vpack.c.b16 %v2908, %v2904
        %v3193 = vpack.c.b16 %v2913, %v2909
        %v3194 = vpack.c.b16 %v2914, %v2910
        %v3195 = vpack.c.b16 %v2915, %v2911
        %v3196 = vpack.c.b16 %v2916, %v2912
        %v3197 = vpack.c.b16 %v2921, %v2917
        %v3198 = vpack.c.b16 %v2922, %v2918
        %v3199 = vpack.c.b16 %v2923, %v2919
        %v3200 = vpack.c.b16 %v2924, %v2920
        %v3201 = vpack.c.b16 %v2929, %v2925
        %v3202 = vpack.c.b16 %v2930, %v2926
        %v3203 = vpack.c.b16 %v2931, %v2927
        %v3204 = vpack.c.b16 %v2932, %v2928
        %v3205 = vpack.c.b16 %v2937, %v2933
        %v3206 = vpack.c.b16 %v2938, %v2934
        %v3207 = vpack.c.b16 %v2939, %v2935
        %v3208 = vpack.c.b16 %v2940, %v2936
        %v3209 = vpack.c.b16 %v2945, %v2941
        %v3210 = vpack.c.b16 %v2946, %v2942
        %v3211 = vpack.c.b16 %v2947, %v2943
        %v3212 = vpack.c.b16 %v2948, %v2944
        %v3213 = vpack.c.b16 %v2953, %v2949
        %v3214 = vpack.c.b16 %v2954, %v2950
        %v3215 = vpack.c.b16 %v2955, %v2951
        %v3216 = vpack.c.b16 %v2956, %v2952
        %v3217 = vpack.c.b16 %v2961, %v2957
        %v3218 = vpack.c.b16 %v2962, %v2958
        %v3219 = vpack.c.b16 %v2963, %v2959
        %v3220 = vpack.c.b16 %v2964, %v2960
        %3477 = vmatprep.subr.bf16.mxu0 %v2966
        %3478 = vmatpush1.bf16.msra.mxu0 %v2965
        %3479 = vmatprep.subr.bf16.mxu0 %v2970
        %3480 = vmatpush1.bf16.msra.mxu0 %v2969
        %3481 = vmatprep.subr.bf16.mxu0 %v2974
        %3482 = vmatpush1.bf16.msra.mxu0 %v2973
        %3483 = vmatprep.subr.bf16.mxu0 %v2978
        %3484 = vmatpush1.bf16.msra.mxu0 %v2977
        %3485 = vmatprep.subr.bf16.mxu0 %v2982
        %3486 = vmatpush1.bf16.msra.mxu0 %v2981
        %3487 = vmatprep.subr.bf16.mxu0 %v2986
        %3488 = vmatpush1.bf16.msra.mxu0 %v2985
        %3489 = vmatprep.subr.bf16.mxu0 %v2990
        %3490 = vmatpush1.bf16.msra.mxu0 %v2989
        %3491 = vmatprep.subr.bf16.mxu0 %v2994
        %3492 = vmatpush1.bf16.msra.mxu0 %v2993
        %3493 = vmatprep.subr.bf16.mxu0 %v2998
        %3494 = vmatpush1.bf16.msra.mxu0 %v2997
        %3495 = vmatprep.subr.bf16.mxu0 %v3002
        %3496 = vmatpush1.bf16.msra.mxu0 %v3001
        %3497 = vmatprep.subr.bf16.mxu0 %v3006
        %3498 = vmatpush1.bf16.msra.mxu0 %v3005
        %3499 = vmatprep.subr.bf16.mxu0 %v3010
        %3500 = vmatpush1.bf16.msra.mxu0 %v3009
        %3501 = vmatprep.subr.bf16.mxu0 %v3014
        %3502 = vmatpush1.bf16.msra.mxu0 %v3013
        %3503 = vmatprep.subr.bf16.mxu0 %v3018
        %3504 = vmatpush1.bf16.msra.mxu0 %v3017
        %3505 = vmatprep.subr.bf16.mxu0 %v3022
        %3506 = vmatpush1.bf16.msra.mxu0 %v3021
        %3507 = vmatprep.subr.bf16.mxu0 %v3026
        %3508 = vmatpush1.bf16.msra.mxu0 %v3025
        %3509 = vmatprep.mubr.bf16.mxu0 %v1934
        %3510 = vmatmul.mubr.bf16.gmra.mrb[0].mxu0 %v1933
        %v3511 = vpop.f32.mrb[0].mxu0
        %v3512 = vadd.f32 0.0, %v3511
        %v3513 = vpop.f32.mrb[0].mxu0
        %v3514 = vadd.f32 0.0, %v3513
        %v3515 = vpop.f32.mrb[0].mxu0
        %v3516 = vadd.f32 0.0, %v3515
        %v3517 = vpop.f32.mrb[0].mxu0
        %v3518 = vadd.f32 0.0, %v3517
        %3519 = vdwg.mxu0
        %3520 = vmatprep.subr.bf16.mxu0 %v3030
        %3521 = vmatpush1.bf16.msra.mxu0 %v3029
        %3522 = vmatprep.subr.bf16.mxu0 %v3034
        %3523 = vmatpush1.bf16.msra.mxu0 %v3033
        %3524 = vmatprep.subr.bf16.mxu0 %v3038
        %3525 = vmatpush1.bf16.msra.mxu0 %v3037
        %3526 = vmatprep.subr.bf16.mxu0 %v3042
        %3527 = vmatpush1.bf16.msra.mxu0 %v3041
        %3528 = vmatprep.subr.bf16.mxu0 %v3046
        %3529 = vmatpush1.bf16.msra.mxu0 %v3045
        %3530 = vmatprep.subr.bf16.mxu0 %v3050
        %3531 = vmatpush1.bf16.msra.mxu0 %v3049
        %3532 = vmatprep.subr.bf16.mxu0 %v3054
        %3533 = vmatpush1.bf16.msra.mxu0 %v3053
        %3534 = vmatprep.subr.bf16.mxu0 %v3058
        %3535 = vmatpush1.bf16.msra.mxu0 %v3057
        %3536 = vmatprep.subr.bf16.mxu0 %v3062
        %3537 = vmatpush1.bf16.msra.mxu0 %v3061
        %3538 = vmatprep.subr.bf16.mxu0 %v3066
        %3539 = vmatpush1.bf16.msra.mxu0 %v3065
        %3540 = vmatprep.subr.bf16.mxu0 %v3070
        %3541 = vmatpush1.bf16.msra.mxu0 %v3069
        %3542 = vmatprep.subr.bf16.mxu0 %v3074
        %3543 = vmatpush1.bf16.msra.mxu0 %v3073
        %3544 = vmatprep.subr.bf16.mxu0 %v3078
        %3545 = vmatpush1.bf16.msra.mxu0 %v3077
        %3546 = vmatprep.subr.bf16.mxu0 %v3082
        %3547 = vmatpush1.bf16.msra.mxu0 %v3081
        %3548 = vmatprep.subr.bf16.mxu0 %v3086
        %3549 = vmatpush1.bf16.msra.mxu0 %v3085
        %3550 = vmatprep.subr.bf16.mxu0 %v3090
        %3551 = vmatpush1.bf16.msra.mxu0 %v3089
        %3552 = vmatprep.mubr.bf16.mxu0 %v1936
        %3553 = vmatmul.mubr.bf16.gmra.mrb[0].mxu0 %v1935
        %v3554 = vpop.f32.mrb[0].mxu0
        %v3555 = vadd.f32 %v3512, %v3554
        %v3556 = vpop.f32.mrb[0].mxu0
        %v3557 = vadd.f32 %v3514, %v3556
        %v3558 = vpop.f32.mrb[0].mxu0
        %v3559 = vadd.f32 %v3516, %v3558
        %v3560 = vpop.f32.mrb[0].mxu0
        %v3561 = vadd.f32 %v3518, %v3560
        %3562 = vdwg.mxu0
        %3563 = vmatprep.subr.bf16.mxu0 %v3094
        %3564 = vmatpush1.bf16.msra.mxu0 %v3093
        %3565 = vmatprep.subr.bf16.mxu0 %v3098
        %3566 = vmatpush1.bf16.msra.mxu0 %v3097
        %3567 = vmatprep.subr.bf16.mxu0 %v3102
        %3568 = vmatpush1.bf16.msra.mxu0 %v3101
        %3569 = vmatprep.subr.bf16.mxu0 %v3106
        %3570 = vmatpush1.bf16.msra.mxu0 %v3105
        %3571 = vmatprep.subr.bf16.mxu0 %v3110
        %3572 = vmatpush1.bf16.msra.mxu0 %v3109
        %3573 = vmatprep.subr.bf16.mxu0 %v3114
        %3574 = vmatpush1.bf16.msra.mxu0 %v3113
        %3575 = vmatprep.subr.bf16.mxu0 %v3118
        %3576 = vmatpush1.bf16.msra.mxu0 %v3117
        %3577 = vmatprep.subr.bf16.mxu0 %v3122
        %3578 = vmatpush1.bf16.msra.mxu0 %v3121
        %3579 = vmatprep.subr.bf16.mxu0 %v3126
        %3580 = vmatpush1.bf16.msra.mxu0 %v3125
        %3581 = vmatprep.subr.bf16.mxu0 %v3130
        %3582 = vmatpush1.bf16.msra.mxu0 %v3129
        %3583 = vmatprep.subr.bf16.mxu0 %v3134
        %3584 = vmatpush1.bf16.msra.mxu0 %v3133
        %3585 = vmatprep.subr.bf16.mxu0 %v3138
        %3586 = vmatpush1.bf16.msra.mxu0 %v3137
        %3587 = vmatprep.subr.bf16.mxu0 %v3142
        %3588 = vmatpush1.bf16.msra.mxu0 %v3141
        %3589 = vmatprep.subr.bf16.mxu0 %v3146
        %3590 = vmatpush1.bf16.msra.mxu0 %v3145
        %3591 = vmatprep.subr.bf16.mxu0 %v3150
        %3592 = vmatpush1.bf16.msra.mxu0 %v3149
        %3593 = vmatprep.subr.bf16.mxu0 %v3154
        %3594 = vmatpush1.bf16.msra.mxu0 %v3153
        %3595 = vmatprep.mubr.bf16.mxu0 %v1938
        %3596 = vmatmul.mubr.bf16.gmra.mrb[0].mxu0 %v1937
        %v3597 = vpop.f32.mrb[0].mxu0
        %v3598 = vadd.f32 %v3555, %v3597
        %v3599 = vpop.f32.mrb[0].mxu0
        %v3600 = vadd.f32 %v3557, %v3599
        %v3601 = vpop.f32.mrb[0].mxu0
        %v3602 = vadd.f32 %v3559, %v3601
        %v3603 = vpop.f32.mrb[0].mxu0
        %v3604 = vadd.f32 %v3561, %v3603
        %3605 = vdwg.mxu0
        %3606 = vmatprep.subr.bf16.mxu0 %v3158
        %3607 = vmatpush1.bf16.msra.mxu0 %v3157
        %3608 = vmatprep.subr.bf16.mxu0 %v3162
        %3609 = vmatpush1.bf16.msra.mxu0 %v3161
        %3610 = vmatprep.subr.bf16.mxu0 %v3166
        %3611 = vmatpush1.bf16.msra.mxu0 %v3165
        %3612 = vmatprep.subr.bf16.mxu0 %v3170
        %3613 = vmatpush1.bf16.msra.mxu0 %v3169
        %3614 = vmatprep.subr.bf16.mxu0 %v3174
        %3615 = vmatpush1.bf16.msra.mxu0 %v3173
        %3616 = vmatprep.subr.bf16.mxu0 %v3178
        %3617 = vmatpush1.bf16.msra.mxu0 %v3177
        %3618 = vmatprep.subr.bf16.mxu0 %v3182
        %3619 = vmatpush1.bf16.msra.mxu0 %v3181
        %3620 = vmatprep.subr.bf16.mxu0 %v3186
        %3621 = vmatpush1.bf16.msra.mxu0 %v3185
        %3622 = vmatprep.subr.bf16.mxu0 %v3190
        %3623 = vmatpush1.bf16.msra.mxu0 %v3189
        %3624 = vmatprep.subr.bf16.mxu0 %v3194
        %3625 = vmatpush1.bf16.msra.mxu0 %v3193
        %3626 = vmatprep.subr.bf16.mxu0 %v3198
        %3627 = vmatpush1.bf16.msra.mxu0 %v3197
        %3628 = vmatprep.subr.bf16.mxu0 %v3202
        %3629 = vmatpush1.bf16.msra.mxu0 %v3201
        %3630 = vmatprep.subr.bf16.mxu0 %v3206
        %3631 = vmatpush1.bf16.msra.mxu0 %v3205
        %3632 = vmatprep.subr.bf16.mxu0 %v3210
        %3633 = vmatpush1.bf16.msra.mxu0 %v3209
        %3634 = vmatprep.subr.bf16.mxu0 %v3214
        %3635 = vmatpush1.bf16.msra.mxu0 %v3213
        %3636 = vmatprep.subr.bf16.mxu0 %v3218
        %3637 = vmatpush1.bf16.msra.mxu0 %v3217
        %3638 = vmatprep.mubr.bf16.mxu0 %v1940
        %3639 = vmatmul.mubr.bf16.gmra.mrb[0].mxu0 %v1939
        %v3640 = vpop.f32.mrb[0].mxu0
        %v3641 = vadd.f32 %v3598, %v3640
        %v3642 = vpop.f32.mrb[0].mxu0
        %v3643 = vadd.f32 %v3600, %v3642
        %v3644 = vpop.f32.mrb[0].mxu0
        %v3645 = vadd.f32 %v3602, %v3644
        %v3646 = vpop.f32.mrb[0].mxu0
        %v3647 = vadd.f32 %v3604, %v3646
        %3648 = vdwg.mxu0
        %3649 = vmatprep.subr.bf16.mxu0 %v2968
        %3650 = vmatpush1.bf16.msra.mxu0 %v2967
        %3651 = vmatprep.subr.bf16.mxu0 %v2972
        %3652 = vmatpush1.bf16.msra.mxu0 %v2971
        %3653 = vmatprep.subr.bf16.mxu0 %v2976
        %3654 = vmatpush1.bf16.msra.mxu0 %v2975
        %3655 = vmatprep.subr.bf16.mxu0 %v2980
        %3656 = vmatpush1.bf16.msra.mxu0 %v2979
        %3657 = vmatprep.subr.bf16.mxu0 %v2984
        %3658 = vmatpush1.bf16.msra.mxu0 %v2983
        %3659 = vmatprep.subr.bf16.mxu0 %v2988
        %3660 = vmatpush1.bf16.msra.mxu0 %v2987
        %3661 = vmatprep.subr.bf16.mxu0 %v2992
        %3662 = vmatpush1.bf16.msra.mxu0 %v2991
        %3663 = vmatprep.subr.bf16.mxu0 %v2996
        %3664 = vmatpush1.bf16.msra.mxu0 %v2995
        %3665 = vmatprep.subr.bf16.mxu0 %v3000
        %3666 = vmatpush1.bf16.msra.mxu0 %v2999
        %3667 = vmatprep.subr.bf16.mxu0 %v3004
        %3668 = vmatpush1.bf16.msra.mxu0 %v3003
        %3669 = vmatprep.subr.bf16.mxu0 %v3008
        %3670 = vmatpush1.bf16.msra.mxu0 %v3007
        %3671 = vmatprep.subr.bf16.mxu0 %v3012
        %3672 = vmatpush1.bf16.msra.mxu0 %v3011
        %3673 = vmatprep.subr.bf16.mxu0 %v3016
        %3674 = vmatpush1.bf16.msra.mxu0 %v3015
        %3675 = vmatprep.subr.bf16.mxu0 %v3020
        %3676 = vmatpush1.bf16.msra.mxu0 %v3019
        %3677 = vmatprep.subr.bf16.mxu0 %v3024
        %3678 = vmatpush1.bf16.msra.mxu0 %v3023
        %3679 = vmatprep.subr.bf16.mxu0 %v3028
        %3680 = vmatpush1.bf16.msra.mxu0 %v3027
        %3681 = vmatprep.mubr.bf16.mxu0 %v1934
        %3682 = vmatmul.mubr.bf16.gmra.mrb[0].mxu0 %v1933
        %v3683 = vpop.f32.mrb[0].mxu0
        %v3684 = vadd.f32 0.0, %v3683
        %v3685 = vpop.f32.mrb[0].mxu0
        %v3686 = vadd.f32 0.0, %v3685
        %v3687 = vpop.f32.mrb[0].mxu0
        %v3688 = vadd.f32 0.0, %v3687
        %v3689 = vpop.f32.mrb[0].mxu0
        %v3690 = vadd.f32 0.0, %v3689
        %3691 = vdwg.mxu0
        %3692 = vmatprep.subr.bf16.mxu0 %v3032
        %3693 = vmatpush1.bf16.msra.mxu0 %v3031
        %3694 = vmatprep.subr.bf16.mxu0 %v3036
        %3695 = vmatpush1.bf16.msra.mxu0 %v3035
        %3696 = vmatprep.subr.bf16.mxu0 %v3040
        %3697 = vmatpush1.bf16.msra.mxu0 %v3039
        %3698 = vmatprep.subr.bf16.mxu0 %v3044
        %3699 = vmatpush1.bf16.msra.mxu0 %v3043
        %3700 = vmatprep.subr.bf16.mxu0 %v3048
        %3701 = vmatpush1.bf16.msra.mxu0 %v3047
        %3702 = vmatprep.subr.bf16.mxu0 %v3052
        %3703 = vmatpush1.bf16.msra.mxu0 %v3051
        %3704 = vmatprep.subr.bf16.mxu0 %v3056
        %3705 = vmatpush1.bf16.msra.mxu0 %v3055
        %3706 = vmatprep.subr.bf16.mxu0 %v3060
        %3707 = vmatpush1.bf16.msra.mxu0 %v3059
        %3708 = vmatprep.subr.bf16.mxu0 %v3064
        %3709 = vmatpush1.bf16.msra.mxu0 %v3063
        %3710 = vmatprep.subr.bf16.mxu0 %v3068
        %3711 = vmatpush1.bf16.msra.mxu0 %v3067
        %3712 = vmatprep.subr.bf16.mxu0 %v3072
        %3713 = vmatpush1.bf16.msra.mxu0 %v3071
        %3714 = vmatprep.subr.bf16.mxu0 %v3076
        %3715 = vmatpush1.bf16.msra.mxu0 %v3075
        %3716 = vmatprep.subr.bf16.mxu0 %v3080
        %3717 = vmatpush1.bf16.msra.mxu0 %v3079
        %3718 = vmatprep.subr.bf16.mxu0 %v3084
        %3719 = vmatpush1.bf16.msra.mxu0 %v3083
        %3720 = vmatprep.subr.bf16.mxu0 %v3088
        %3721 = vmatpush1.bf16.msra.mxu0 %v3087
        %3722 = vmatprep.subr.bf16.mxu0 %v3092
        %3723 = vmatpush1.bf16.msra.mxu0 %v3091
        %3724 = vmatprep.mubr.bf16.mxu0 %v1936
        %3725 = vmatmul.mubr.bf16.gmra.mrb[0].mxu0 %v1935
        %v3726 = vpop.f32.mrb[0].mxu0
        %v3727 = vadd.f32 %v3684, %v3726
        %v3728 = vpop.f32.mrb[0].mxu0
        %v3729 = vadd.f32 %v3686, %v3728
        %v3730 = vpop.f32.mrb[0].mxu0
        %v3731 = vadd.f32 %v3688, %v3730
        %v3732 = vpop.f32.mrb[0].mxu0
        %v3733 = vadd.f32 %v3690, %v3732
        %3734 = vdwg.mxu0
        %3735 = vmatprep.subr.bf16.mxu0 %v3096
        %3736 = vmatpush1.bf16.msra.mxu0 %v3095
        %3737 = vmatprep.subr.bf16.mxu0 %v3100
        %3738 = vmatpush1.bf16.msra.mxu0 %v3099
        %3739 = vmatprep.subr.bf16.mxu0 %v3104
        %3740 = vmatpush1.bf16.msra.mxu0 %v3103
        %3741 = vmatprep.subr.bf16.mxu0 %v3108
        %3742 = vmatpush1.bf16.msra.mxu0 %v3107
        %3743 = vmatprep.subr.bf16.mxu0 %v3112
        %3744 = vmatpush1.bf16.msra.mxu0 %v3111
        %3745 = vmatprep.subr.bf16.mxu0 %v3116
        %3746 = vmatpush1.bf16.msra.mxu0 %v3115
        %3747 = vmatprep.subr.bf16.mxu0 %v3120
        %3748 = vmatpush1.bf16.msra.mxu0 %v3119
        %3749 = vmatprep.subr.bf16.mxu0 %v3124
        %3750 = vmatpush1.bf16.msra.mxu0 %v3123
        %3751 = vmatprep.subr.bf16.mxu0 %v3128
        %3752 = vmatpush1.bf16.msra.mxu0 %v3127
        %3753 = vmatprep.subr.bf16.mxu0 %v3132
        %3754 = vmatpush1.bf16.msra.mxu0 %v3131
        %3755 = vmatprep.subr.bf16.mxu0 %v3136
        %3756 = vmatpush1.bf16.msra.mxu0 %v3135
        %3757 = vmatprep.subr.bf16.mxu0 %v3140
        %3758 = vmatpush1.bf16.msra.mxu0 %v3139
        %3759 = vmatprep.subr.bf16.mxu0 %v3144
        %3760 = vmatpush1.bf16.msra.mxu0 %v3143
        %3761 = vmatprep.subr.bf16.mxu0 %v3148
        %3762 = vmatpush1.bf16.msra.mxu0 %v3147
        %3763 = vmatprep.subr.bf16.mxu0 %v3152
        %3764 = vmatpush1.bf16.msra.mxu0 %v3151
        %3765 = vmatprep.subr.bf16.mxu0 %v3156
        %3766 = vmatpush1.bf16.msra.mxu0 %v3155
        %3767 = vmatprep.mubr.bf16.mxu0 %v1938
        %3768 = vmatmul.mubr.bf16.gmra.mrb[0].mxu0 %v1937
        %v3769 = vpop.f32.mrb[0].mxu0
        %v3770 = vadd.f32 %v3727, %v3769
        %v3771 = vpop.f32.mrb[0].mxu0
        %v3772 = vadd.f32 %v3729, %v3771
        %v3773 = vpop.f32.mrb[0].mxu0
        %v3774 = vadd.f32 %v3731, %v3773
        %v3775 = vpop.f32.mrb[0].mxu0
        %v3776 = vadd.f32 %v3733, %v3775
        %3777 = vdwg.mxu0
        %3778 = vmatprep.subr.bf16.mxu0 %v3160
        %3779 = vmatpush1.bf16.msra.mxu0 %v3159
        %3780 = vmatprep.subr.bf16.mxu0 %v3164
        %3781 = vmatpush1.bf16.msra.mxu0 %v3163
        %3782 = vmatprep.subr.bf16.mxu0 %v3168
        %3783 = vmatpush1.bf16.msra.mxu0 %v3167
        %3784 = vmatprep.subr.bf16.mxu0 %v3172
        %3785 = vmatpush1.bf16.msra.mxu0 %v3171
        %3786 = vmatprep.subr.bf16.mxu0 %v3176
        %3787 = vmatpush1.bf16.msra.mxu0 %v3175
        %3788 = vmatprep.subr.bf16.mxu0 %v3180
        %3789 = vmatpush1.bf16.msra.mxu0 %v3179
        %3790 = vmatprep.subr.bf16.mxu0 %v3184
        %3791 = vmatpush1.bf16.msra.mxu0 %v3183
        %3792 = vmatprep.subr.bf16.mxu0 %v3188
        %3793 = vmatpush1.bf16.msra.mxu0 %v3187
        %3794 = vmatprep.subr.bf16.mxu0 %v3192
        %3795 = vmatpush1.bf16.msra.mxu0 %v3191
        %3796 = vmatprep.subr.bf16.mxu0 %v3196
        %3797 = vmatpush1.bf16.msra.mxu0 %v3195
        %3798 = vmatprep.subr.bf16.mxu0 %v3200
        %3799 = vmatpush1.bf16.msra.mxu0 %v3199
        %3800 = vmatprep.subr.bf16.mxu0 %v3204
        %3801 = vmatpush1.bf16.msra.mxu0 %v3203
        %3802 = vmatprep.subr.bf16.mxu0 %v3208
        %3803 = vmatpush1.bf16.msra.mxu0 %v3207
        %3804 = vmatprep.subr.bf16.mxu0 %v3212
        %3805 = vmatpush1.bf16.msra.mxu0 %v3211
        %3806 = vmatprep.subr.bf16.mxu0 %v3216
        %3807 = vmatpush1.bf16.msra.mxu0 %v3215
        %3808 = vmatprep.subr.bf16.mxu0 %v3220
        %3809 = vmatpush1.bf16.msra.mxu0 %v3219
        %3810 = vmatprep.mubr.bf16.mxu0 %v1940
        %3811 = vmatmul.mubr.bf16.gmra.mrb[0].mxu0 %v1939
        %v3812 = vpop.f32.mrb[0].mxu0
        %v3813 = vadd.f32 %v3770, %v3812
        %v3814 = vpop.f32.mrb[0].mxu0
        %v3815 = vadd.f32 %v3772, %v3814
        %v3816 = vpop.f32.mrb[0].mxu0
        %v3817 = vadd.f32 %v3774, %v3816
        %v3818 = vpop.f32.mrb[0].mxu0
        %v3819 = vadd.f32 %v3776, %v3818
        %3820 = vdwg.mxu0
        %v3821 = vld [vmem:[#allocation4] sm:$0xff]
        %v3822 = vld [vmem:[#allocation4 + $0x8] sm:$0xff]
        %v3823 = vld [vmem:[#allocation4 + $0x10] sm:$0xff]
        %v3824 = vld [vmem:[#allocation4 + $0x18] sm:$0xff]
        %v3825 = vld [vmem:[#allocation4 + $0x20] sm:$0xff]
        %v3826 = vld [vmem:[#allocation4 + $0x28] sm:$0xff]
        %v3827 = vld [vmem:[#allocation4 + $0x30] sm:$0xff]
        %v3828 = vld [vmem:[#allocation4 + $0x38] sm:$0xff]
        %v3829 = vld [vmem:[%s360] sm:$0xff]
        %v3830 = vld [vmem:[%s360 + $0x8] sm:$0xff]
        %v3831 = vld [vmem:[%s360 + $0x10] sm:$0xff]
        %v3832 = vld [vmem:[%s360 + $0x18] sm:$0xff]
        %v3833 = vld [vmem:[%s360 + $0x20] sm:$0xff]
        %v3834 = vld [vmem:[%s360 + $0x28] sm:$0xff]
        %v3835 = vld [vmem:[%s360 + $0x30] sm:$0xff]
        %v3836 = vld [vmem:[%s360 + $0x38] sm:$0xff]
        %v3837 = vld [vmem:[%s360 + $0x40] sm:$0xff]
        %v3838 = vld [vmem:[%s360 + $0x48] sm:$0xff]
        %v3839 = vld [vmem:[%s360 + $0x50] sm:$0xff]
        %v3840 = vld [vmem:[%s360 + $0x58] sm:$0xff]
        %v3841 = vld [vmem:[%s360 + $0x60] sm:$0xff]
        %v3842 = vld [vmem:[%s360 + $0x68] sm:$0xff]
        %v3843 = vld [vmem:[%s360 + $0x70] sm:$0xff]
        %v3844 = vld [vmem:[%s360 + $0x78] sm:$0xff]
        %v3845 = vld [vmem:[%s360 + $0x80] sm:$0xff]
        %v3846 = vld [vmem:[%s360 + $0x88] sm:$0xff]
        %v3847 = vld [vmem:[%s360 + $0x90] sm:$0xff]
        %v3848 = vld [vmem:[%s360 + $0x98] sm:$0xff]
        %v3849 = vld [vmem:[%s360 + $0xa0] sm:$0xff]
        %v3850 = vld [vmem:[%s360 + $0xa8] sm:$0xff]
        %v3851 = vld [vmem:[%s360 + $0xb0] sm:$0xff]
        %v3852 = vld [vmem:[%s360 + $0xb8] sm:$0xff]
        %v3853 = vld [vmem:[%s360 + $0xc0] sm:$0xff]
        %v3854 = vld [vmem:[%s360 + $0xc8] sm:$0xff]
        %v3855 = vld [vmem:[%s360 + $0xd0] sm:$0xff]
        %v3856 = vld [vmem:[%s360 + $0xd8] sm:$0xff]
        %v3857 = vld [vmem:[%s360 + $0xe0] sm:$0xff]
        %v3858 = vld [vmem:[%s360 + $0xe8] sm:$0xff]
        %v3859 = vld [vmem:[%s360 + $0xf0] sm:$0xff]
        %v3860 = vld [vmem:[%s360 + $0xf8] sm:$0xff]
        %v3861 = vld [vmem:[%s360 + $0x100] sm:$0xff]
        %v3862 = vld [vmem:[%s360 + $0x108] sm:$0xff]
        %v3863 = vld [vmem:[%s360 + $0x110] sm:$0xff]
        %v3864 = vld [vmem:[%s360 + $0x118] sm:$0xff]
        %v3865 = vld [vmem:[%s360 + $0x120] sm:$0xff]
        %v3866 = vld [vmem:[%s360 + $0x128] sm:$0xff]
        %v3867 = vld [vmem:[%s360 + $0x130] sm:$0xff]
        %v3868 = vld [vmem:[%s360 + $0x138] sm:$0xff]
        %v3869 = vld [vmem:[%s360 + $0x140] sm:$0xff]
        %v3870 = vld [vmem:[%s360 + $0x148] sm:$0xff]
        %v3871 = vld [vmem:[%s360 + $0x150] sm:$0xff]
        %v3872 = vld [vmem:[%s360 + $0x158] sm:$0xff]
        %v3873 = vld [vmem:[%s360 + $0x160] sm:$0xff]
        %v3874 = vld [vmem:[%s360 + $0x168] sm:$0xff]
        %v3875 = vld [vmem:[%s360 + $0x170] sm:$0xff]
        %v3876 = vld [vmem:[%s360 + $0x178] sm:$0xff]
        %v3877 = vld [vmem:[%s360 + $0x180] sm:$0xff]
        %v3878 = vld [vmem:[%s360 + $0x188] sm:$0xff]
        %v3879 = vld [vmem:[%s360 + $0x190] sm:$0xff]
        %v3880 = vld [vmem:[%s360 + $0x198] sm:$0xff]
        %v3881 = vld [vmem:[%s360 + $0x1a0] sm:$0xff]
        %v3882 = vld [vmem:[%s360 + $0x1a8] sm:$0xff]
        %v3883 = vld [vmem:[%s360 + $0x1b0] sm:$0xff]
        %v3884 = vld [vmem:[%s360 + $0x1b8] sm:$0xff]
        %v3885 = vld [vmem:[%s360 + $0x1c0] sm:$0xff]
        %v3886 = vld [vmem:[%s360 + $0x1c8] sm:$0xff]
        %v3887 = vld [vmem:[%s360 + $0x1d0] sm:$0xff]
        %v3888 = vld [vmem:[%s360 + $0x1d8] sm:$0xff]
        %v3889 = vld [vmem:[%s360 + $0x1e0] sm:$0xff]
        %v3890 = vld [vmem:[%s360 + $0x1e8] sm:$0xff]
        %v3891 = vld [vmem:[%s360 + $0x1f0] sm:$0xff]
        %v3892 = vld [vmem:[%s360 + $0x1f8] sm:$0xff]
        %v3893 = vld [vmem:[%s360 + $0x200] sm:$0xff]
        %v3894 = vld [vmem:[%s360 + $0x208] sm:$0xff]
        %v3895 = vld [vmem:[%s360 + $0x210] sm:$0xff]
        %v3896 = vld [vmem:[%s360 + $0x218] sm:$0xff]
        %v3897 = vld [vmem:[%s360 + $0x220] sm:$0xff]
        %v3898 = vld [vmem:[%s360 + $0x228] sm:$0xff]
        %v3899 = vld [vmem:[%s360 + $0x230] sm:$0xff]
        %v3900 = vld [vmem:[%s360 + $0x238] sm:$0xff]
        %v3901 = vld [vmem:[%s360 + $0x240] sm:$0xff]
        %v3902 = vld [vmem:[%s360 + $0x248] sm:$0xff]
        %v3903 = vld [vmem:[%s360 + $0x250] sm:$0xff]
        %v3904 = vld [vmem:[%s360 + $0x258] sm:$0xff]
        %v3905 = vld [vmem:[%s360 + $0x260] sm:$0xff]
        %v3906 = vld [vmem:[%s360 + $0x268] sm:$0xff]
        %v3907 = vld [vmem:[%s360 + $0x270] sm:$0xff]
        %v3908 = vld [vmem:[%s360 + $0x278] sm:$0xff]
        %v3909 = vld [vmem:[%s360 + $0x280] sm:$0xff]
        %v3910 = vld [vmem:[%s360 + $0x288] sm:$0xff]
        %v3911 = vld [vmem:[%s360 + $0x290] sm:$0xff]
        %v3912 = vld [vmem:[%s360 + $0x298] sm:$0xff]
        %v3913 = vld [vmem:[%s360 + $0x2a0] sm:$0xff]
        %v3914 = vld [vmem:[%s360 + $0x2a8] sm:$0xff]
        %v3915 = vld [vmem:[%s360 + $0x2b0] sm:$0xff]
        %v3916 = vld [vmem:[%s360 + $0x2b8] sm:$0xff]
        %v3917 = vld [vmem:[%s360 + $0x2c0] sm:$0xff]
        %v3918 = vld [vmem:[%s360 + $0x2c8] sm:$0xff]
        %v3919 = vld [vmem:[%s360 + $0x2d0] sm:$0xff]
        %v3920 = vld [vmem:[%s360 + $0x2d8] sm:$0xff]
        %v3921 = vld [vmem:[%s360 + $0x2e0] sm:$0xff]
        %v3922 = vld [vmem:[%s360 + $0x2e8] sm:$0xff]
        %v3923 = vld [vmem:[%s360 + $0x2f0] sm:$0xff]
        %v3924 = vld [vmem:[%s360 + $0x2f8] sm:$0xff]
        %v3925 = vld [vmem:[%s360 + $0x300] sm:$0xff]
        %v3926 = vld [vmem:[%s360 + $0x308] sm:$0xff]
        %v3927 = vld [vmem:[%s360 + $0x310] sm:$0xff]
        %v3928 = vld [vmem:[%s360 + $0x318] sm:$0xff]
        %v3929 = vld [vmem:[%s360 + $0x320] sm:$0xff]
        %v3930 = vld [vmem:[%s360 + $0x328] sm:$0xff]
        %v3931 = vld [vmem:[%s360 + $0x330] sm:$0xff]
        %v3932 = vld [vmem:[%s360 + $0x338] sm:$0xff]
        %v3933 = vld [vmem:[%s360 + $0x340] sm:$0xff]
        %v3934 = vld [vmem:[%s360 + $0x348] sm:$0xff]
        %v3935 = vld [vmem:[%s360 + $0x350] sm:$0xff]
        %v3936 = vld [vmem:[%s360 + $0x358] sm:$0xff]
        %v3937 = vld [vmem:[%s360 + $0x360] sm:$0xff]
        %v3938 = vld [vmem:[%s360 + $0x368] sm:$0xff]
        %v3939 = vld [vmem:[%s360 + $0x370] sm:$0xff]
        %v3940 = vld [vmem:[%s360 + $0x378] sm:$0xff]
        %v3941 = vld [vmem:[%s360 + $0x380] sm:$0xff]
        %v3942 = vld [vmem:[%s360 + $0x388] sm:$0xff]
        %v3943 = vld [vmem:[%s360 + $0x390] sm:$0xff]
        %v3944 = vld [vmem:[%s360 + $0x398] sm:$0xff]
        %v3945 = vld [vmem:[%s360 + $0x3a0] sm:$0xff]
        %v3946 = vld [vmem:[%s360 + $0x3a8] sm:$0xff]
        %v3947 = vld [vmem:[%s360 + $0x3b0] sm:$0xff]
        %v3948 = vld [vmem:[%s360 + $0x3b8] sm:$0xff]
        %v3949 = vld [vmem:[%s360 + $0x3c0] sm:$0xff]
        %v3950 = vld [vmem:[%s360 + $0x3c8] sm:$0xff]
        %v3951 = vld [vmem:[%s360 + $0x3d0] sm:$0xff]
        %v3952 = vld [vmem:[%s360 + $0x3d8] sm:$0xff]
        %v3953 = vld [vmem:[%s360 + $0x3e0] sm:$0xff]
        %v3954 = vld [vmem:[%s360 + $0x3e8] sm:$0xff]
        %v3955 = vld [vmem:[%s360 + $0x3f0] sm:$0xff]
        %v3956 = vld [vmem:[%s360 + $0x3f8] sm:$0xff]
        %v3957 = vld [vmem:[%s360 + $0x400] sm:$0xff]
        %v3958 = vld [vmem:[%s360 + $0x408] sm:$0xff]
        %v3959 = vld [vmem:[%s360 + $0x410] sm:$0xff]
        %v3960 = vld [vmem:[%s360 + $0x418] sm:$0xff]
        %v3961 = vld [vmem:[%s360 + $0x420] sm:$0xff]
        %v3962 = vld [vmem:[%s360 + $0x428] sm:$0xff]
        %v3963 = vld [vmem:[%s360 + $0x430] sm:$0xff]
        %v3964 = vld [vmem:[%s360 + $0x438] sm:$0xff]
        %v3965 = vld [vmem:[%s360 + $0x440] sm:$0xff]
        %v3966 = vld [vmem:[%s360 + $0x448] sm:$0xff]
        %v3967 = vld [vmem:[%s360 + $0x450] sm:$0xff]
        %v3968 = vld [vmem:[%s360 + $0x458] sm:$0xff]
        %v3969 = vld [vmem:[%s360 + $0x460] sm:$0xff]
        %v3970 = vld [vmem:[%s360 + $0x468] sm:$0xff]
        %v3971 = vld [vmem:[%s360 + $0x470] sm:$0xff]
        %v3972 = vld [vmem:[%s360 + $0x478] sm:$0xff]
        %v3973 = vld [vmem:[%s360 + $0x480] sm:$0xff]
        %v3974 = vld [vmem:[%s360 + $0x488] sm:$0xff]
        %v3975 = vld [vmem:[%s360 + $0x490] sm:$0xff]
        %v3976 = vld [vmem:[%s360 + $0x498] sm:$0xff]
        %v3977 = vld [vmem:[%s360 + $0x4a0] sm:$0xff]
        %v3978 = vld [vmem:[%s360 + $0x4a8] sm:$0xff]
        %v3979 = vld [vmem:[%s360 + $0x4b0] sm:$0xff]
        %v3980 = vld [vmem:[%s360 + $0x4b8] sm:$0xff]
        %v3981 = vld [vmem:[%s360 + $0x4c0] sm:$0xff]
        %v3982 = vld [vmem:[%s360 + $0x4c8] sm:$0xff]
        %v3983 = vld [vmem:[%s360 + $0x4d0] sm:$0xff]
        %v3984 = vld [vmem:[%s360 + $0x4d8] sm:$0xff]
        %v3985 = vld [vmem:[%s360 + $0x4e0] sm:$0xff]
        %v3986 = vld [vmem:[%s360 + $0x4e8] sm:$0xff]
        %v3987 = vld [vmem:[%s360 + $0x4f0] sm:$0xff]
        %v3988 = vld [vmem:[%s360 + $0x4f8] sm:$0xff]
        %v3989 = vld [vmem:[%s360 + $0x500] sm:$0xff]
        %v3990 = vld [vmem:[%s360 + $0x508] sm:$0xff]
        %v3991 = vld [vmem:[%s360 + $0x510] sm:$0xff]
        %v3992 = vld [vmem:[%s360 + $0x518] sm:$0xff]
        %v3993 = vld [vmem:[%s360 + $0x520] sm:$0xff]
        %v3994 = vld [vmem:[%s360 + $0x528] sm:$0xff]
        %v3995 = vld [vmem:[%s360 + $0x530] sm:$0xff]
        %v3996 = vld [vmem:[%s360 + $0x538] sm:$0xff]
        %v3997 = vld [vmem:[%s360 + $0x540] sm:$0xff]
        %v3998 = vld [vmem:[%s360 + $0x548] sm:$0xff]
        %v3999 = vld [vmem:[%s360 + $0x550] sm:$0xff]
        %v4000 = vld [vmem:[%s360 + $0x558] sm:$0xff]
        %v4001 = vld [vmem:[%s360 + $0x560] sm:$0xff]
        %v4002 = vld [vmem:[%s360 + $0x568] sm:$0xff]
        %v4003 = vld [vmem:[%s360 + $0x570] sm:$0xff]
        %v4004 = vld [vmem:[%s360 + $0x578] sm:$0xff]
        %v4005 = vld [vmem:[%s360 + $0x580] sm:$0xff]
        %v4006 = vld [vmem:[%s360 + $0x588] sm:$0xff]
        %v4007 = vld [vmem:[%s360 + $0x590] sm:$0xff]
        %v4008 = vld [vmem:[%s360 + $0x598] sm:$0xff]
        %v4009 = vld [vmem:[%s360 + $0x5a0] sm:$0xff]
        %v4010 = vld [vmem:[%s360 + $0x5a8] sm:$0xff]
        %v4011 = vld [vmem:[%s360 + $0x5b0] sm:$0xff]
        %v4012 = vld [vmem:[%s360 + $0x5b8] sm:$0xff]
        %v4013 = vld [vmem:[%s360 + $0x5c0] sm:$0xff]
        %v4014 = vld [vmem:[%s360 + $0x5c8] sm:$0xff]
        %v4015 = vld [vmem:[%s360 + $0x5d0] sm:$0xff]
        %v4016 = vld [vmem:[%s360 + $0x5d8] sm:$0xff]
        %v4017 = vld [vmem:[%s360 + $0x5e0] sm:$0xff]
        %v4018 = vld [vmem:[%s360 + $0x5e8] sm:$0xff]
        %v4019 = vld [vmem:[%s360 + $0x5f0] sm:$0xff]
        %v4020 = vld [vmem:[%s360 + $0x5f8] sm:$0xff]
        %v4021 = vld [vmem:[%s360 + $0x600] sm:$0xff]
        %v4022 = vld [vmem:[%s360 + $0x608] sm:$0xff]
        %v4023 = vld [vmem:[%s360 + $0x610] sm:$0xff]
        %v4024 = vld [vmem:[%s360 + $0x618] sm:$0xff]
        %v4025 = vld [vmem:[%s360 + $0x620] sm:$0xff]
        %v4026 = vld [vmem:[%s360 + $0x628] sm:$0xff]
        %v4027 = vld [vmem:[%s360 + $0x630] sm:$0xff]
        %v4028 = vld [vmem:[%s360 + $0x638] sm:$0xff]
        %v4029 = vld [vmem:[%s360 + $0x640] sm:$0xff]
        %v4030 = vld [vmem:[%s360 + $0x648] sm:$0xff]
        %v4031 = vld [vmem:[%s360 + $0x650] sm:$0xff]
        %v4032 = vld [vmem:[%s360 + $0x658] sm:$0xff]
        %v4033 = vld [vmem:[%s360 + $0x660] sm:$0xff]
        %v4034 = vld [vmem:[%s360 + $0x668] sm:$0xff]
        %v4035 = vld [vmem:[%s360 + $0x670] sm:$0xff]
        %v4036 = vld [vmem:[%s360 + $0x678] sm:$0xff]
        %v4037 = vld [vmem:[%s360 + $0x680] sm:$0xff]
        %v4038 = vld [vmem:[%s360 + $0x688] sm:$0xff]
        %v4039 = vld [vmem:[%s360 + $0x690] sm:$0xff]
        %v4040 = vld [vmem:[%s360 + $0x698] sm:$0xff]
        %v4041 = vld [vmem:[%s360 + $0x6a0] sm:$0xff]
        %v4042 = vld [vmem:[%s360 + $0x6a8] sm:$0xff]
        %v4043 = vld [vmem:[%s360 + $0x6b0] sm:$0xff]
        %v4044 = vld [vmem:[%s360 + $0x6b8] sm:$0xff]
        %v4045 = vld [vmem:[%s360 + $0x6c0] sm:$0xff]
        %v4046 = vld [vmem:[%s360 + $0x6c8] sm:$0xff]
        %v4047 = vld [vmem:[%s360 + $0x6d0] sm:$0xff]
        %v4048 = vld [vmem:[%s360 + $0x6d8] sm:$0xff]
        %v4049 = vld [vmem:[%s360 + $0x6e0] sm:$0xff]
        %v4050 = vld [vmem:[%s360 + $0x6e8] sm:$0xff]
        %v4051 = vld [vmem:[%s360 + $0x6f0] sm:$0xff]
        %v4052 = vld [vmem:[%s360 + $0x6f8] sm:$0xff]
        %v4053 = vld [vmem:[%s360 + $0x700] sm:$0xff]
        %v4054 = vld [vmem:[%s360 + $0x708] sm:$0xff]
        %v4055 = vld [vmem:[%s360 + $0x710] sm:$0xff]
        %v4056 = vld [vmem:[%s360 + $0x718] sm:$0xff]
        %v4057 = vld [vmem:[%s360 + $0x720] sm:$0xff]
        %v4058 = vld [vmem:[%s360 + $0x728] sm:$0xff]
        %v4059 = vld [vmem:[%s360 + $0x730] sm:$0xff]
        %v4060 = vld [vmem:[%s360 + $0x738] sm:$0xff]
        %v4061 = vld [vmem:[%s360 + $0x740] sm:$0xff]
        %v4062 = vld [vmem:[%s360 + $0x748] sm:$0xff]
        %v4063 = vld [vmem:[%s360 + $0x750] sm:$0xff]
        %v4064 = vld [vmem:[%s360 + $0x758] sm:$0xff]
        %v4065 = vld [vmem:[%s360 + $0x760] sm:$0xff]
        %v4066 = vld [vmem:[%s360 + $0x768] sm:$0xff]
        %v4067 = vld [vmem:[%s360 + $0x770] sm:$0xff]
        %v4068 = vld [vmem:[%s360 + $0x778] sm:$0xff]
        %v4069 = vld [vmem:[%s360 + $0x780] sm:$0xff]
        %v4070 = vld [vmem:[%s360 + $0x788] sm:$0xff]
        %v4071 = vld [vmem:[%s360 + $0x790] sm:$0xff]
        %v4072 = vld [vmem:[%s360 + $0x798] sm:$0xff]
        %v4073 = vld [vmem:[%s360 + $0x7a0] sm:$0xff]
        %v4074 = vld [vmem:[%s360 + $0x7a8] sm:$0xff]
        %v4075 = vld [vmem:[%s360 + $0x7b0] sm:$0xff]
        %v4076 = vld [vmem:[%s360 + $0x7b8] sm:$0xff]
        %v4077 = vld [vmem:[%s360 + $0x7c0] sm:$0xff]
        %v4078 = vld [vmem:[%s360 + $0x7c8] sm:$0xff]
        %v4079 = vld [vmem:[%s360 + $0x7d0] sm:$0xff]
        %v4080 = vld [vmem:[%s360 + $0x7d8] sm:$0xff]
        %v4081 = vld [vmem:[%s360 + $0x7e0] sm:$0xff]
        %v4082 = vld [vmem:[%s360 + $0x7e8] sm:$0xff]
        %v4083 = vld [vmem:[%s360 + $0x7f0] sm:$0xff]
        %v4084 = vld [vmem:[%s360 + $0x7f8] sm:$0xff]
        %v4341 = vunpack.c.l.b16 %v3829
        %v4342 = vunpack.c.h.b16 %v3829
        %v4343 = vunpack.c.l.b16 %v3830
        %v4344 = vunpack.c.h.b16 %v3830
        %v4345 = vunpack.c.l.b16 %v3831
        %v4346 = vunpack.c.h.b16 %v3831
        %v4347 = vunpack.c.l.b16 %v3832
        %v4348 = vunpack.c.h.b16 %v3832
        %v4349 = vunpack.c.l.b16 %v3833
        %v4350 = vunpack.c.h.b16 %v3833
        %v4351 = vunpack.c.l.b16 %v3834
        %v4352 = vunpack.c.h.b16 %v3834
        %v4353 = vunpack.c.l.b16 %v3835
        %v4354 = vunpack.c.h.b16 %v3835
        %v4355 = vunpack.c.l.b16 %v3836
        %v4356 = vunpack.c.h.b16 %v3836
        %v4357 = vunpack.c.l.b16 %v3837
        %v4358 = vunpack.c.h.b16 %v3837
        %v4359 = vunpack.c.l.b16 %v3838
        %v4360 = vunpack.c.h.b16 %v3838
        %v4361 = vunpack.c.l.b16 %v3839
        %v4362 = vunpack.c.h.b16 %v3839
        %v4363 = vunpack.c.l.b16 %v3840
        %v4364 = vunpack.c.h.b16 %v3840
        %v4365 = vunpack.c.l.b16 %v3841
        %v4366 = vunpack.c.h.b16 %v3841
        %v4367 = vunpack.c.l.b16 %v3842
        %v4368 = vunpack.c.h.b16 %v3842
        %v4369 = vunpack.c.l.b16 %v3843
        %v4370 = vunpack.c.h.b16 %v3843
        %v4371 = vunpack.c.l.b16 %v3844
        %v4372 = vunpack.c.h.b16 %v3844
        %v4373 = vunpack.c.l.b16 %v3845
        %v4374 = vunpack.c.h.b16 %v3845
        %v4375 = vunpack.c.l.b16 %v3846
        %v4376 = vunpack.c.h.b16 %v3846
        %v4377 = vunpack.c.l.b16 %v3847
        %v4378 = vunpack.c.h.b16 %v3847
        %v4379 = vunpack.c.l.b16 %v3848
        %v4380 = vunpack.c.h.b16 %v3848
        %v4381 = vunpack.c.l.b16 %v3849
        %v4382 = vunpack.c.h.b16 %v3849
        %v4383 = vunpack.c.l.b16 %v3850
        %v4384 = vunpack.c.h.b16 %v3850
        %v4385 = vunpack.c.l.b16 %v3851
        %v4386 = vunpack.c.h.b16 %v3851
        %v4387 = vunpack.c.l.b16 %v3852
        %v4388 = vunpack.c.h.b16 %v3852
        %v4389 = vunpack.c.l.b16 %v3853
        %v4390 = vunpack.c.h.b16 %v3853
        %v4391 = vunpack.c.l.b16 %v3854
        %v4392 = vunpack.c.h.b16 %v3854
        %v4393 = vunpack.c.l.b16 %v3855
        %v4394 = vunpack.c.h.b16 %v3855
        %v4395 = vunpack.c.l.b16 %v3856
        %v4396 = vunpack.c.h.b16 %v3856
        %v4397 = vunpack.c.l.b16 %v3857
        %v4398 = vunpack.c.h.b16 %v3857
        %v4399 = vunpack.c.l.b16 %v3858
        %v4400 = vunpack.c.h.b16 %v3858
        %v4401 = vunpack.c.l.b16 %v3859
        %v4402 = vunpack.c.h.b16 %v3859
        %v4403 = vunpack.c.l.b16 %v3860
        %v4404 = vunpack.c.h.b16 %v3860
        %v4405 = vunpack.c.l.b16 %v3861
        %v4406 = vunpack.c.h.b16 %v3861
        %v4407 = vunpack.c.l.b16 %v3862
        %v4408 = vunpack.c.h.b16 %v3862
        %v4409 = vunpack.c.l.b16 %v3863
        %v4410 = vunpack.c.h.b16 %v3863
        %v4411 = vunpack.c.l.b16 %v3864
        %v4412 = vunpack.c.h.b16 %v3864
        %v4413 = vunpack.c.l.b16 %v3865
        %v4414 = vunpack.c.h.b16 %v3865
        %v4415 = vunpack.c.l.b16 %v3866
        %v4416 = vunpack.c.h.b16 %v3866
        %v4417 = vunpack.c.l.b16 %v3867
        %v4418 = vunpack.c.h.b16 %v3867
        %v4419 = vunpack.c.l.b16 %v3868
        %v4420 = vunpack.c.h.b16 %v3868
        %v4421 = vunpack.c.l.b16 %v3869
        %v4422 = vunpack.c.h.b16 %v3869
        %v4423 = vunpack.c.l.b16 %v3870
        %v4424 = vunpack.c.h.b16 %v3870
        %v4425 = vunpack.c.l.b16 %v3871
        %v4426 = vunpack.c.h.b16 %v3871
        %v4427 = vunpack.c.l.b16 %v3872
        %v4428 = vunpack.c.h.b16 %v3872
        %v4429 = vunpack.c.l.b16 %v3873
        %v4430 = vunpack.c.h.b16 %v3873
        %v4431 = vunpack.c.l.b16 %v3874
        %v4432 = vunpack.c.h.b16 %v3874
        %v4433 = vunpack.c.l.b16 %v3875
        %v4434 = vunpack.c.h.b16 %v3875
        %v4435 = vunpack.c.l.b16 %v3876
        %v4436 = vunpack.c.h.b16 %v3876
        %v4437 = vunpack.c.l.b16 %v3877
        %v4438 = vunpack.c.h.b16 %v3877
        %v4439 = vunpack.c.l.b16 %v3878
        %v4440 = vunpack.c.h.b16 %v3878
        %v4441 = vunpack.c.l.b16 %v3879
        %v4442 = vunpack.c.h.b16 %v3879
        %v4443 = vunpack.c.l.b16 %v3880
        %v4444 = vunpack.c.h.b16 %v3880
        %v4445 = vunpack.c.l.b16 %v3881
        %v4446 = vunpack.c.h.b16 %v3881
        %v4447 = vunpack.c.l.b16 %v3882
        %v4448 = vunpack.c.h.b16 %v3882
        %v4449 = vunpack.c.l.b16 %v3883
        %v4450 = vunpack.c.h.b16 %v3883
        %v4451 = vunpack.c.l.b16 %v3884
        %v4452 = vunpack.c.h.b16 %v3884
        %v4453 = vunpack.c.l.b16 %v3885
        %v4454 = vunpack.c.h.b16 %v3885
        %v4455 = vunpack.c.l.b16 %v3886
        %v4456 = vunpack.c.h.b16 %v3886
        %v4457 = vunpack.c.l.b16 %v3887
        %v4458 = vunpack.c.h.b16 %v3887
        %v4459 = vunpack.c.l.b16 %v3888
        %v4460 = vunpack.c.h.b16 %v3888
        %v4461 = vunpack.c.l.b16 %v3889
        %v4462 = vunpack.c.h.b16 %v3889
        %v4463 = vunpack.c.l.b16 %v3890
        %v4464 = vunpack.c.h.b16 %v3890
        %v4465 = vunpack.c.l.b16 %v3891
        %v4466 = vunpack.c.h.b16 %v3891
        %v4467 = vunpack.c.l.b16 %v3892
        %v4468 = vunpack.c.h.b16 %v3892
        %v4469 = vunpack.c.l.b16 %v3893
        %v4470 = vunpack.c.h.b16 %v3893
        %v4471 = vunpack.c.l.b16 %v3894
        %v4472 = vunpack.c.h.b16 %v3894
        %v4473 = vunpack.c.l.b16 %v3895
        %v4474 = vunpack.c.h.b16 %v3895
        %v4475 = vunpack.c.l.b16 %v3896
        %v4476 = vunpack.c.h.b16 %v3896
        %v4477 = vunpack.c.l.b16 %v3897
        %v4478 = vunpack.c.h.b16 %v3897
        %v4479 = vunpack.c.l.b16 %v3898
        %v4480 = vunpack.c.h.b16 %v3898
        %v4481 = vunpack.c.l.b16 %v3899
        %v4482 = vunpack.c.h.b16 %v3899
        %v4483 = vunpack.c.l.b16 %v3900
        %v4484 = vunpack.c.h.b16 %v3900
        %v4485 = vunpack.c.l.b16 %v3901
        %v4486 = vunpack.c.h.b16 %v3901
        %v4487 = vunpack.c.l.b16 %v3902
        %v4488 = vunpack.c.h.b16 %v3902
        %v4489 = vunpack.c.l.b16 %v3903
        %v4490 = vunpack.c.h.b16 %v3903
        %v4491 = vunpack.c.l.b16 %v3904
        %v4492 = vunpack.c.h.b16 %v3904
        %v4493 = vunpack.c.l.b16 %v3905
        %v4494 = vunpack.c.h.b16 %v3905
        %v4495 = vunpack.c.l.b16 %v3906
        %v4496 = vunpack.c.h.b16 %v3906
        %v4497 = vunpack.c.l.b16 %v3907
        %v4498 = vunpack.c.h.b16 %v3907
        %v4499 = vunpack.c.l.b16 %v3908
        %v4500 = vunpack.c.h.b16 %v3908
        %v4501 = vunpack.c.l.b16 %v3909
        %v4502 = vunpack.c.h.b16 %v3909
        %v4503 = vunpack.c.l.b16 %v3910
        %v4504 = vunpack.c.h.b16 %v3910
        %v4505 = vunpack.c.l.b16 %v3911
        %v4506 = vunpack.c.h.b16 %v3911
        %v4507 = vunpack.c.l.b16 %v3912
        %v4508 = vunpack.c.h.b16 %v3912
        %v4509 = vunpack.c.l.b16 %v3913
        %v4510 = vunpack.c.h.b16 %v3913
        %v4511 = vunpack.c.l.b16 %v3914
        %v4512 = vunpack.c.h.b16 %v3914
        %v4513 = vunpack.c.l.b16 %v3915
        %v4514 = vunpack.c.h.b16 %v3915
        %v4515 = vunpack.c.l.b16 %v3916
        %v4516 = vunpack.c.h.b16 %v3916
        %v4517 = vunpack.c.l.b16 %v3917
        %v4518 = vunpack.c.h.b16 %v3917
        %v4519 = vunpack.c.l.b16 %v3918
        %v4520 = vunpack.c.h.b16 %v3918
        %v4521 = vunpack.c.l.b16 %v3919
        %v4522 = vunpack.c.h.b16 %v3919
        %v4523 = vunpack.c.l.b16 %v3920
        %v4524 = vunpack.c.h.b16 %v3920
        %v4525 = vunpack.c.l.b16 %v3921
        %v4526 = vunpack.c.h.b16 %v3921
        %v4527 = vunpack.c.l.b16 %v3922
        %v4528 = vunpack.c.h.b16 %v3922
        %v4529 = vunpack.c.l.b16 %v3923
        %v4530 = vunpack.c.h.b16 %v3923
        %v4531 = vunpack.c.l.b16 %v3924
        %v4532 = vunpack.c.h.b16 %v3924
        %v4533 = vunpack.c.l.b16 %v3925
        %v4534 = vunpack.c.h.b16 %v3925
        %v4535 = vunpack.c.l.b16 %v3926
        %v4536 = vunpack.c.h.b16 %v3926
        %v4537 = vunpack.c.l.b16 %v3927
        %v4538 = vunpack.c.h.b16 %v3927
        %v4539 = vunpack.c.l.b16 %v3928
        %v4540 = vunpack.c.h.b16 %v3928
        %v4541 = vunpack.c.l.b16 %v3929
        %v4542 = vunpack.c.h.b16 %v3929
        %v4543 = vunpack.c.l.b16 %v3930
        %v4544 = vunpack.c.h.b16 %v3930
        %v4545 = vunpack.c.l.b16 %v3931
        %v4546 = vunpack.c.h.b16 %v3931
        %v4547 = vunpack.c.l.b16 %v3932
        %v4548 = vunpack.c.h.b16 %v3932
        %v4549 = vunpack.c.l.b16 %v3933
        %v4550 = vunpack.c.h.b16 %v3933
        %v4551 = vunpack.c.l.b16 %v3934
        %v4552 = vunpack.c.h.b16 %v3934
        %v4553 = vunpack.c.l.b16 %v3935
        %v4554 = vunpack.c.h.b16 %v3935
        %v4555 = vunpack.c.l.b16 %v3936
        %v4556 = vunpack.c.h.b16 %v3936
        %v4557 = vunpack.c.l.b16 %v3937
        %v4558 = vunpack.c.h.b16 %v3937
        %v4559 = vunpack.c.l.b16 %v3938
        %v4560 = vunpack.c.h.b16 %v3938
        %v4561 = vunpack.c.l.b16 %v3939
        %v4562 = vunpack.c.h.b16 %v3939
        %v4563 = vunpack.c.l.b16 %v3940
        %v4564 = vunpack.c.h.b16 %v3940
        %v4565 = vunpack.c.l.b16 %v3941
        %v4566 = vunpack.c.h.b16 %v3941
        %v4567 = vunpack.c.l.b16 %v3942
        %v4568 = vunpack.c.h.b16 %v3942
        %v4569 = vunpack.c.l.b16 %v3943
        %v4570 = vunpack.c.h.b16 %v3943
        %v4571 = vunpack.c.l.b16 %v3944
        %v4572 = vunpack.c.h.b16 %v3944
        %v4573 = vunpack.c.l.b16 %v3945
        %v4574 = vunpack.c.h.b16 %v3945
        %v4575 = vunpack.c.l.b16 %v3946
        %v4576 = vunpack.c.h.b16 %v3946
        %v4577 = vunpack.c.l.b16 %v3947
        %v4578 = vunpack.c.h.b16 %v3947
        %v4579 = vunpack.c.l.b16 %v3948
        %v4580 = vunpack.c.h.b16 %v3948
        %v4581 = vunpack.c.l.b16 %v3949
        %v4582 = vunpack.c.h.b16 %v3949
        %v4583 = vunpack.c.l.b16 %v3950
        %v4584 = vunpack.c.h.b16 %v3950
        %v4585 = vunpack.c.l.b16 %v3951
        %v4586 = vunpack.c.h.b16 %v3951
        %v4587 = vunpack.c.l.b16 %v3952
        %v4588 = vunpack.c.h.b16 %v3952
        %v4589 = vunpack.c.l.b16 %v3953
        %v4590 = vunpack.c.h.b16 %v3953
        %v4591 = vunpack.c.l.b16 %v3954
        %v4592 = vunpack.c.h.b16 %v3954
        %v4593 = vunpack.c.l.b16 %v3955
        %v4594 = vunpack.c.h.b16 %v3955
        %v4595 = vunpack.c.l.b16 %v3956
        %v4596 = vunpack.c.h.b16 %v3956
        %v4597 = vunpack.c.l.b16 %v3957
        %v4598 = vunpack.c.h.b16 %v3957
        %v4599 = vunpack.c.l.b16 %v3958
        %v4600 = vunpack.c.h.b16 %v3958
        %v4601 = vunpack.c.l.b16 %v3959
        %v4602 = vunpack.c.h.b16 %v3959
        %v4603 = vunpack.c.l.b16 %v3960
        %v4604 = vunpack.c.h.b16 %v3960
        %v4605 = vunpack.c.l.b16 %v3961
        %v4606 = vunpack.c.h.b16 %v3961
        %v4607 = vunpack.c.l.b16 %v3962
        %v4608 = vunpack.c.h.b16 %v3962
        %v4609 = vunpack.c.l.b16 %v3963
        %v4610 = vunpack.c.h.b16 %v3963
        %v4611 = vunpack.c.l.b16 %v3964
        %v4612 = vunpack.c.h.b16 %v3964
        %v4613 = vunpack.c.l.b16 %v3965
        %v4614 = vunpack.c.h.b16 %v3965
        %v4615 = vunpack.c.l.b16 %v3966
        %v4616 = vunpack.c.h.b16 %v3966
        %v4617 = vunpack.c.l.b16 %v3967
        %v4618 = vunpack.c.h.b16 %v3967
        %v4619 = vunpack.c.l.b16 %v3968
        %v4620 = vunpack.c.h.b16 %v3968
        %v4621 = vunpack.c.l.b16 %v3969
        %v4622 = vunpack.c.h.b16 %v3969
        %v4623 = vunpack.c.l.b16 %v3970
        %v4624 = vunpack.c.h.b16 %v3970
        %v4625 = vunpack.c.l.b16 %v3971
        %v4626 = vunpack.c.h.b16 %v3971
        %v4627 = vunpack.c.l.b16 %v3972
        %v4628 = vunpack.c.h.b16 %v3972
        %v4629 = vunpack.c.l.b16 %v3973
        %v4630 = vunpack.c.h.b16 %v3973
        %v4631 = vunpack.c.l.b16 %v3974
        %v4632 = vunpack.c.h.b16 %v3974
        %v4633 = vunpack.c.l.b16 %v3975
        %v4634 = vunpack.c.h.b16 %v3975
        %v4635 = vunpack.c.l.b16 %v3976
        %v4636 = vunpack.c.h.b16 %v3976
        %v4637 = vunpack.c.l.b16 %v3977
        %v4638 = vunpack.c.h.b16 %v3977
        %v4639 = vunpack.c.l.b16 %v3978
        %v4640 = vunpack.c.h.b16 %v3978
        %v4641 = vunpack.c.l.b16 %v3979
        %v4642 = vunpack.c.h.b16 %v3979
        %v4643 = vunpack.c.l.b16 %v3980
        %v4644 = vunpack.c.h.b16 %v3980
        %v4645 = vunpack.c.l.b16 %v3981
        %v4646 = vunpack.c.h.b16 %v3981
        %v4647 = vunpack.c.l.b16 %v3982
        %v4648 = vunpack.c.h.b16 %v3982
        %v4649 = vunpack.c.l.b16 %v3983
        %v4650 = vunpack.c.h.b16 %v3983
        %v4651 = vunpack.c.l.b16 %v3984
        %v4652 = vunpack.c.h.b16 %v3984
        %v4653 = vunpack.c.l.b16 %v3985
        %v4654 = vunpack.c.h.b16 %v3985
        %v4655 = vunpack.c.l.b16 %v3986
        %v4656 = vunpack.c.h.b16 %v3986
        %v4657 = vunpack.c.l.b16 %v3987
        %v4658 = vunpack.c.h.b16 %v3987
        %v4659 = vunpack.c.l.b16 %v3988
        %v4660 = vunpack.c.h.b16 %v3988
        %v4661 = vunpack.c.l.b16 %v3989
        %v4662 = vunpack.c.h.b16 %v3989
        %v4663 = vunpack.c.l.b16 %v3990
        %v4664 = vunpack.c.h.b16 %v3990
        %v4665 = vunpack.c.l.b16 %v3991
        %v4666 = vunpack.c.h.b16 %v3991
        %v4667 = vunpack.c.l.b16 %v3992
        %v4668 = vunpack.c.h.b16 %v3992
        %v4669 = vunpack.c.l.b16 %v3993
        %v4670 = vunpack.c.h.b16 %v3993
        %v4671 = vunpack.c.l.b16 %v3994
        %v4672 = vunpack.c.h.b16 %v3994
        %v4673 = vunpack.c.l.b16 %v3995
        %v4674 = vunpack.c.h.b16 %v3995
        %v4675 = vunpack.c.l.b16 %v3996
        %v4676 = vunpack.c.h.b16 %v3996
        %v4677 = vunpack.c.l.b16 %v3997
        %v4678 = vunpack.c.h.b16 %v3997
        %v4679 = vunpack.c.l.b16 %v3998
        %v4680 = vunpack.c.h.b16 %v3998
        %v4681 = vunpack.c.l.b16 %v3999
        %v4682 = vunpack.c.h.b16 %v3999
        %v4683 = vunpack.c.l.b16 %v4000
        %v4684 = vunpack.c.h.b16 %v4000
        %v4685 = vunpack.c.l.b16 %v4001
        %v4686 = vunpack.c.h.b16 %v4001
        %v4687 = vunpack.c.l.b16 %v4002
        %v4688 = vunpack.c.h.b16 %v4002
        %v4689 = vunpack.c.l.b16 %v4003
        %v4690 = vunpack.c.h.b16 %v4003
        %v4691 = vunpack.c.l.b16 %v4004
        %v4692 = vunpack.c.h.b16 %v4004
        %v4693 = vunpack.c.l.b16 %v4005
        %v4694 = vunpack.c.h.b16 %v4005
        %v4695 = vunpack.c.l.b16 %v4006
        %v4696 = vunpack.c.h.b16 %v4006
        %v4697 = vunpack.c.l.b16 %v4007
        %v4698 = vunpack.c.h.b16 %v4007
        %v4699 = vunpack.c.l.b16 %v4008
        %v4700 = vunpack.c.h.b16 %v4008
        %v4701 = vunpack.c.l.b16 %v4009
        %v4702 = vunpack.c.h.b16 %v4009
        %v4703 = vunpack.c.l.b16 %v4010
        %v4704 = vunpack.c.h.b16 %v4010
        %v4705 = vunpack.c.l.b16 %v4011
        %v4706 = vunpack.c.h.b16 %v4011
        %v4707 = vunpack.c.l.b16 %v4012
        %v4708 = vunpack.c.h.b16 %v4012
        %v4709 = vunpack.c.l.b16 %v4013
        %v4710 = vunpack.c.h.b16 %v4013
        %v4711 = vunpack.c.l.b16 %v4014
        %v4712 = vunpack.c.h.b16 %v4014
        %v4713 = vunpack.c.l.b16 %v4015
        %v4714 = vunpack.c.h.b16 %v4015
        %v4715 = vunpack.c.l.b16 %v4016
        %v4716 = vunpack.c.h.b16 %v4016
        %v4717 = vunpack.c.l.b16 %v4017
        %v4718 = vunpack.c.h.b16 %v4017
        %v4719 = vunpack.c.l.b16 %v4018
        %v4720 = vunpack.c.h.b16 %v4018
        %v4721 = vunpack.c.l.b16 %v4019
        %v4722 = vunpack.c.h.b16 %v4019
        %v4723 = vunpack.c.l.b16 %v4020
        %v4724 = vunpack.c.h.b16 %v4020
        %v4725 = vunpack.c.l.b16 %v4021
        %v4726 = vunpack.c.h.b16 %v4021
        %v4727 = vunpack.c.l.b16 %v4022
        %v4728 = vunpack.c.h.b16 %v4022
        %v4729 = vunpack.c.l.b16 %v4023
        %v4730 = vunpack.c.h.b16 %v4023
        %v4731 = vunpack.c.l.b16 %v4024
        %v4732 = vunpack.c.h.b16 %v4024
        %v4733 = vunpack.c.l.b16 %v4025
        %v4734 = vunpack.c.h.b16 %v4025
        %v4735 = vunpack.c.l.b16 %v4026
        %v4736 = vunpack.c.h.b16 %v4026
        %v4737 = vunpack.c.l.b16 %v4027
        %v4738 = vunpack.c.h.b16 %v4027
        %v4739 = vunpack.c.l.b16 %v4028
        %v4740 = vunpack.c.h.b16 %v4028
        %v4741 = vunpack.c.l.b16 %v4029
        %v4742 = vunpack.c.h.b16 %v4029
        %v4743 = vunpack.c.l.b16 %v4030
        %v4744 = vunpack.c.h.b16 %v4030
        %v4745 = vunpack.c.l.b16 %v4031
        %v4746 = vunpack.c.h.b16 %v4031
        %v4747 = vunpack.c.l.b16 %v4032
        %v4748 = vunpack.c.h.b16 %v4032
        %v4749 = vunpack.c.l.b16 %v4033
        %v4750 = vunpack.c.h.b16 %v4033
        %v4751 = vunpack.c.l.b16 %v4034
        %v4752 = vunpack.c.h.b16 %v4034
        %v4753 = vunpack.c.l.b16 %v4035
        %v4754 = vunpack.c.h.b16 %v4035
        %v4755 = vunpack.c.l.b16 %v4036
        %v4756 = vunpack.c.h.b16 %v4036
        %v4757 = vunpack.c.l.b16 %v4037
        %v4758 = vunpack.c.h.b16 %v4037
        %v4759 = vunpack.c.l.b16 %v4038
        %v4760 = vunpack.c.h.b16 %v4038
        %v4761 = vunpack.c.l.b16 %v4039
        %v4762 = vunpack.c.h.b16 %v4039
        %v4763 = vunpack.c.l.b16 %v4040
        %v4764 = vunpack.c.h.b16 %v4040
        %v4765 = vunpack.c.l.b16 %v4041
        %v4766 = vunpack.c.h.b16 %v4041
        %v4767 = vunpack.c.l.b16 %v4042
        %v4768 = vunpack.c.h.b16 %v4042
        %v4769 = vunpack.c.l.b16 %v4043
        %v4770 = vunpack.c.h.b16 %v4043
        %v4771 = vunpack.c.l.b16 %v4044
        %v4772 = vunpack.c.h.b16 %v4044
        %v4773 = vunpack.c.l.b16 %v4045
        %v4774 = vunpack.c.h.b16 %v4045
        %v4775 = vunpack.c.l.b16 %v4046
        %v4776 = vunpack.c.h.b16 %v4046
        %v4777 = vunpack.c.l.b16 %v4047
        %v4778 = vunpack.c.h.b16 %v4047
        %v4779 = vunpack.c.l.b16 %v4048
        %v4780 = vunpack.c.h.b16 %v4048
        %v4781 = vunpack.c.l.b16 %v4049
        %v4782 = vunpack.c.h.b16 %v4049
        %v4783 = vunpack.c.l.b16 %v4050
        %v4784 = vunpack.c.h.b16 %v4050
        %v4785 = vunpack.c.l.b16 %v4051
        %v4786 = vunpack.c.h.b16 %v4051
        %v4787 = vunpack.c.l.b16 %v4052
        %v4788 = vunpack.c.h.b16 %v4052
        %v4789 = vunpack.c.l.b16 %v4053
        %v4790 = vunpack.c.h.b16 %v4053
        %v4791 = vunpack.c.l.b16 %v4054
        %v4792 = vunpack.c.h.b16 %v4054
        %v4793 = vunpack.c.l.b16 %v4055
        %v4794 = vunpack.c.h.b16 %v4055
        %v4795 = vunpack.c.l.b16 %v4056
        %v4796 = vunpack.c.h.b16 %v4056
        %v4797 = vunpack.c.l.b16 %v4057
        %v4798 = vunpack.c.h.b16 %v4057
        %v4799 = vunpack.c.l.b16 %v4058
        %v4800 = vunpack.c.h.b16 %v4058
        %v4801 = vunpack.c.l.b16 %v4059
        %v4802 = vunpack.c.h.b16 %v4059
        %v4803 = vunpack.c.l.b16 %v4060
        %v4804 = vunpack.c.h.b16 %v4060
        %v4805 = vunpack.c.l.b16 %v4061
        %v4806 = vunpack.c.h.b16 %v4061
        %v4807 = vunpack.c.l.b16 %v4062
        %v4808 = vunpack.c.h.b16 %v4062
        %v4809 = vunpack.c.l.b16 %v4063
        %v4810 = vunpack.c.h.b16 %v4063
        %v4811 = vunpack.c.l.b16 %v4064
        %v4812 = vunpack.c.h.b16 %v4064
        %v4813 = vunpack.c.l.b16 %v4065
        %v4814 = vunpack.c.h.b16 %v4065
        %v4815 = vunpack.c.l.b16 %v4066
        %v4816 = vunpack.c.h.b16 %v4066
        %v4817 = vunpack.c.l.b16 %v4067
        %v4818 = vunpack.c.h.b16 %v4067
        %v4819 = vunpack.c.l.b16 %v4068
        %v4820 = vunpack.c.h.b16 %v4068
        %v4821 = vunpack.c.l.b16 %v4069
        %v4822 = vunpack.c.h.b16 %v4069
        %v4823 = vunpack.c.l.b16 %v4070
        %v4824 = vunpack.c.h.b16 %v4070
        %v4825 = vunpack.c.l.b16 %v4071
        %v4826 = vunpack.c.h.b16 %v4071
        %v4827 = vunpack.c.l.b16 %v4072
        %v4828 = vunpack.c.h.b16 %v4072
        %v4829 = vunpack.c.l.b16 %v4073
        %v4830 = vunpack.c.h.b16 %v4073
        %v4831 = vunpack.c.l.b16 %v4074
        %v4832 = vunpack.c.h.b16 %v4074
        %v4833 = vunpack.c.l.b16 %v4075
        %v4834 = vunpack.c.h.b16 %v4075
        %v4835 = vunpack.c.l.b16 %v4076
        %v4836 = vunpack.c.h.b16 %v4076
        %v4837 = vunpack.c.l.b16 %v4077
        %v4838 = vunpack.c.h.b16 %v4077
        %v4839 = vunpack.c.l.b16 %v4078
        %v4840 = vunpack.c.h.b16 %v4078
        %v4841 = vunpack.c.l.b16 %v4079
        %v4842 = vunpack.c.h.b16 %v4079
        %v4843 = vunpack.c.l.b16 %v4080
        %v4844 = vunpack.c.h.b16 %v4080
        %v4845 = vunpack.c.l.b16 %v4081
        %v4846 = vunpack.c.h.b16 %v4081
        %v4847 = vunpack.c.l.b16 %v4082
        %v4848 = vunpack.c.h.b16 %v4082
        %v4849 = vunpack.c.l.b16 %v4083
        %v4850 = vunpack.c.h.b16 %v4083
        %v4851 = vunpack.c.l.b16 %v4084
        %v4852 = vunpack.c.h.b16 %v4084
        %v4853 = vpack.c.b16 %v4345, %v4341
        %v4854 = vpack.c.b16 %v4346, %v4342
        %v4855 = vpack.c.b16 %v4347, %v4343
        %v4856 = vpack.c.b16 %v4348, %v4344
        %v4857 = vpack.c.b16 %v4353, %v4349
        %v4858 = vpack.c.b16 %v4354, %v4350
        %v4859 = vpack.c.b16 %v4355, %v4351
        %v4860 = vpack.c.b16 %v4356, %v4352
        %v4861 = vpack.c.b16 %v4361, %v4357
        %v4862 = vpack.c.b16 %v4362, %v4358
        %v4863 = vpack.c.b16 %v4363, %v4359
        %v4864 = vpack.c.b16 %v4364, %v4360
        %v4865 = vpack.c.b16 %v4369, %v4365
        %v4866 = vpack.c.b16 %v4370, %v4366
        %v4867 = vpack.c.b16 %v4371, %v4367
        %v4868 = vpack.c.b16 %v4372, %v4368
        %v4869 = vpack.c.b16 %v4377, %v4373
        %v4870 = vpack.c.b16 %v4378, %v4374
        %v4871 = vpack.c.b16 %v4379, %v4375
        %v4872 = vpack.c.b16 %v4380, %v4376
        %v4873 = vpack.c.b16 %v4385, %v4381
        %v4874 = vpack.c.b16 %v4386, %v4382
        %v4875 = vpack.c.b16 %v4387, %v4383
        %v4876 = vpack.c.b16 %v4388, %v4384
        %v4877 = vpack.c.b16 %v4393, %v4389
        %v4878 = vpack.c.b16 %v4394, %v4390
        %v4879 = vpack.c.b16 %v4395, %v4391
        %v4880 = vpack.c.b16 %v4396, %v4392
        %v4881 = vpack.c.b16 %v4401, %v4397
        %v4882 = vpack.c.b16 %v4402, %v4398
        %v4883 = vpack.c.b16 %v4403, %v4399
        %v4884 = vpack.c.b16 %v4404, %v4400
        %v4885 = vpack.c.b16 %v4409, %v4405
        %v4886 = vpack.c.b16 %v4410, %v4406
        %v4887 = vpack.c.b16 %v4411, %v4407
        %v4888 = vpack.c.b16 %v4412, %v4408
        %v4889 = vpack.c.b16 %v4417, %v4413
        %v4890 = vpack.c.b16 %v4418, %v4414
        %v4891 = vpack.c.b16 %v4419, %v4415
        %v4892 = vpack.c.b16 %v4420, %v4416
        %v4893 = vpack.c.b16 %v4425, %v4421
        %v4894 = vpack.c.b16 %v4426, %v4422
        %v4895 = vpack.c.b16 %v4427, %v4423
        %v4896 = vpack.c.b16 %v4428, %v4424
        %v4897 = vpack.c.b16 %v4433, %v4429
        %v4898 = vpack.c.b16 %v4434, %v4430
        %v4899 = vpack.c.b16 %v4435, %v4431
        %v4900 = vpack.c.b16 %v4436, %v4432
        %v4901 = vpack.c.b16 %v4441, %v4437
        %v4902 = vpack.c.b16 %v4442, %v4438
        %v4903 = vpack.c.b16 %v4443, %v4439
        %v4904 = vpack.c.b16 %v4444, %v4440
        %v4905 = vpack.c.b16 %v4449, %v4445
        %v4906 = vpack.c.b16 %v4450, %v4446
        %v4907 = vpack.c.b16 %v4451, %v4447
        %v4908 = vpack.c.b16 %v4452, %v4448
        %v4909 = vpack.c.b16 %v4457, %v4453
        %v4910 = vpack.c.b16 %v4458, %v4454
        %v4911 = vpack.c.b16 %v4459, %v4455
        %v4912 = vpack.c.b16 %v4460, %v4456
        %v4913 = vpack.c.b16 %v4465, %v4461
        %v4914 = vpack.c.b16 %v4466, %v4462
        %v4915 = vpack.c.b16 %v4467, %v4463
        %v4916 = vpack.c.b16 %v4468, %v4464
        %v4917 = vpack.c.b16 %v4473, %v4469
        %v4918 = vpack.c.b16 %v4474, %v4470
        %v4919 = vpack.c.b16 %v4475, %v4471
        %v4920 = vpack.c.b16 %v4476, %v4472
        %v4921 = vpack.c.b16 %v4481, %v4477
        %v4922 = vpack.c.b16 %v4482, %v4478
        %v4923 = vpack.c.b16 %v4483, %v4479
        %v4924 = vpack.c.b16 %v4484, %v4480
        %v4925 = vpack.c.b16 %v4489, %v4485
        %v4926 = vpack.c.b16 %v4490, %v4486
        %v4927 = vpack.c.b16 %v4491, %v4487
        %v4928 = vpack.c.b16 %v4492, %v4488
        %v4929 = vpack.c.b16 %v4497, %v4493
        %v4930 = vpack.c.b16 %v4498, %v4494
        %v4931 = vpack.c.b16 %v4499, %v4495
        %v4932 = vpack.c.b16 %v4500, %v4496
        %v4933 = vpack.c.b16 %v4505, %v4501
        %v4934 = vpack.c.b16 %v4506, %v4502
        %v4935 = vpack.c.b16 %v4507, %v4503
        %v4936 = vpack.c.b16 %v4508, %v4504
        %v4937 = vpack.c.b16 %v4513, %v4509
        %v4938 = vpack.c.b16 %v4514, %v4510
        %v4939 = vpack.c.b16 %v4515, %v4511
        %v4940 = vpack.c.b16 %v4516, %v4512
        %v4941 = vpack.c.b16 %v4521, %v4517
        %v4942 = vpack.c.b16 %v4522, %v4518
        %v4943 = vpack.c.b16 %v4523, %v4519
        %v4944 = vpack.c.b16 %v4524, %v4520
        %v4945 = vpack.c.b16 %v4529, %v4525
        %v4946 = vpack.c.b16 %v4530, %v4526
        %v4947 = vpack.c.b16 %v4531, %v4527
        %v4948 = vpack.c.b16 %v4532, %v4528
        %v4949 = vpack.c.b16 %v4537, %v4533
        %v4950 = vpack.c.b16 %v4538, %v4534
        %v4951 = vpack.c.b16 %v4539, %v4535
        %v4952 = vpack.c.b16 %v4540, %v4536
        %v4953 = vpack.c.b16 %v4545, %v4541
        %v4954 = vpack.c.b16 %v4546, %v4542
        %v4955 = vpack.c.b16 %v4547, %v4543
        %v4956 = vpack.c.b16 %v4548, %v4544
        %v4957 = vpack.c.b16 %v4553, %v4549
        %v4958 = vpack.c.b16 %v4554, %v4550
        %v4959 = vpack.c.b16 %v4555, %v4551
        %v4960 = vpack.c.b16 %v4556, %v4552
        %v4961 = vpack.c.b16 %v4561, %v4557
        %v4962 = vpack.c.b16 %v4562, %v4558
        %v4963 = vpack.c.b16 %v4563, %v4559
        %v4964 = vpack.c.b16 %v4564, %v4560
        %v4965 = vpack.c.b16 %v4569, %v4565
        %v4966 = vpack.c.b16 %v4570, %v4566
        %v4967 = vpack.c.b16 %v4571, %v4567
        %v4968 = vpack.c.b16 %v4572, %v4568
        %v4969 = vpack.c.b16 %v4577, %v4573
        %v4970 = vpack.c.b16 %v4578, %v4574
        %v4971 = vpack.c.b16 %v4579, %v4575
        %v4972 = vpack.c.b16 %v4580, %v4576
        %v4973 = vpack.c.b16 %v4585, %v4581
        %v4974 = vpack.c.b16 %v4586, %v4582
        %v4975 = vpack.c.b16 %v4587, %v4583
        %v4976 = vpack.c.b16 %v4588, %v4584
        %v4977 = vpack.c.b16 %v4593, %v4589
        %v4978 = vpack.c.b16 %v4594, %v4590
        %v4979 = vpack.c.b16 %v4595, %v4591
        %v4980 = vpack.c.b16 %v4596, %v4592
        %v4981 = vpack.c.b16 %v4601, %v4597
        %v4982 = vpack.c.b16 %v4602, %v4598
        %v4983 = vpack.c.b16 %v4603, %v4599
        %v4984 = vpack.c.b16 %v4604, %v4600
        %v4985 = vpack.c.b16 %v4609, %v4605
        %v4986 = vpack.c.b16 %v4610, %v4606
        %v4987 = vpack.c.b16 %v4611, %v4607
        %v4988 = vpack.c.b16 %v4612, %v4608
        %v4989 = vpack.c.b16 %v4617, %v4613
        %v4990 = vpack.c.b16 %v4618, %v4614
        %v4991 = vpack.c.b16 %v4619, %v4615
        %v4992 = vpack.c.b16 %v4620, %v4616
        %v4993 = vpack.c.b16 %v4625, %v4621
        %v4994 = vpack.c.b16 %v4626, %v4622
        %v4995 = vpack.c.b16 %v4627, %v4623
        %v4996 = vpack.c.b16 %v4628, %v4624
        %v4997 = vpack.c.b16 %v4633, %v4629
        %v4998 = vpack.c.b16 %v4634, %v4630
        %v4999 = vpack.c.b16 %v4635, %v4631
        %v5000 = vpack.c.b16 %v4636, %v4632
        %v5001 = vpack.c.b16 %v4641, %v4637
        %v5002 = vpack.c.b16 %v4642, %v4638
        %v5003 = vpack.c.b16 %v4643, %v4639
        %v5004 = vpack.c.b16 %v4644, %v4640
        %v5005 = vpack.c.b16 %v4649, %v4645
        %v5006 = vpack.c.b16 %v4650, %v4646
        %v5007 = vpack.c.b16 %v4651, %v4647
        %v5008 = vpack.c.b16 %v4652, %v4648
        %v5009 = vpack.c.b16 %v4657, %v4653
        %v5010 = vpack.c.b16 %v4658, %v4654
        %v5011 = vpack.c.b16 %v4659, %v4655
        %v5012 = vpack.c.b16 %v4660, %v4656
        %v5013 = vpack.c.b16 %v4665, %v4661
        %v5014 = vpack.c.b16 %v4666, %v4662
        %v5015 = vpack.c.b16 %v4667, %v4663
        %v5016 = vpack.c.b16 %v4668, %v4664
        %v5017 = vpack.c.b16 %v4673, %v4669
        %v5018 = vpack.c.b16 %v4674, %v4670
        %v5019 = vpack.c.b16 %v4675, %v4671
        %v5020 = vpack.c.b16 %v4676, %v4672
        %v5021 = vpack.c.b16 %v4681, %v4677
        %v5022 = vpack.c.b16 %v4682, %v4678
        %v5023 = vpack.c.b16 %v4683, %v4679
        %v5024 = vpack.c.b16 %v4684, %v4680
        %v5025 = vpack.c.b16 %v4689, %v4685
        %v5026 = vpack.c.b16 %v4690, %v4686
        %v5027 = vpack.c.b16 %v4691, %v4687
        %v5028 = vpack.c.b16 %v4692, %v4688
        %v5029 = vpack.c.b16 %v4697, %v4693
        %v5030 = vpack.c.b16 %v4698, %v4694
        %v5031 = vpack.c.b16 %v4699, %v4695
        %v5032 = vpack.c.b16 %v4700, %v4696
        %v5033 = vpack.c.b16 %v4705, %v4701
        %v5034 = vpack.c.b16 %v4706, %v4702
        %v5035 = vpack.c.b16 %v4707, %v4703
        %v5036 = vpack.c.b16 %v4708, %v4704
        %v5037 = vpack.c.b16 %v4713, %v4709
        %v5038 = vpack.c.b16 %v4714, %v4710
        %v5039 = vpack.c.b16 %v4715, %v4711
        %v5040 = vpack.c.b16 %v4716, %v4712
        %v5041 = vpack.c.b16 %v4721, %v4717
        %v5042 = vpack.c.b16 %v4722, %v4718
        %v5043 = vpack.c.b16 %v4723, %v4719
        %v5044 = vpack.c.b16 %v4724, %v4720
        %v5045 = vpack.c.b16 %v4729, %v4725
        %v5046 = vpack.c.b16 %v4730, %v4726
        %v5047 = vpack.c.b16 %v4731, %v4727
        %v5048 = vpack.c.b16 %v4732, %v4728
        %v5049 = vpack.c.b16 %v4737, %v4733
        %v5050 = vpack.c.b16 %v4738, %v4734
        %v5051 = vpack.c.b16 %v4739, %v4735
        %v5052 = vpack.c.b16 %v4740, %v4736
        %v5053 = vpack.c.b16 %v4745, %v4741
        %v5054 = vpack.c.b16 %v4746, %v4742
        %v5055 = vpack.c.b16 %v4747, %v4743
        %v5056 = vpack.c.b16 %v4748, %v4744
        %v5057 = vpack.c.b16 %v4753, %v4749
        %v5058 = vpack.c.b16 %v4754, %v4750
        %v5059 = vpack.c.b16 %v4755, %v4751
        %v5060 = vpack.c.b16 %v4756, %v4752
        %v5061 = vpack.c.b16 %v4761, %v4757
        %v5062 = vpack.c.b16 %v4762, %v4758
        %v5063 = vpack.c.b16 %v4763, %v4759
        %v5064 = vpack.c.b16 %v4764, %v4760
        %v5065 = vpack.c.b16 %v4769, %v4765
        %v5066 = vpack.c.b16 %v4770, %v4766
        %v5067 = vpack.c.b16 %v4771, %v4767
        %v5068 = vpack.c.b16 %v4772, %v4768
        %v5069 = vpack.c.b16 %v4777, %v4773
        %v5070 = vpack.c.b16 %v4778, %v4774
        %v5071 = vpack.c.b16 %v4779, %v4775
        %v5072 = vpack.c.b16 %v4780, %v4776
        %v5073 = vpack.c.b16 %v4785, %v4781
        %v5074 = vpack.c.b16 %v4786, %v4782
        %v5075 = vpack.c.b16 %v4787, %v4783
        %v5076 = vpack.c.b16 %v4788, %v4784
        %v5077 = vpack.c.b16 %v4793, %v4789
        %v5078 = vpack.c.b16 %v4794, %v4790
        %v5079 = vpack.c.b16 %v4795, %v4791
        %v5080 = vpack.c.b16 %v4796, %v4792
        %v5081 = vpack.c.b16 %v4801, %v4797
        %v5082 = vpack.c.b16 %v4802, %v4798
        %v5083 = vpack.c.b16 %v4803, %v4799
        %v5084 = vpack.c.b16 %v4804, %v4800
        %v5085 = vpack.c.b16 %v4809, %v4805
        %v5086 = vpack.c.b16 %v4810, %v4806
        %v5087 = vpack.c.b16 %v4811, %v4807
        %v5088 = vpack.c.b16 %v4812, %v4808
        %v5089 = vpack.c.b16 %v4817, %v4813
        %v5090 = vpack.c.b16 %v4818, %v4814
        %v5091 = vpack.c.b16 %v4819, %v4815
        %v5092 = vpack.c.b16 %v4820, %v4816
        %v5093 = vpack.c.b16 %v4825, %v4821
        %v5094 = vpack.c.b16 %v4826, %v4822
        %v5095 = vpack.c.b16 %v4827, %v4823
        %v5096 = vpack.c.b16 %v4828, %v4824
        %v5097 = vpack.c.b16 %v4833, %v4829
        %v5098 = vpack.c.b16 %v4834, %v4830
        %v5099 = vpack.c.b16 %v4835, %v4831
        %v5100 = vpack.c.b16 %v4836, %v4832
        %v5101 = vpack.c.b16 %v4841, %v4837
        %v5102 = vpack.c.b16 %v4842, %v4838
        %v5103 = vpack.c.b16 %v4843, %v4839
        %v5104 = vpack.c.b16 %v4844, %v4840
        %v5105 = vpack.c.b16 %v4849, %v4845
        %v5106 = vpack.c.b16 %v4850, %v4846
        %v5107 = vpack.c.b16 %v4851, %v4847
        %v5108 = vpack.c.b16 %v4852, %v4848
        %5365 = vmatprep.subr.bf16.mxu0 %v4854
        %5366 = vmatpush1.bf16.msra.mxu0 %v4853
        %5367 = vmatprep.subr.bf16.mxu0 %v4858
        %5368 = vmatpush1.bf16.msra.mxu0 %v4857
        %5369 = vmatprep.subr.bf16.mxu0 %v4862
        %5370 = vmatpush1.bf16.msra.mxu0 %v4861
        %5371 = vmatprep.subr.bf16.mxu0 %v4866
        %5372 = vmatpush1.bf16.msra.mxu0 %v4865
        %5373 = vmatprep.subr.bf16.mxu0 %v4870
        %5374 = vmatpush1.bf16.msra.mxu0 %v4869
        %5375 = vmatprep.subr.bf16.mxu0 %v4874
        %5376 = vmatpush1.bf16.msra.mxu0 %v4873
        %5377 = vmatprep.subr.bf16.mxu0 %v4878
        %5378 = vmatpush1.bf16.msra.mxu0 %v4877
        %5379 = vmatprep.subr.bf16.mxu0 %v4882
        %5380 = vmatpush1.bf16.msra.mxu0 %v4881
        %5381 = vmatprep.subr.bf16.mxu0 %v4886
        %5382 = vmatpush1.bf16.msra.mxu0 %v4885
        %5383 = vmatprep.subr.bf16.mxu0 %v4890
        %5384 = vmatpush1.bf16.msra.mxu0 %v4889
        %5385 = vmatprep.subr.bf16.mxu0 %v4894
        %5386 = vmatpush1.bf16.msra.mxu0 %v4893
        %5387 = vmatprep.subr.bf16.mxu0 %v4898
        %5388 = vmatpush1.bf16.msra.mxu0 %v4897
        %5389 = vmatprep.subr.bf16.mxu0 %v4902
        %5390 = vmatpush1.bf16.msra.mxu0 %v4901
        %5391 = vmatprep.subr.bf16.mxu0 %v4906
        %5392 = vmatpush1.bf16.msra.mxu0 %v4905
        %5393 = vmatprep.subr.bf16.mxu0 %v4910
        %5394 = vmatpush1.bf16.msra.mxu0 %v4909
        %5395 = vmatprep.subr.bf16.mxu0 %v4914
        %5396 = vmatpush1.bf16.msra.mxu0 %v4913
        %5397 = vmatprep.mubr.bf16.mxu0 %v3822
        %5398 = vmatmul.mubr.bf16.gmra.mrb[0].mxu0 %v3821
        %v5399 = vpop.f32.mrb[0].mxu0
        %v5400 = vadd.f32 0.0, %v5399
        %v5401 = vpop.f32.mrb[0].mxu0
        %v5402 = vadd.f32 0.0, %v5401
        %v5403 = vpop.f32.mrb[0].mxu0
        %v5404 = vadd.f32 0.0, %v5403
        %v5405 = vpop.f32.mrb[0].mxu0
        %v5406 = vadd.f32 0.0, %v5405
        %5407 = vdwg.mxu0
        %5408 = vmatprep.subr.bf16.mxu0 %v4918
        %5409 = vmatpush1.bf16.msra.mxu0 %v4917
        %5410 = vmatprep.subr.bf16.mxu0 %v4922
        %5411 = vmatpush1.bf16.msra.mxu0 %v4921
        %5412 = vmatprep.subr.bf16.mxu0 %v4926
        %5413 = vmatpush1.bf16.msra.mxu0 %v4925
        %5414 = vmatprep.subr.bf16.mxu0 %v4930
        %5415 = vmatpush1.bf16.msra.mxu0 %v4929
        %5416 = vmatprep.subr.bf16.mxu0 %v4934
        %5417 = vmatpush1.bf16.msra.mxu0 %v4933
        %5418 = vmatprep.subr.bf16.mxu0 %v4938
        %5419 = vmatpush1.bf16.msra.mxu0 %v4937
        %5420 = vmatprep.subr.bf16.mxu0 %v4942
        %5421 = vmatpush1.bf16.msra.mxu0 %v4941
        %5422 = vmatprep.subr.bf16.mxu0 %v4946
        %5423 = vmatpush1.bf16.msra.mxu0 %v4945
        %5424 = vmatprep.subr.bf16.mxu0 %v4950
        %5425 = vmatpush1.bf16.msra.mxu0 %v4949
        %5426 = vmatprep.subr.bf16.mxu0 %v4954
        %5427 = vmatpush1.bf16.msra.mxu0 %v4953
        %5428 = vmatprep.subr.bf16.mxu0 %v4958
        %5429 = vmatpush1.bf16.msra.mxu0 %v4957
        %5430 = vmatprep.subr.bf16.mxu0 %v4962
        %5431 = vmatpush1.bf16.msra.mxu0 %v4961
        %5432 = vmatprep.subr.bf16.mxu0 %v4966
        %5433 = vmatpush1.bf16.msra.mxu0 %v4965
        %5434 = vmatprep.subr.bf16.mxu0 %v4970
        %5435 = vmatpush1.bf16.msra.mxu0 %v4969
        %5436 = vmatprep.subr.bf16.mxu0 %v4974
        %5437 = vmatpush1.bf16.msra.mxu0 %v4973
        %5438 = vmatprep.subr.bf16.mxu0 %v4978
        %5439 = vmatpush1.bf16.msra.mxu0 %v4977
        %5440 = vmatprep.mubr.bf16.mxu0 %v3824
        %5441 = vmatmul.mubr.bf16.gmra.mrb[0].mxu0 %v3823
        %v5442 = vpop.f32.mrb[0].mxu0
        %v5443 = vadd.f32 %v5400, %v5442
        %v5444 = vpop.f32.mrb[0].mxu0
        %v5445 = vadd.f32 %v5402, %v5444
        %v5446 = vpop.f32.mrb[0].mxu0
        %v5447 = vadd.f32 %v5404, %v5446
        %v5448 = vpop.f32.mrb[0].mxu0
        %v5449 = vadd.f32 %v5406, %v5448
        %5450 = vdwg.mxu0
        %5451 = vmatprep.subr.bf16.mxu0 %v4982
        %5452 = vmatpush1.bf16.msra.mxu0 %v4981
        %5453 = vmatprep.subr.bf16.mxu0 %v4986
        %5454 = vmatpush1.bf16.msra.mxu0 %v4985
        %5455 = vmatprep.subr.bf16.mxu0 %v4990
        %5456 = vmatpush1.bf16.msra.mxu0 %v4989
        %5457 = vmatprep.subr.bf16.mxu0 %v4994
        %5458 = vmatpush1.bf16.msra.mxu0 %v4993
        %5459 = vmatprep.subr.bf16.mxu0 %v4998
        %5460 = vmatpush1.bf16.msra.mxu0 %v4997
        %5461 = vmatprep.subr.bf16.mxu0 %v5002
        %5462 = vmatpush1.bf16.msra.mxu0 %v5001
        %5463 = vmatprep.subr.bf16.mxu0 %v5006
        %5464 = vmatpush1.bf16.msra.mxu0 %v5005
        %5465 = vmatprep.subr.bf16.mxu0 %v5010
        %5466 = vmatpush1.bf16.msra.mxu0 %v5009
        %5467 = vmatprep.subr.bf16.mxu0 %v5014
        %5468 = vmatpush1.bf16.msra.mxu0 %v5013
        %5469 = vmatprep.subr.bf16.mxu0 %v5018
        %5470 = vmatpush1.bf16.msra.mxu0 %v5017
        %5471 = vmatprep.subr.bf16.mxu0 %v5022
        %5472 = vmatpush1.bf16.msra.mxu0 %v5021
        %5473 = vmatprep.subr.bf16.mxu0 %v5026
        %5474 = vmatpush1.bf16.msra.mxu0 %v5025
        %5475 = vmatprep.subr.bf16.mxu0 %v5030
        %5476 = vmatpush1.bf16.msra.mxu0 %v5029
        %5477 = vmatprep.subr.bf16.mxu0 %v5034
        %5478 = vmatpush1.bf16.msra.mxu0 %v5033
        %5479 = vmatprep.subr.bf16.mxu0 %v5038
        %5480 = vmatpush1.bf16.msra.mxu0 %v5037
        %5481 = vmatprep.subr.bf16.mxu0 %v5042
        %5482 = vmatpush1.bf16.msra.mxu0 %v5041
        %5483 = vmatprep.mubr.bf16.mxu0 %v3826
        %5484 = vmatmul.mubr.bf16.gmra.mrb[0].mxu0 %v3825
        %v5485 = vpop.f32.mrb[0].mxu0
        %v5486 = vadd.f32 %v5443, %v5485
        %v5487 = vpop.f32.mrb[0].mxu0
        %v5488 = vadd.f32 %v5445, %v5487
        %v5489 = vpop.f32.mrb[0].mxu0
        %v5490 = vadd.f32 %v5447, %v5489
        %v5491 = vpop.f32.mrb[0].mxu0
        %v5492 = vadd.f32 %v5449, %v5491
        %5493 = vdwg.mxu0
        %5494 = vmatprep.subr.bf16.mxu0 %v5046
        %5495 = vmatpush1.bf16.msra.mxu0 %v5045
        %5496 = vmatprep.subr.bf16.mxu0 %v5050
        %5497 = vmatpush1.bf16.msra.mxu0 %v5049
        %5498 = vmatprep.subr.bf16.mxu0 %v5054
        %5499 = vmatpush1.bf16.msra.mxu0 %v5053
        %5500 = vmatprep.subr.bf16.mxu0 %v5058
        %5501 = vmatpush1.bf16.msra.mxu0 %v5057
        %5502 = vmatprep.subr.bf16.mxu0 %v5062
        %5503 = vmatpush1.bf16.msra.mxu0 %v5061
        %5504 = vmatprep.subr.bf16.mxu0 %v5066
        %5505 = vmatpush1.bf16.msra.mxu0 %v5065
        %5506 = vmatprep.subr.bf16.mxu0 %v5070
        %5507 = vmatpush1.bf16.msra.mxu0 %v5069
        %5508 = vmatprep.subr.bf16.mxu0 %v5074
        %5509 = vmatpush1.bf16.msra.mxu0 %v5073
        %5510 = vmatprep.subr.bf16.mxu0 %v5078
        %5511 = vmatpush1.bf16.msra.mxu0 %v5077
        %5512 = vmatprep.subr.bf16.mxu0 %v5082
        %5513 = vmatpush1.bf16.msra.mxu0 %v5081
        %5514 = vmatprep.subr.bf16.mxu0 %v5086
        %5515 = vmatpush1.bf16.msra.mxu0 %v5085
        %5516 = vmatprep.subr.bf16.mxu0 %v5090
        %5517 = vmatpush1.bf16.msra.mxu0 %v5089
        %5518 = vmatprep.subr.bf16.mxu0 %v5094
        %5519 = vmatpush1.bf16.msra.mxu0 %v5093
        %5520 = vmatprep.subr.bf16.mxu0 %v5098
        %5521 = vmatpush1.bf16.msra.mxu0 %v5097
        %5522 = vmatprep.subr.bf16.mxu0 %v5102
        %5523 = vmatpush1.bf16.msra.mxu0 %v5101
        %5524 = vmatprep.subr.bf16.mxu0 %v5106
        %5525 = vmatpush1.bf16.msra.mxu0 %v5105
        %5526 = vmatprep.mubr.bf16.mxu0 %v3828
        %5527 = vmatmul.mubr.bf16.gmra.mrb[0].mxu0 %v3827
        %v5528 = vpop.f32.mrb[0].mxu0
        %v5529 = vadd.f32 %v5486, %v5528
        %v5530 = vpop.f32.mrb[0].mxu0
        %v5531 = vadd.f32 %v5488, %v5530
        %v5532 = vpop.f32.mrb[0].mxu0
        %v5533 = vadd.f32 %v5490, %v5532
        %v5534 = vpop.f32.mrb[0].mxu0
        %v5535 = vadd.f32 %v5492, %v5534
        %5536 = vdwg.mxu0
        %5537 = vmatprep.subr.bf16.mxu0 %v4856
        %5538 = vmatpush1.bf16.msra.mxu0 %v4855
        %5539 = vmatprep.subr.bf16.mxu0 %v4860
        %5540 = vmatpush1.bf16.msra.mxu0 %v4859
        %5541 = vmatprep.subr.bf16.mxu0 %v4864
        %5542 = vmatpush1.bf16.msra.mxu0 %v4863
        %5543 = vmatprep.subr.bf16.mxu0 %v4868
        %5544 = vmatpush1.bf16.msra.mxu0 %v4867
        %5545 = vmatprep.subr.bf16.mxu0 %v4872
        %5546 = vmatpush1.bf16.msra.mxu0 %v4871
        %5547 = vmatprep.subr.bf16.mxu0 %v4876
        %5548 = vmatpush1.bf16.msra.mxu0 %v4875
        %5549 = vmatprep.subr.bf16.mxu0 %v4880
        %5550 = vmatpush1.bf16.msra.mxu0 %v4879
        %5551 = vmatprep.subr.bf16.mxu0 %v4884
        %5552 = vmatpush1.bf16.msra.mxu0 %v4883
        %5553 = vmatprep.subr.bf16.mxu0 %v4888
        %5554 = vmatpush1.bf16.msra.mxu0 %v4887
        %5555 = vmatprep.subr.bf16.mxu0 %v4892
        %5556 = vmatpush1.bf16.msra.mxu0 %v4891
        %5557 = vmatprep.subr.bf16.mxu0 %v4896
        %5558 = vmatpush1.bf16.msra.mxu0 %v4895
        %5559 = vmatprep.subr.bf16.mxu0 %v4900
        %5560 = vmatpush1.bf16.msra.mxu0 %v4899
        %5561 = vmatprep.subr.bf16.mxu0 %v4904
        %5562 = vmatpush1.bf16.msra.mxu0 %v4903
        %5563 = vmatprep.subr.bf16.mxu0 %v4908
        %5564 = vmatpush1.bf16.msra.mxu0 %v4907
        %5565 = vmatprep.subr.bf16.mxu0 %v4912
        %5566 = vmatpush1.bf16.msra.mxu0 %v4911
        %5567 = vmatprep.subr.bf16.mxu0 %v4916
        %5568 = vmatpush1.bf16.msra.mxu0 %v4915
        %5569 = vmatprep.mubr.bf16.mxu0 %v3822
        %5570 = vmatmul.mubr.bf16.gmra.mrb[0].mxu0 %v3821
        %v5571 = vpop.f32.mrb[0].mxu0
        %v5572 = vadd.f32 0.0, %v5571
        %v5573 = vpop.f32.mrb[0].mxu0
        %v5574 = vadd.f32 0.0, %v5573
        %v5575 = vpop.f32.mrb[0].mxu0
        %v5576 = vadd.f32 0.0, %v5575
        %v5577 = vpop.f32.mrb[0].mxu0
        %v5578 = vadd.f32 0.0, %v5577
        %5579 = vdwg.mxu0
        %5580 = vmatprep.subr.bf16.mxu0 %v4920
        %5581 = vmatpush1.bf16.msra.mxu0 %v4919
        %5582 = vmatprep.subr.bf16.mxu0 %v4924
        %5583 = vmatpush1.bf16.msra.mxu0 %v4923
        %5584 = vmatprep.subr.bf16.mxu0 %v4928
        %5585 = vmatpush1.bf16.msra.mxu0 %v4927
        %5586 = vmatprep.subr.bf16.mxu0 %v4932
        %5587 = vmatpush1.bf16.msra.mxu0 %v4931
        %5588 = vmatprep.subr.bf16.mxu0 %v4936
        %5589 = vmatpush1.bf16.msra.mxu0 %v4935
        %5590 = vmatprep.subr.bf16.mxu0 %v4940
        %5591 = vmatpush1.bf16.msra.mxu0 %v4939
        %5592 = vmatprep.subr.bf16.mxu0 %v4944
        %5593 = vmatpush1.bf16.msra.mxu0 %v4943
        %5594 = vmatprep.subr.bf16.mxu0 %v4948
        %5595 = vmatpush1.bf16.msra.mxu0 %v4947
        %5596 = vmatprep.subr.bf16.mxu0 %v4952
        %5597 = vmatpush1.bf16.msra.mxu0 %v4951
        %5598 = vmatprep.subr.bf16.mxu0 %v4956
        %5599 = vmatpush1.bf16.msra.mxu0 %v4955
        %5600 = vmatprep.subr.bf16.mxu0 %v4960
        %5601 = vmatpush1.bf16.msra.mxu0 %v4959
        %5602 = vmatprep.subr.bf16.mxu0 %v4964
        %5603 = vmatpush1.bf16.msra.mxu0 %v4963
        %5604 = vmatprep.subr.bf16.mxu0 %v4968
        %5605 = vmatpush1.bf16.msra.mxu0 %v4967
        %5606 = vmatprep.subr.bf16.mxu0 %v4972
        %5607 = vmatpush1.bf16.msra.mxu0 %v4971
        %5608 = vmatprep.subr.bf16.mxu0 %v4976
        %5609 = vmatpush1.bf16.msra.mxu0 %v4975
        %5610 = vmatprep.subr.bf16.mxu0 %v4980
        %5611 = vmatpush1.bf16.msra.mxu0 %v4979
        %5612 = vmatprep.mubr.bf16.mxu0 %v3824
        %5613 = vmatmul.mubr.bf16.gmra.mrb[0].mxu0 %v3823
        %v5614 = vpop.f32.mrb[0].mxu0
        %v5615 = vadd.f32 %v5572, %v5614
        %v5616 = vpop.f32.mrb[0].mxu0
        %v5617 = vadd.f32 %v5574, %v5616
        %v5618 = vpop.f32.mrb[0].mxu0
        %v5619 = vadd.f32 %v5576, %v5618
        %v5620 = vpop.f32.mrb[0].mxu0
        %v5621 = vadd.f32 %v5578, %v5620
        %5622 = vdwg.mxu0
        %5623 = vmatprep.subr.bf16.mxu0 %v4984
        %5624 = vmatpush1.bf16.msra.mxu0 %v4983
        %5625 = vmatprep.subr.bf16.mxu0 %v4988
        %5626 = vmatpush1.bf16.msra.mxu0 %v4987
        %5627 = vmatprep.subr.bf16.mxu0 %v4992
        %5628 = vmatpush1.bf16.msra.mxu0 %v4991
        %5629 = vmatprep.subr.bf16.mxu0 %v4996
        %5630 = vmatpush1.bf16.msra.mxu0 %v4995
        %5631 = vmatprep.subr.bf16.mxu0 %v5000
        %5632 = vmatpush1.bf16.msra.mxu0 %v4999
        %5633 = vmatprep.subr.bf16.mxu0 %v5004
        %5634 = vmatpush1.bf16.msra.mxu0 %v5003
        %5635 = vmatprep.subr.bf16.mxu0 %v5008
        %5636 = vmatpush1.bf16.msra.mxu0 %v5007
        %5637 = vmatprep.subr.bf16.mxu0 %v5012
        %5638 = vmatpush1.bf16.msra.mxu0 %v5011
        %5639 = vmatprep.subr.bf16.mxu0 %v5016
        %5640 = vmatpush1.bf16.msra.mxu0 %v5015
        %5641 = vmatprep.subr.bf16.mxu0 %v5020
        %5642 = vmatpush1.bf16.msra.mxu0 %v5019
        %5643 = vmatprep.subr.bf16.mxu0 %v5024
        %5644 = vmatpush1.bf16.msra.mxu0 %v5023
        %5645 = vmatprep.subr.bf16.mxu0 %v5028
        %5646 = vmatpush1.bf16.msra.mxu0 %v5027
        %5647 = vmatprep.subr.bf16.mxu0 %v5032
        %5648 = vmatpush1.bf16.msra.mxu0 %v5031
        %5649 = vmatprep.subr.bf16.mxu0 %v5036
        %5650 = vmatpush1.bf16.msra.mxu0 %v5035
        %5651 = vmatprep.subr.bf16.mxu0 %v5040
        %5652 = vmatpush1.bf16.msra.mxu0 %v5039
        %5653 = vmatprep.subr.bf16.mxu0 %v5044
        %5654 = vmatpush1.bf16.msra.mxu0 %v5043
        %5655 = vmatprep.mubr.bf16.mxu0 %v3826
        %5656 = vmatmul.mubr.bf16.gmra.mrb[0].mxu0 %v3825
        %v5657 = vpop.f32.mrb[0].mxu0
        %v5658 = vadd.f32 %v5615, %v5657
        %v5659 = vpop.f32.mrb[0].mxu0
        %v5660 = vadd.f32 %v5617, %v5659
        %v5661 = vpop.f32.mrb[0].mxu0
        %v5662 = vadd.f32 %v5619, %v5661
        %v5663 = vpop.f32.mrb[0].mxu0
        %v5664 = vadd.f32 %v5621, %v5663
        %5665 = vdwg.mxu0
        %5666 = vmatprep.subr.bf16.mxu0 %v5048
        %5667 = vmatpush1.bf16.msra.mxu0 %v5047
        %5668 = vmatprep.subr.bf16.mxu0 %v5052
        %5669 = vmatpush1.bf16.msra.mxu0 %v5051
        %5670 = vmatprep.subr.bf16.mxu0 %v5056
        %5671 = vmatpush1.bf16.msra.mxu0 %v5055
        %5672 = vmatprep.subr.bf16.mxu0 %v5060
        %5673 = vmatpush1.bf16.msra.mxu0 %v5059
        %5674 = vmatprep.subr.bf16.mxu0 %v5064
        %5675 = vmatpush1.bf16.msra.mxu0 %v5063
        %5676 = vmatprep.subr.bf16.mxu0 %v5068
        %5677 = vmatpush1.bf16.msra.mxu0 %v5067
        %5678 = vmatprep.subr.bf16.mxu0 %v5072
        %5679 = vmatpush1.bf16.msra.mxu0 %v5071
        %5680 = vmatprep.subr.bf16.mxu0 %v5076
        %5681 = vmatpush1.bf16.msra.mxu0 %v5075
        %5682 = vmatprep.subr.bf16.mxu0 %v5080
        %5683 = vmatpush1.bf16.msra.mxu0 %v5079
        %5684 = vmatprep.subr.bf16.mxu0 %v5084
        %5685 = vmatpush1.bf16.msra.mxu0 %v5083
        %5686 = vmatprep.subr.bf16.mxu0 %v5088
        %5687 = vmatpush1.bf16.msra.mxu0 %v5087
        %5688 = vmatprep.subr.bf16.mxu0 %v5092
        %5689 = vmatpush1.bf16.msra.mxu0 %v5091
        %5690 = vmatprep.subr.bf16.mxu0 %v5096
        %5691 = vmatpush1.bf16.msra.mxu0 %v5095
        %5692 = vmatprep.subr.bf16.mxu0 %v5100
        %5693 = vmatpush1.bf16.msra.mxu0 %v5099
        %5694 = vmatprep.subr.bf16.mxu0 %v5104
        %5695 = vmatpush1.bf16.msra.mxu0 %v5103
        %5696 = vmatprep.subr.bf16.mxu0 %v5108
        %5697 = vmatpush1.bf16.msra.mxu0 %v5107
        %5698 = vmatprep.mubr.bf16.mxu0 %v3828
        %5699 = vmatmul.mubr.bf16.gmra.mrb[0].mxu0 %v3827
        %v5700 = vpop.f32.mrb[0].mxu0
        %v5701 = vadd.f32 %v5658, %v5700
        %v5702 = vpop.f32.mrb[0].mxu0
        %v5703 = vadd.f32 %v5660, %v5702
        %v5704 = vpop.f32.mrb[0].mxu0
        %v5705 = vadd.f32 %v5662, %v5704
        %v5706 = vpop.f32.mrb[0].mxu0
        %v5707 = vadd.f32 %v5664, %v5706
        %5708 = vdwg.mxu0
        %v5709 = vld [vmem:[#allocation2] sm:$0xff]
        %v5710 = vld [vmem:[#allocation2 + $0x8] sm:$0xff]
        %vm5711 = vcmask 130048
        %v5713 = vsel %vm5711, %v5709, 0
        %v5716 = vsel %vm5711, %v5710, 0
        %5718 = vmatprep.subr.mxu0 %v3643
        %5719 = vmatpush1.msra.mxu0 %v3641
        %5720 = vmatprep.subr.mxu0 %v3647
        %5721 = vmatpush1.msra.mxu0 %v3645
        %5722 = vmatprep.subr.mxu0 0.0
        %5723 = vmatpush1.msra.mxu0 0.0
        %5724 = vmatprep.subr.mxu0 0.0
        %5725 = vmatpush1.msra.mxu0 0.0
        %5726 = vmatprep.subr.mxu0 0.0
        %5727 = vmatpush1.msra.mxu0 0.0
        %5728 = vmatprep.subr.mxu0 0.0
        %5729 = vmatpush1.msra.mxu0 0.0
        %5730 = vmatprep.subr.mxu0 0.0
        %5731 = vmatpush1.msra.mxu0 0.0
        %5732 = vmatprep.subr.mxu0 0.0
        %5733 = vmatpush1.msra.mxu0 0.0
        %5734 = vmatprep.subr.mxu0 0.0
        %5735 = vmatpush1.msra.mxu0 0.0
        %5736 = vmatprep.subr.mxu0 0.0
        %5737 = vmatpush1.msra.mxu0 0.0
        %5738 = vmatprep.subr.mxu0 0.0
        %5739 = vmatpush1.msra.mxu0 0.0
        %5740 = vmatprep.subr.mxu0 0.0
        %5741 = vmatpush1.msra.mxu0 0.0
        %5742 = vmatprep.subr.mxu0 0.0
        %5743 = vmatpush1.msra.mxu0 0.0
        %5744 = vmatprep.subr.mxu0 0.0
        %5745 = vmatpush1.msra.mxu0 0.0
        %5746 = vmatprep.subr.mxu0 0.0
        %5747 = vmatpush1.msra.mxu0 0.0
        %5748 = vmatprep.subr.mxu0 0.0
        %5749 = vmatpush1.msra.mxu0 0.0
        %5750 = vmatprep.subr.mxu0 0.0
        %5751 = vmatpush1.msra.mxu0 0.0
        %5752 = vmatprep.subr.mxu0 0.0
        %5753 = vmatpush1.msra.mxu0 0.0
        %5754 = vmatprep.subr.mxu0 0.0
        %5755 = vmatpush1.msra.mxu0 0.0
        %5756 = vmatprep.subr.mxu0 0.0
        %5757 = vmatpush1.msra.mxu0 0.0
        %5758 = vmatprep.subr.mxu0 0.0
        %5759 = vmatpush1.msra.mxu0 0.0
        %5760 = vmatprep.subr.mxu0 0.0
        %5761 = vmatpush1.msra.mxu0 0.0
        %5762 = vmatprep.subr.mxu0 0.0
        %5763 = vmatpush1.msra.mxu0 0.0
        %5764 = vmatprep.subr.mxu0 0.0
        %5765 = vmatpush1.msra.mxu0 0.0
        %5766 = vmatprep.subr.mxu0 0.0
        %5767 = vmatpush1.msra.mxu0 0.0
        %5768 = vmatprep.subr.mxu0 0.0
        %5769 = vmatpush1.msra.mxu0 0.0
        %5770 = vmatprep.subr.mxu0 0.0
        %5771 = vmatpush1.msra.mxu0 0.0
        %5772 = vmatprep.subr.mxu0 0.0
        %5773 = vmatpush1.msra.mxu0 0.0
        %5774 = vmatprep.subr.mxu0 0.0
        %5775 = vmatpush1.msra.mxu0 0.0
        %5776 = vmatprep.subr.mxu0 0.0
        %5777 = vmatpush1.msra.mxu0 0.0
        %5778 = vmatprep.subr.mxu0 0.0
        %5779 = vmatpush1.msra.mxu0 0.0
        %5780 = vmatprep.subr.mxu0 0.0
        %5781 = vmatpush1.msra.mxu0 0.0
        %5782 = vmatprep.mubr.f32.mxu0 0.0
        %5783 = vmatmul.mubr.f32.gmra.mrb[0].mxu0 %v5713
        %v5784 = vpop.f32.mrb[0].mxu0
        %v5785 = vadd.f32 0.0, %v5784
        %v5786 = vpop.f32.mrb[0].mxu0
        %v5787 = vadd.f32 0.0, %v5786
        %5788 = vmatprep.mubr.f32.mxu0 0.0
        %5789 = vmatmul.mubr.f32.gmra.mrb[0].mxu0 %v5716
        %v5790 = vpop.f32.mrb[0].mxu0
        %v5791 = vadd.f32 0.0, %v5790
        %v5792 = vpop.f32.mrb[0].mxu0
        %v5793 = vadd.f32 0.0, %v5792
        %5794 = vdwg.mxu0
        %5795 = vmatprep.subr.mxu0 %v3815
        %5796 = vmatpush1.msra.mxu0 %v3813
        %5797 = vmatprep.subr.mxu0 %v3819
        %5798 = vmatpush1.msra.mxu0 %v3817
        %5799 = vmatprep.subr.mxu0 0.0
        %5800 = vmatpush1.msra.mxu0 0.0
        %5801 = vmatprep.subr.mxu0 0.0
        %5802 = vmatpush1.msra.mxu0 0.0
        %5803 = vmatprep.subr.mxu0 0.0
        %5804 = vmatpush1.msra.mxu0 0.0
        %5805 = vmatprep.subr.mxu0 0.0
        %5806 = vmatpush1.msra.mxu0 0.0
        %5807 = vmatprep.subr.mxu0 0.0
        %5808 = vmatpush1.msra.mxu0 0.0
        %5809 = vmatprep.subr.mxu0 0.0
        %5810 = vmatpush1.msra.mxu0 0.0
        %5811 = vmatprep.subr.mxu0 0.0
        %5812 = vmatpush1.msra.mxu0 0.0
        %5813 = vmatprep.subr.mxu0 0.0
        %5814 = vmatpush1.msra.mxu0 0.0
        %5815 = vmatprep.subr.mxu0 0.0
        %5816 = vmatpush1.msra.mxu0 0.0
        %5817 = vmatprep.subr.mxu0 0.0
        %5818 = vmatpush1.msra.mxu0 0.0
        %5819 = vmatprep.subr.mxu0 0.0
        %5820 = vmatpush1.msra.mxu0 0.0
        %5821 = vmatprep.subr.mxu0 0.0
        %5822 = vmatpush1.msra.mxu0 0.0
        %5823 = vmatprep.subr.mxu0 0.0
        %5824 = vmatpush1.msra.mxu0 0.0
        %5825 = vmatprep.subr.mxu0 0.0
        %5826 = vmatpush1.msra.mxu0 0.0
        %5827 = vmatprep.subr.mxu0 0.0
        %5828 = vmatpush1.msra.mxu0 0.0
        %5829 = vmatprep.subr.mxu0 0.0
        %5830 = vmatpush1.msra.mxu0 0.0
        %5831 = vmatprep.subr.mxu0 0.0
        %5832 = vmatpush1.msra.mxu0 0.0
        %5833 = vmatprep.subr.mxu0 0.0
        %5834 = vmatpush1.msra.mxu0 0.0
        %5835 = vmatprep.subr.mxu0 0.0
        %5836 = vmatpush1.msra.mxu0 0.0
        %5837 = vmatprep.subr.mxu0 0.0
        %5838 = vmatpush1.msra.mxu0 0.0
        %5839 = vmatprep.subr.mxu0 0.0
        %5840 = vmatpush1.msra.mxu0 0.0
        %5841 = vmatprep.subr.mxu0 0.0
        %5842 = vmatpush1.msra.mxu0 0.0
        %5843 = vmatprep.subr.mxu0 0.0
        %5844 = vmatpush1.msra.mxu0 0.0
        %5845 = vmatprep.subr.mxu0 0.0
        %5846 = vmatpush1.msra.mxu0 0.0
        %5847 = vmatprep.subr.mxu0 0.0
        %5848 = vmatpush1.msra.mxu0 0.0
        %5849 = vmatprep.subr.mxu0 0.0
        %5850 = vmatpush1.msra.mxu0 0.0
        %5851 = vmatprep.subr.mxu0 0.0
        %5852 = vmatpush1.msra.mxu0 0.0
        %5853 = vmatprep.subr.mxu0 0.0
        %5854 = vmatpush1.msra.mxu0 0.0
        %5855 = vmatprep.subr.mxu0 0.0
        %5856 = vmatpush1.msra.mxu0 0.0
        %5857 = vmatprep.subr.mxu0 0.0
        %5858 = vmatpush1.msra.mxu0 0.0
        %5859 = vmatprep.mubr.f32.mxu0 0.0
        %5860 = vmatmul.mubr.f32.gmra.mrb[0].mxu0 %v5713
        %v5861 = vpop.f32.mrb[0].mxu0
        %v5862 = vadd.f32 0.0, %v5861
        %v5863 = vpop.f32.mrb[0].mxu0
        %v5864 = vadd.f32 0.0, %v5863
        %5865 = vmatprep.mubr.f32.mxu0 0.0
        %5866 = vmatmul.mubr.f32.gmra.mrb[0].mxu0 %v5716
        %v5867 = vpop.f32.mrb[0].mxu0
        %v5868 = vadd.f32 0.0, %v5867
        %v5869 = vpop.f32.mrb[0].mxu0
        %v5870 = vadd.f32 0.0, %v5869
        %5871 = vdwg.mxu0
        %5872 = vst [vmem:[%s393] sm:$0xff] %v5785
        %5873 = vst [vmem:[%s393 + $0x8] sm:$0xff] %v5787
        %5874 = vst [vmem:[%s393 + $0x10] sm:$0xff] %v5862
        %5875 = vst [vmem:[%s393 + $0x18] sm:$0xff] %v5864
        %5876 = vst [vmem:[%s393 + $0x20] sm:$0xff] %v5791
        %5877 = vst [vmem:[%s393 + $0x28] sm:$0xff] %v5793
        %5878 = vst [vmem:[%s393 + $0x30] sm:$0xff] %v5868
        %5879 = vst [vmem:[%s393 + $0x38] sm:$0xff] %v5870
        %v5880 = vld [vmem:[#allocation2] sm:$0xff]
        %v5881 = vld [vmem:[#allocation2 + $0x8] sm:$0xff]
        %v5883 = vsel %vm5711, %v5880, 0
        %v5886 = vsel %vm5711, %v5881, 0
        %5888 = vmatprep.subr.mxu0 %v5531
        %5889 = vmatpush1.msra.mxu0 %v5529
        %5890 = vmatprep.subr.mxu0 %v5535
        %5891 = vmatpush1.msra.mxu0 %v5533
        %5892 = vmatprep.subr.mxu0 0.0
        %5893 = vmatpush1.msra.mxu0 0.0
        %5894 = vmatprep.subr.mxu0 0.0
        %5895 = vmatpush1.msra.mxu0 0.0
        %5896 = vmatprep.subr.mxu0 0.0
        %5897 = vmatpush1.msra.mxu0 0.0
        %5898 = vmatprep.subr.mxu0 0.0
        %5899 = vmatpush1.msra.mxu0 0.0
        %5900 = vmatprep.subr.mxu0 0.0
        %5901 = vmatpush1.msra.mxu0 0.0
        %5902 = vmatprep.subr.mxu0 0.0
        %5903 = vmatpush1.msra.mxu0 0.0
        %5904 = vmatprep.subr.mxu0 0.0
        %5905 = vmatpush1.msra.mxu0 0.0
        %5906 = vmatprep.subr.mxu0 0.0
        %5907 = vmatpush1.msra.mxu0 0.0
        %5908 = vmatprep.subr.mxu0 0.0
        %5909 = vmatpush1.msra.mxu0 0.0
        %5910 = vmatprep.subr.mxu0 0.0
        %5911 = vmatpush1.msra.mxu0 0.0
        %5912 = vmatprep.subr.mxu0 0.0
        %5913 = vmatpush1.msra.mxu0 0.0
        %5914 = vmatprep.subr.mxu0 0.0
        %5915 = vmatpush1.msra.mxu0 0.0
        %5916 = vmatprep.subr.mxu0 0.0
        %5917 = vmatpush1.msra.mxu0 0.0
        %5918 = vmatprep.subr.mxu0 0.0
        %5919 = vmatpush1.msra.mxu0 0.0
        %5920 = vmatprep.subr.mxu0 0.0
        %5921 = vmatpush1.msra.mxu0 0.0
        %5922 = vmatprep.subr.mxu0 0.0
        %5923 = vmatpush1.msra.mxu0 0.0
        %5924 = vmatprep.subr.mxu0 0.0
        %5925 = vmatpush1.msra.mxu0 0.0
        %5926 = vmatprep.subr.mxu0 0.0
        %5927 = vmatpush1.msra.mxu0 0.0
        %5928 = vmatprep.subr.mxu0 0.0
        %5929 = vmatpush1.msra.mxu0 0.0
        %5930 = vmatprep.subr.mxu0 0.0
        %5931 = vmatpush1.msra.mxu0 0.0
        %5932 = vmatprep.subr.mxu0 0.0
        %5933 = vmatpush1.msra.mxu0 0.0
        %5934 = vmatprep.subr.mxu0 0.0
        %5935 = vmatpush1.msra.mxu0 0.0
        %5936 = vmatprep.subr.mxu0 0.0
        %5937 = vmatpush1.msra.mxu0 0.0
        %5938 = vmatprep.subr.mxu0 0.0
        %5939 = vmatpush1.msra.mxu0 0.0
        %5940 = vmatprep.subr.mxu0 0.0
        %5941 = vmatpush1.msra.mxu0 0.0
        %5942 = vmatprep.subr.mxu0 0.0
        %5943 = vmatpush1.msra.mxu0 0.0
        %5944 = vmatprep.subr.mxu0 0.0
        %5945 = vmatpush1.msra.mxu0 0.0
        %5946 = vmatprep.subr.mxu0 0.0
        %5947 = vmatpush1.msra.mxu0 0.0
        %5948 = vmatprep.subr.mxu0 0.0
        %5949 = vmatpush1.msra.mxu0 0.0
        %5950 = vmatprep.subr.mxu0 0.0
        %5951 = vmatpush1.msra.mxu0 0.0
        %5952 = vmatprep.mubr.f32.mxu0 0.0
        %5953 = vmatmul.mubr.f32.gmra.mrb[0].mxu0 %v5883
        %v5954 = vpop.f32.mrb[0].mxu0
        %v5955 = vadd.f32 0.0, %v5954
        %v5956 = vpop.f32.mrb[0].mxu0
        %v5957 = vadd.f32 0.0, %v5956
        %5958 = vmatprep.mubr.f32.mxu0 0.0
        %5959 = vmatmul.mubr.f32.gmra.mrb[0].mxu0 %v5886
        %v5960 = vpop.f32.mrb[0].mxu0
        %v5961 = vadd.f32 0.0, %v5960
        %v5962 = vpop.f32.mrb[0].mxu0
        %v5963 = vadd.f32 0.0, %v5962
        %5964 = vdwg.mxu0
        %5965 = vmatprep.subr.mxu0 %v5703
        %5966 = vmatpush1.msra.mxu0 %v5701
        %5967 = vmatprep.subr.mxu0 %v5707
        %5968 = vmatpush1.msra.mxu0 %v5705
        %5969 = vmatprep.subr.mxu0 0.0
        %5970 = vmatpush1.msra.mxu0 0.0
        %5971 = vmatprep.subr.mxu0 0.0
        %5972 = vmatpush1.msra.mxu0 0.0
        %5973 = vmatprep.subr.mxu0 0.0
        %5974 = vmatpush1.msra.mxu0 0.0
        %5975 = vmatprep.subr.mxu0 0.0
        %5976 = vmatpush1.msra.mxu0 0.0
        %5977 = vmatprep.subr.mxu0 0.0
        %5978 = vmatpush1.msra.mxu0 0.0
        %5979 = vmatprep.subr.mxu0 0.0
        %5980 = vmatpush1.msra.mxu0 0.0
        %5981 = vmatprep.subr.mxu0 0.0
        %5982 = vmatpush1.msra.mxu0 0.0
        %5983 = vmatprep.subr.mxu0 0.0
        %5984 = vmatpush1.msra.mxu0 0.0
        %5985 = vmatprep.subr.mxu0 0.0
        %5986 = vmatpush1.msra.mxu0 0.0
        %5987 = vmatprep.subr.mxu0 0.0
        %5988 = vmatpush1.msra.mxu0 0.0
        %5989 = vmatprep.subr.mxu0 0.0
        %5990 = vmatpush1.msra.mxu0 0.0
        %5991 = vmatprep.subr.mxu0 0.0
        %5992 = vmatpush1.msra.mxu0 0.0
        %5993 = vmatprep.subr.mxu0 0.0
        %5994 = vmatpush1.msra.mxu0 0.0
        %5995 = vmatprep.subr.mxu0 0.0
        %5996 = vmatpush1.msra.mxu0 0.0
        %5997 = vmatprep.subr.mxu0 0.0
        %5998 = vmatpush1.msra.mxu0 0.0
        %5999 = vmatprep.subr.mxu0 0.0
        %6000 = vmatpush1.msra.mxu0 0.0
        %6001 = vmatprep.subr.mxu0 0.0
        %6002 = vmatpush1.msra.mxu0 0.0
        %6003 = vmatprep.subr.mxu0 0.0
        %6004 = vmatpush1.msra.mxu0 0.0
        %6005 = vmatprep.subr.mxu0 0.0
        %6006 = vmatpush1.msra.mxu0 0.0
        %6007 = vmatprep.subr.mxu0 0.0
        %6008 = vmatpush1.msra.mxu0 0.0
        %6009 = vmatprep.subr.mxu0 0.0
        %6010 = vmatpush1.msra.mxu0 0.0
        %6011 = vmatprep.subr.mxu0 0.0
        %6012 = vmatpush1.msra.mxu0 0.0
        %6013 = vmatprep.subr.mxu0 0.0
        %6014 = vmatpush1.msra.mxu0 0.0
        %6015 = vmatprep.subr.mxu0 0.0
        %6016 = vmatpush1.msra.mxu0 0.0
        %6017 = vmatprep.subr.mxu0 0.0
        %6018 = vmatpush1.msra.mxu0 0.0
        %6019 = vmatprep.subr.mxu0 0.0
        %6020 = vmatpush1.msra.mxu0 0.0
        %6021 = vmatprep.subr.mxu0 0.0
        %6022 = vmatpush1.msra.mxu0 0.0
        %6023 = vmatprep.subr.mxu0 0.0
        %6024 = vmatpush1.msra.mxu0 0.0
        %6025 = vmatprep.subr.mxu0 0.0
        %6026 = vmatpush1.msra.mxu0 0.0
        %6027 = vmatprep.subr.mxu0 0.0
        %6028 = vmatpush1.msra.mxu0 0.0
        %6029 = vmatprep.mubr.f32.mxu0 0.0
        %6030 = vmatmul.mubr.f32.gmra.mrb[0].mxu0 %v5883
        %v6031 = vpop.f32.mrb[0].mxu0
        %v6032 = vadd.f32 0.0, %v6031
        %v6033 = vpop.f32.mrb[0].mxu0
        %v6034 = vadd.f32 0.0, %v6033
        %6035 = vmatprep.mubr.f32.mxu0 0.0
        %6036 = vmatmul.mubr.f32.gmra.mrb[0].mxu0 %v5886
        %v6037 = vpop.f32.mrb[0].mxu0
        %v6038 = vadd.f32 0.0, %v6037
        %v6039 = vpop.f32.mrb[0].mxu0
        %v6040 = vadd.f32 0.0, %v6039
        %6041 = vdwg.mxu0
        %6042 = vst [vmem:[%s400] sm:$0xff] %v5955
        %6043 = vst [vmem:[%s400 + $0x8] sm:$0xff] %v5957
        %6044 = vst [vmem:[%s400 + $0x10] sm:$0xff] %v6032
        %6045 = vst [vmem:[%s400 + $0x18] sm:$0xff] %v6034
        %6046 = vst [vmem:[%s400 + $0x20] sm:$0xff] %v5961
        %6047 = vst [vmem:[%s400 + $0x28] sm:$0xff] %v5963
        %6048 = vst [vmem:[%s400 + $0x30] sm:$0xff] %v6038
        %6049 = vst [vmem:[%s400 + $0x38] sm:$0xff] %v6040
        %s6050 = sand.u32 %s172, 1
        %s6051 = scalar_lea.sflag [#allocation7], %s6050
        %s6052 = sand.u32 %s172, 1
        %s6053 = smul.addr %s6052, 64
        %s6054 = scalar_lea.vmem [#allocation15], %s6053
        %s6055 = sand.u32 %s198, 1
        %s6056 = scalar_lea.sflag [#allocation17], %s6055
        %s6057 = sand.u32 %s198, 1
        %s6058 = smul.addr %s6057, 64
        %s6059 = scalar_lea.vmem [#allocation16], %s6058
        // Predicated region
        $region73: #{tpu_custom_call.1} parent=43 // pred_check
          %p6060 = pneg %p182
        $region74: #{tpu_custom_call.1} parent=43 // pred_check_branch
          %6062 = sbr.rel (%p6060) target = $region76
        $region75: #{tpu_custom_call.1} parent=43 // pred_region
          %s6063 = smul.u32 4, %s28
          %s6065 = ssub.s32 1024, 1024
          %6066 = vsyncadd %s6051, %s6065
          %s6067 = smul.addr %s6063, 128
          %s6068 = scalar_lea.hbm %s6, %s6067
          %s6069 = sshll.u32 %s6054, 4
          %s6070 = int_to_ptr.vmem [resolvable:$true] %s6069
          %6075 = dma.vmem_to_hbm [thread:$0]  %s6070, 1024, %s6068, %s6051, 512, 2048, 32
        $region76: #{tpu_custom_call.1} parent=43 // pred_fallthru
          _
        // Predicated region
        $region77: #{tpu_custom_call.1} parent=43 // pred_check
          %p6076 = pneg %p208
        $region78: #{tpu_custom_call.1} parent=43 // pred_check_branch
          %6078 = sbr.rel (%p6076) target = $region80
        $region79: #{tpu_custom_call.1} parent=43 // pred_region
          %s6079 = smul.u32 4, %s28
          %s6081 = ssub.s32 1024, 1024
          %6082 = vsyncadd %s6056, %s6081
          %s6083 = smul.addr %s6079, 128
          %s6084 = scalar_lea.hbm %s7, %s6083
          %s6085 = sshll.u32 %s6059, 4
          %s6086 = int_to_ptr.vmem [resolvable:$true] %s6085
          %6091 = dma.vmem_to_hbm [thread:$0]  %s6086, 1024, %s6084, %s6056, 512, 2048, 32
        $region80: #{tpu_custom_call.1} parent=43 // pred_fallthru
          _
      $region44: #{tpu_custom_call.1} parent=5 // pred_fallthru
        _
      %p6092 = scmp.le.s32.totalorder 2, %s23
      // Predicated region
      $region81: #{tpu_custom_call.1} parent=5 // pred_check
        %p6093 = pneg %p6092
      $region82: #{tpu_custom_call.1} parent=5 // pred_check_branch
        %6095 = sbr.rel (%p6093) target = $region84
      $region83: #{tpu_custom_call.1} parent=5 // pred_region
        %s6096 = ssub.s32 %s23, 2
        // Predicated region
        $region85: #{tpu_custom_call.1} parent=83 // pred_check
          %p6097 = pneg %p188
        $region86: #{tpu_custom_call.1} parent=83 // pred_check_branch
          %6099 = sbr.rel (%p6097) target = $region88
        $region87: #{tpu_custom_call.1} parent=83 // pred_region
          %s6100 = sand.u32 %s173, 1
          %s6101 = scalar_lea.sflag [#allocation7], %s6100
          %s6102 = sand.u32 %s173, 1
          %s6103 = smul.addr %s6102, 64
          %s6104 = scalar_lea.vmem [#allocation15], %s6103
          %6105 = dma.done %s6101, 1024
        $region88: #{tpu_custom_call.1} parent=83 // pred_fallthru
          _
        // Predicated region
        $region89: #{tpu_custom_call.1} parent=83 // pred_check
          %p6106 = pneg %p214
        $region90: #{tpu_custom_call.1} parent=83 // pred_check_branch
          %6108 = sbr.rel (%p6106) target = $region92
        $region91: #{tpu_custom_call.1} parent=83 // pred_region
          %s6109 = sand.u32 %s199, 1
          %s6110 = scalar_lea.sflag [#allocation17], %s6109
          %s6111 = sand.u32 %s199, 1
          %s6112 = smul.addr %s6111, 64
          %s6113 = scalar_lea.vmem [#allocation16], %s6112
          %6114 = dma.done %s6110, 1024
        $region92: #{tpu_custom_call.1} parent=83 // pred_fallthru
          _
      $region84: #{tpu_custom_call.1} parent=5 // pred_fallthru
        _
    $region6: #{tpu_custom_call.1} parent=1 // loop_footer
      %s27 = sadd.s32 1, %s23
    $region7: #{tpu_custom_call.1} parent=1 // loop_footer_branch
      %22 = sbr.rel target = $region3
    $region8: #{tpu_custom_call.1} parent=1 // loop_exit
      _
    %6115 = vsyncpa [#allocation6], 1
    %s6116 = scalar_lea.sflag [#allocation6], 1
    %6117 = vsyncpa %s6116, 1
    %6118 = vsyncpa [#allocation9], 1
    %6119 = vsyncpa [#allocation12], 1
    %6120 = vsyncpa [#allocation7], 1
    %s6121 = scalar_lea.sflag [#allocation7], 1
    %6122 = vsyncpa %s6121, 1
    %6123 = vsyncpa [#allocation17], 1
    %s6124 = scalar_lea.sflag [#allocation17], 1
    %6125 = vsyncpa %s6124, 1

</llo_original>
